<compile_context>
chip_gen: v6e
topology: v6e:2x2x1
jax: 0.10.0
libtpu: 0.0.40
codegen_flags: <defaults>
</compile_context>

<pallas_src>
import functools

import jax
import jax.numpy as jnp
from jax.experimental import pallas as pl
from jax.experimental.pallas import tpu as pltpu


_SINGLE_K_MAX = 2048            # K <= this -> single K block, no acc scratch
_VMEM_LIMIT = 32 * 1024 * 1024  # explicit scoped-VMEM limit (safe on v5e/v6e/v7x)


def _round_up(x, m):
    return (x + m - 1) // m * m


def _choose_tm(mp, batch):
    # Largest lane-dense (multiple of 128) M tile that still yields >= 8 grid
    # steps, so both TensorCores on v7x get several steps and the software
    # pipeline can ramp.  mp is always a multiple of 128.
    for c in (512, 256, 128):
        if mp % c == 0 and batch * (mp // c) >= 8:
            return c
    return 128


# ----------------------------------------------------------------------------
# Pallas kernels
# ----------------------------------------------------------------------------
def _gemm_single_k_kernel(*refs, relu, has_residual, down_off, down_cin):
    """Single-K-block fused GEMM: out = act(Wt @ col + shift [+ res]).

    Optionally also emits the fused 1x1x1 downsample output
        res_out = Wd @ col[center_tap_slice] + shiftd
    (used for conv1 when dsample=True).
    No accumulator scratch: the single dot's result stays in vregs.
    """
    has_down = down_off is not None
    idx = 0
    wt_ref = refs[idx]; idx += 1
    col_ref = refs[idx]; idx += 1
    shift_ref = refs[idx]; idx += 1
    res_ref = None
    if has_residual:
        res_ref = refs[idx]; idx += 1
    wd_ref = shiftd_ref = None
    if has_down:
        wd_ref = refs[idx]; idx += 1
        shiftd_ref = refs[idx]; idx += 1
    out_ref = refs[idx]; idx += 1
    resout_ref = refs[idx] if has_down else None

    # (Cout, K) @ (K, tm) -> (Cout, tm), f32 accumulation on the MXU.
    acc = jnp.dot(wt_ref[...], col_ref[...], preferred_element_type=jnp.float32)
    out = acc + shift_ref[...]                       # (Cout,1) lane-broadcast
    if has_residual:
        out = out + res_ref[...].astype(jnp.float32)
    if relu:
        out = jnp.maximum(out, 0.0)
    out_ref[...] = out.astype(out_ref.dtype)

    if has_down:
        # Center tap of the 3x3x3 im2col == strided 1x1x1 downsample input.
        center = col_ref[pl.ds(down_off, down_cin), :]
        r = jnp.dot(wd_ref[...], center, preferred_element_type=jnp.float32)
        resout_ref[...] = (r + shiftd_ref[...]).astype(resout_ref.dtype)


def _gemm_multi_k_kernel(*refs, relu, has_residual):
    """Multi-K-block fused GEMM with f32 VMEM accumulator (large-K fallback)."""
    if has_residual:
        wt_ref, col_ref, shift_ref, res_ref, out_ref, acc_ref = refs
    else:
        wt_ref, col_ref, shift_ref, out_ref, acc_ref = refs
        res_ref = None
    k = pl.program_id(2)

    @pl.when(k == 0)
    def _():
        acc_ref[...] = jnp.zeros_like(acc_ref)

    acc_ref[...] += jnp.dot(wt_ref[...], col_ref[...],
                            preferred_element_type=jnp.float32)

    @pl.when(k == pl.num_programs(2) - 1)
    def _():
        out = acc_ref[...] + shift_ref[...]
        if has_residual:
            out = out + res_ref[...].astype(jnp.float32)
        if relu:
            out = jnp.maximum(out, 0.0)
        out_ref[...] = out.astype(out_ref.dtype)


# ----------------------------------------------------------------------------
# Wrapper: out[b] = act(Wt @ col[b] + shift [+ residual[b]]) per batch item.
# ----------------------------------------------------------------------------
def conv_gemm(wt, col, shift, *, residual=None, relu=True, down=None,
              out_dtype=jnp.bfloat16):
    """Lane-dense transposed conv-GEMM.

    wt:       (Cout, K)     bf16, BN scale already folded in
    col:      (B, K, M)     bf16, transposed im2col (tap-major, Cin-minor rows)
    shift:    (Cout, 1)     f32  BN shift
    residual: (B, Cout, M)  bf16 or None  (fused add before ReLU)
    down:     (wd(Cout,Cin) bf16, shiftd(Cout,1) f32, off, cin) or None
              -> also emit res_out = wd @ col[:, off:off+cin, :] + shiftd
    Returns (out(B,Cout,M) out_dtype, res_out(B,Cout,M) bf16 or None).
    """
    Cout, K = wt.shape
    B, Kc, M = col.shape
    assert Kc == K

    # Pad the flattened spatial dim to a multiple of 128 (lane-dense output).
    Mp = _round_up(M, 128)
    if Mp != M:
        col = jnp.pad(col, ((0, 0), (0, 0), (0, Mp - M)))
        if residual is not None:
            residual = jnp.pad(residual, ((0, 0), (0, 0), (0, Mp - M)))
    tm = _choose_tm(Mp, B)

    res_out = None
    if K <= _SINGLE_K_MAX:
        # ---- single K block: no accumulator scratch ----
        inputs = [wt, col, shift]
        in_specs = [
            pl.BlockSpec((Cout, K), lambda b, m: (0, 0)),
            pl.BlockSpec((None, K, tm), lambda b, m: (b, 0, m)),
            pl.BlockSpec((Cout, 1), lambda b, m: (0, 0)),
        ]
        if residual is not None:
            inputs.append(residual)
            in_specs.append(pl.BlockSpec((None, Cout, tm), lambda b, m: (b, 0, m)))
        out_shape = jax.ShapeDtypeStruct((B, Cout, Mp), out_dtype)
        out_specs = pl.BlockSpec((None, Cout, tm), lambda b, m: (b, 0, m))
        down_off = down_cin = None
        if down is not None:
            wd, shiftd, down_off, down_cin = down
            inputs += [wd, shiftd]
            in_specs += [pl.BlockSpec((Cout, down_cin), lambda b, m: (0, 0)),
                         pl.BlockSpec((Cout, 1), lambda b, m: (0, 0))]
            out_shape = (out_shape,
                         jax.ShapeDtypeStruct((B, Cout, Mp), jnp.bfloat16))
            out_specs = (out_specs,
                         pl.BlockSpec((None, Cout, tm), lambda b, m: (b, 0, m)))

        result = pl.pallas_call(
            functools.partial(_gemm_single_k_kernel, relu=relu,
                              has_residual=residual is not None,
                              down_off=down_off, down_cin=down_cin),
            out_shape=out_shape,
            grid_spec=pltpu.PrefetchScalarGridSpec(
                num_scalar_prefetch=0,
                grid=(B, Mp // tm),
                in_specs=in_specs,
                out_specs=out_specs),
            compiler_params=pltpu.CompilerParams(
                dimension_semantics=("parallel", "parallel"),
                vmem_limit_bytes=_VMEM_LIMIT),
        )(*inputs)
        if down is not None:
            out, res_out = result
        else:
            out = result
    else:
        # ---- large-K fallback: K-blocked with f32 accumulator scratch ----
        assert down is None, "fused downsample only supported on the single-K path"
        tk = 1024  # keep blocks modest for v7x's 64 MiB VMEM
        Kp = _round_up(K, tk)
        if Kp != K:
            wt = jnp.pad(wt, ((0, 0), (0, Kp - K)))
            col = jnp.pad(col, ((0, 0), (0, Kp - K), (0, 0)))
        inputs = [wt, col, shift]
        in_specs = [
            pl.BlockSpec((Cout, tk), lambda b, m, k: (0, k)),
            pl.BlockSpec((None, tk, tm), lambda b, m, k: (b, k, m)),
            pl.BlockSpec((Cout, 1), lambda b, m, k: (0, 0)),
        ]
        if residual is not None:
            inputs.append(residual)
            in_specs.append(
                pl.BlockSpec((None, Cout, tm), lambda b, m, k: (b, 0, m)))
        out = pl.pallas_call(
            functools.partial(_gemm_multi_k_kernel, relu=relu,
                              has_residual=residual is not None),
            out_shape=jax.ShapeDtypeStruct((B, Cout, Mp), out_dtype),
            grid_spec=pltpu.PrefetchScalarGridSpec(
                num_scalar_prefetch=0,
                grid=(B, Mp // tm, Kp // tk),
                in_specs=in_specs,
                out_specs=pl.BlockSpec((None, Cout, tm),
                                       lambda b, m, k: (b, 0, m)),
                scratch_shapes=[pltpu.VMEM((Cout, tm), jnp.float32)]),
            compiler_params=pltpu.CompilerParams(
                dimension_semantics=("parallel", "parallel", "arbitrary"),
                vmem_limit_bytes=_VMEM_LIMIT),
        )(*inputs)

    if Mp != M:
        out = out[:, :, :M]
        if res_out is not None:
            res_out = res_out[:, :, :M]
    return out, res_out


# ----------------------------------------------------------------------------
# im2col (transposed / channels-first) and weight folding
# ----------------------------------------------------------------------------
def _im2col_transposed(x, ksize, stride, padding):
    """x: (B, C, D1, D2, D3) -> colT: (B, k1*k2*k3*C, o1*o2*o3), tap-major rows."""
    B, C, D1, D2, D3 = x.shape
    k1, k2, k3 = ksize
    s1, s2, s3 = stride
    p1, p2, p3 = padding
    o1 = (D1 + 2 * p1 - k1) // s1 + 1
    o2 = (D2 + 2 * p2 - k2) // s2 + 1
    o3 = (D3 + 2 * p3 - k3) // s3 + 1
    xp = jnp.pad(x, ((0, 0), (0, 0), (p1, p1), (p2, p2), (p3, p3)))
    pieces = []
    for i in range(k1):
        for j in range(k2):
            for l in range(k3):
                pieces.append(
                    xp[:, :,
                       i:i + s1 * (o1 - 1) + 1:s1,
                       j:j + s2 * (o2 - 1) + 1:s2,
                       l:l + s3 * (o3 - 1) + 1:s3])
    # TODO(synk): still materialized in HBM (k1*k2*k3 read amplification);
    # in-kernel shifted-window reads would remove it.
    col = jnp.stack(pieces, axis=1)                # (B, taps, C, o1, o2, o3)
    col = col.reshape(B, k1 * k2 * k3 * C, o1 * o2 * o3)
    return col, (o1, o2, o3)


def _fold_conv_weight(w, bn_scale):
    """w: (Cout, Cin, k1, k2, k3) f32 -> (Cout, taps*Cin) bf16 with BN scale folded."""
    Cout = w.shape[0]
    wt = jnp.transpose(w, (0, 2, 3, 4, 1)).reshape(Cout, -1)
    return (wt * bn_scale[:, None]).astype(jnp.bfloat16)


# ----------------------------------------------------------------------------
# _EncoderBlock3D: parameters + forward (NCDHW layout throughout)
# ----------------------------------------------------------------------------
def _fold_bn(gamma, beta, running_mean, running_var, eps=1e-5):
    scale = gamma * jax.lax.rsqrt(running_var + eps)
    shift = beta - running_mean * scale
    return scale, shift


def init_encoder_block(key, in_ch, out_ch, dsample):
    keys = iter(jax.random.split(key, 16))

    def conv_w(cout, cin, k1, k2, k3):
        fan_in = cin * k1 * k2 * k3
        return jax.random.normal(next(keys), (cout, cin, k1, k2, k3),
                                 jnp.float32) * (2.0 / fan_in) ** 0.5

    def bn(c):
        gamma = 0.75 + 0.5 * jax.random.uniform(next(keys), (c,), jnp.float32)
        beta = 0.1 * jax.random.normal(next(keys), (c,), jnp.float32)
        mean = jnp.zeros((c,), jnp.float32)
        var = jnp.ones((c,), jnp.float32)
        return _fold_bn(gamma, beta, mean, var)

    bn1 = bn(out_ch)
    bn2 = bn(out_ch)
    params = dict(
        conv1_w=conv_w(out_ch, in_ch, 3, 3, 3), bn1_s=bn1[0], bn1_b=bn1[1],
        conv2_w=conv_w(out_ch, out_ch, 3, 3, 3), bn2_s=bn2[0], bn2_b=bn2[1])
    if dsample:
        bnd = bn(out_ch)
        params.update(down_w=conv_w(out_ch, in_ch, 1, 1, 1),
                      bnd_s=bnd[0], bnd_b=bnd[1])
    else:
        assert in_ch == out_ch, "identity residual requires in_ch == out_ch"
    return params


def encoder_block_forward(params, x, *, dsample, pool_kernal=(2, 2, 1),
                          out_dtype=jnp.float32):
    """_EncoderBlock3D forward.  x: (B, C, H, W, T) PyTorch NCDHW layout."""
    B, Cin, D1, D2, D3 = x.shape
    Cout = params["conv1_w"].shape[0]
    stride = tuple(pool_kernal) if dsample else (1, 1, 1)
    xb = x.astype(jnp.bfloat16)

    # conv1 + BN1 + ReLU (scale folded into the weight).  When dsample, the
    # strided 1x1x1 downsample + BNd residual is fused into the same kernel as
    # a second output (its input is the center-tap K-slice of conv1's im2col).
    col1, (o1, o2, o3) = _im2col_transposed(xb, (3, 3, 3), stride, (1, 1, 1))
    M = o1 * o2 * o3
    wt1 = _fold_conv_weight(params["conv1_w"], params["bn1_s"])
    shift1 = params["bn1_b"].reshape(Cout, 1).astype(jnp.float32)

    down = None
    residual = None
    if dsample:
        wd = (params["down_w"].reshape(Cout, Cin)
              * params["bnd_s"][:, None]).astype(jnp.bfloat16)
        shiftd = params["bnd_b"].reshape(Cout, 1).astype(jnp.float32)
        if wt1.shape[1] <= _SINGLE_K_MAX:
            down = (wd, shiftd, 13 * Cin, Cin)     # center tap of 3x3x3
        else:
            # Large-K fallback: separate strided 1x1x1 conv for the residual.
            s1, s2, s3 = stride
            g = xb[:, :, ::s1, ::s2, ::s3][:, :, :o1, :o2, :o3]
            residual, _ = conv_gemm(wd, g.reshape(B, Cin, M), shiftd,
                                    relu=False, out_dtype=jnp.bfloat16)
    else:
        residual = xb.reshape(B, Cin, D1 * D2 * D3)   # identity residual

    h, res_fused = conv_gemm(wt1, col1, shift1, relu=True, down=down,
                             out_dtype=jnp.bfloat16)
    if res_fused is not None:
        residual = res_fused

    # conv2 + BN2 + residual add + ReLU, fused in the matmul epilogue.
    h5 = h.reshape(B, Cout, o1, o2, o3)
    col2, _ = _im2col_transposed(h5, (3, 3, 3), (1, 1, 1), (1, 1, 1))
    wt2 = _fold_conv_weight(params["conv2_w"], params["bn2_s"])
    shift2 = params["bn2_b"].reshape(Cout, 1).astype(jnp.float32)
    out, _ = conv_gemm(wt2, col2, shift2, residual=residual, relu=True,
                       out_dtype=out_dtype)

    # TODO(synk): nn.Dropout(p=0.5) (dropout=True) is identity in eval mode.
    return out.reshape(B, Cout, o1, o2, o3)


# ----------------------------------------------------------------------------
# Pure-JAX reference (mirrors the kernel's bf16 casts, f32 accumulation)
# ----------------------------------------------------------------------------
def _conv3d_ref(x, w, stride, padding):
    return jax.lax.conv_general_dilated(
        x, w, window_strides=stride, padding=[(p, p) for p in padding],
        dimension_numbers=("NCDHW", "OIDHW", "NCDHW"),
        preferred_element_type=jnp.float32)


def encoder_block_reference(params, x, *, dsample, pool_kernal=(2, 2, 1)):
    stride = tuple(pool_kernal) if dsample else (1, 1, 1)
    xb = x.astype(jnp.bfloat16)
    bc = lambda v: v[None, :, None, None, None]
    h = _conv3d_ref(xb, params["conv1_w"].astype(jnp.bfloat16), stride, (1, 1, 1))
    h = jnp.maximum(h * bc(params["bn1_s"]) + bc(params["bn1_b"]), 0.0)
    h = h.astype(jnp.bfloat16)
    out = _conv3d_ref(h, params["conv2_w"].astype(jnp.bfloat16),
                      (1, 1, 1), (1, 1, 1))
    out = out * bc(params["bn2_s"]) + bc(params["bn2_b"])
    if dsample:
        r = _conv3d_ref(xb, params["down_w"].astype(jnp.bfloat16),
                        stride, (0, 0, 0))
        r = (r * bc(params["bnd_s"]) + bc(params["bnd_b"])).astype(jnp.bfloat16)
    else:
        r = xb
    return jnp.maximum(out + r.astype(jnp.float32), 0.0)


# ----------------------------------------------------------------------------
if __name__ == "__main__":
    B, C_IN, H, W, T = 2, 16, 16, 16, 8
    C_OUT = 32

    key = jax.random.PRNGKey(0)
    kx, kb1, kb2 = jax.random.split(key, 3)
    x = jax.random.normal(kx, (B, C_IN, H, W, T), jnp.float32)

    # Block 1: dsample=True (strided conv + fused 1x1x1 downsample residual).
    params1 = init_encoder_block(kb1, C_IN, C_OUT, dsample=True)
    # Block 2: dsample=False (identity residual).
    params2 = init_encoder_block(kb2, C_OUT, C_OUT, dsample=False)

    fwd = jax.jit(encoder_block_forward,
                  static_argnames=("dsample", "pool_kernal", "out_dtype"))

    y1 = fwd(params1, x, dsample=True, pool_kernal=(2, 2, 1),
             out_dtype=jnp.bfloat16)
    y2 = fwd(params2, y1, dsample=False, pool_kernal=(2, 2, 1),
             out_dtype=jnp.float32)
    y2 = jax.block_until_ready(y2)

    assert y1.shape == (B, C_OUT, 8, 8, 8), y1.shape
    assert y2.shape == (B, C_OUT, 8, 8, 8), y2.shape
    assert bool(jnp.all(jnp.isfinite(y2.astype(jnp.float32))))

    # Correctness check against a pure-JAX reference with matching casts.
    r1 = encoder_block_reference(params1, x, dsample=True, pool_kernal=(2, 2, 1))
    r2 = encoder_block_reference(params2, r1.astype(jnp.bfloat16),
                                 dsample=False, pool_kernal=(2, 2, 1))
    err = float(jnp.max(jnp.abs(y2.astype(jnp.float32) - r2)))
    assert err < 0.25, f"max abs error vs reference: {err}"

    print("KERNEL_OK")
</pallas_src>

<mosaic_0001>
module attributes {stable_mosaic.version = 11 : i64} {
  func.func @_gemm_single_k_kernel(%arg0: i32, %arg1: i32, %arg2: memref<32x432xbf16, #tpu.memory_space<vmem>>, %arg3: memref<1x432x128xbf16, #tpu.memory_space<vmem>>, %arg4: memref<32x1xf32, #tpu.memory_space<vmem>>, %arg5: memref<32x16xbf16, #tpu.memory_space<vmem>>, %arg6: memref<32x1xf32, #tpu.memory_space<vmem>>, %arg7: memref<1x32x128xbf16, #tpu.memory_space<vmem>>, %arg8: memref<1x32x128xbf16, #tpu.memory_space<vmem>>) attributes {dimension_semantics = [#tpu.dimension_semantics<parallel>, #tpu.dimension_semantics<parallel>], iteration_bounds = array<i64: 2, 4>, scalar_prefetch = 0 : i64, scratch_operands = 0 : i64, tpu.core_type = #tpu.core_type<tc>, window_params = [{pipeline_mode = #tpu.pipeline_mode<synchronous>, transform_indices = @transform_0, window_bounds = array<i64: 32, 432>}, {transform_indices = @transform_1, window_bounds = array<i64: 1, 432, 128>}, {pipeline_mode = #tpu.pipeline_mode<synchronous>, transform_indices = @transform_2, window_bounds = array<i64: 32, 1>}, {pipeline_mode = #tpu.pipeline_mode<synchronous>, transform_indices = @transform_3, window_bounds = array<i64: 32, 16>}, {pipeline_mode = #tpu.pipeline_mode<synchronous>, transform_indices = @transform_4, window_bounds = array<i64: 32, 1>}, {transform_indices = @transform_5, window_bounds = array<i64: 1, 32, 128>}, {transform_indices = @transform_6, window_bounds = array<i64: 1, 32, 128>}]} {
    %c0 = arith.constant 0 : index
    %c0_0 = arith.constant 0 : index
    %0 = vector.load %arg2[%c0, %c0_0] : memref<32x432xbf16, #tpu.memory_space<vmem>>, vector<32x432xbf16>
    %c0_1 = arith.constant 0 : index
    %c0_2 = arith.constant 0 : index
    %c0_3 = arith.constant 0 : index
    %1 = vector.load %arg3[%c0_1, %c0_2, %c0_3] : memref<1x432x128xbf16, #tpu.memory_space<vmem>>, vector<1x432x128xbf16>
    %2 = vector.shape_cast %1 : vector<1x432x128xbf16> to vector<432x128xbf16>
    %cst = arith.constant dense<0.000000e+00> : vector<32x128xf32>
    %3 = tpu.matmul %0, %2, %cst {dimension_numbers = #tpu.dot_dimension_numbers<[1], [0], [0], [1], [0, 0, 1, 1], [], []>} : vector<32x432xbf16>, vector<432x128xbf16>, vector<32x128xf32> -> vector<32x128xf32>
    %c0_4 = arith.constant 0 : index
    %c0_5 = arith.constant 0 : index
    %4 = vector.load %arg4[%c0_4, %c0_5] : memref<32x1xf32, #tpu.memory_space<vmem>>, vector<32x1xf32>
    %5 = vector.broadcast %4 : vector<32x1xf32> to vector<32x128xf32>
    %6 = arith.addf %3, %5 : vector<32x128xf32>
    %cst_6 = arith.constant 0.000000e+00 : f32
    %7 = vector.broadcast %cst_6 : f32 to vector<32x128xf32>
    %8 = arith.maximumf %6, %7 : vector<32x128xf32>
    %9 = arith.truncf %8 : vector<32x128xf32> to vector<32x128xbf16>
    %c0_7 = arith.constant 0 : index
    %c0_8 = arith.constant 0 : index
    %c0_9 = arith.constant 0 : index
    %10 = vector.load %arg7[%c0_7, %c0_8, %c0_9] : memref<1x32x128xbf16, #tpu.memory_space<vmem>>, vector<1x32x128xbf16>
    %11 = vector.shape_cast %10 : vector<1x32x128xbf16> to vector<32x128xbf16>
    %12 = vector.shape_cast %9 : vector<32x128xbf16> to vector<1x32x128xbf16>
    tpu.vector_store %arg7[%c0_7, %c0_8, %c0_9], %12 {strides = array<i32>} : memref<1x32x128xbf16, #tpu.memory_space<vmem>>, vector<1x32x128xbf16>,
    %c0_10 = arith.constant 0 : index
    %c208 = arith.constant 208 : index
    %c0_11 = arith.constant 0 : index
    %13 = vector.load %arg3[%c0_10, %c208, %c0_11] : memref<1x432x128xbf16, #tpu.memory_space<vmem>>, vector<1x16x128xbf16>
    %14 = vector.shape_cast %13 : vector<1x16x128xbf16> to vector<16x128xbf16>
    %c0_12 = arith.constant 0 : index
    %c0_13 = arith.constant 0 : index
    %15 = vector.load %arg5[%c0_12, %c0_13] : memref<32x16xbf16, #tpu.memory_space<vmem>>, vector<32x16xbf16>
    %cst_14 = arith.constant dense<0.000000e+00> : vector<32x128xf32>
    %16 = tpu.matmul %15, %14, %cst_14 {dimension_numbers = #tpu.dot_dimension_numbers<[1], [0], [0], [1], [0, 0, 1, 1], [], []>} : vector<32x16xbf16>, vector<16x128xbf16>, vector<32x128xf32> -> vector<32x128xf32>
    %c0_15 = arith.constant 0 : index
    %c0_16 = arith.constant 0 : index
    %17 = vector.load %arg6[%c0_15, %c0_16] : memref<32x1xf32, #tpu.memory_space<vmem>>, vector<32x1xf32>
    %18 = vector.broadcast %17 : vector<32x1xf32> to vector<32x128xf32>
    %19 = arith.addf %16, %18 : vector<32x128xf32>
    %20 = arith.truncf %19 : vector<32x128xf32> to vector<32x128xbf16>
    %c0_17 = arith.constant 0 : index
    %c0_18 = arith.constant 0 : index
    %c0_19 = arith.constant 0 : index
    %21 = vector.load %arg8[%c0_17, %c0_18, %c0_19] : memref<1x32x128xbf16, #tpu.memory_space<vmem>>, vector<1x32x128xbf16>
    %22 = vector.shape_cast %21 : vector<1x32x128xbf16> to vector<32x128xbf16>
    %23 = vector.shape_cast %20 : vector<32x128xbf16> to vector<1x32x128xbf16>
    tpu.vector_store %arg8[%c0_17, %c0_18, %c0_19], %23 {strides = array<i32>} : memref<1x32x128xbf16, #tpu.memory_space<vmem>>, vector<1x32x128xbf16>,
    return
  }
  func.func @transform_0(%arg0: i32, %arg1: i32) -> (i32, i32) {
    %c0_i32 = arith.constant 0 : i32
    %c0_i32_0 = arith.constant 0 : i32
    %c0_i32_1 = arith.constant 0 : i32
    return %c0_i32, %c0_i32_0 : i32, i32
  }
  func.func @transform_1(%arg0: i32, %arg1: i32) -> (i32, i32, i32) {
    %c0_i32 = arith.constant 0 : i32
    %c0_i32_0 = arith.constant 0 : i32
    return %arg0, %c0_i32, %arg1 : i32, i32, i32
  }
  func.func @transform_2(%arg0: i32, %arg1: i32) -> (i32, i32) {
    %c0_i32 = arith.constant 0 : i32
    %c0_i32_0 = arith.constant 0 : i32
    %c0_i32_1 = arith.constant 0 : i32
    return %c0_i32, %c0_i32_0 : i32, i32
  }
  func.func @transform_3(%arg0: i32, %arg1: i32) -> (i32, i32) {
    %c0_i32 = arith.constant 0 : i32
    %c0_i32_0 = arith.constant 0 : i32
    %c0_i32_1 = arith.constant 0 : i32
    return %c0_i32, %c0_i32_0 : i32, i32
  }
  func.func @transform_4(%arg0: i32, %arg1: i32) -> (i32, i32) {
    %c0_i32 = arith.constant 0 : i32
    %c0_i32_0 = arith.constant 0 : i32
    %c0_i32_1 = arith.constant 0 : i32
    return %c0_i32, %c0_i32_0 : i32, i32
  }
  func.func @transform_5(%arg0: i32, %arg1: i32) -> (i32, i32, i32) {
    %c0_i32 = arith.constant 0 : i32
    %c0_i32_0 = arith.constant 0 : i32
    return %arg0, %c0_i32, %arg1 : i32, i32, i32
  }
  func.func @transform_6(%arg0: i32, %arg1: i32) -> (i32, i32, i32) {
    %c0_i32 = arith.constant 0 : i32
    %c0_i32_0 = arith.constant 0 : i32
    return %arg0, %c0_i32, %arg1 : i32, i32, i32
  }
}

module attributes {stable_mosaic.version = 11 : i64} {
  func.func @_gemm_single_k_kernel(%arg0: i32, %arg1: i32, %arg2: memref<32x864xbf16, #tpu.memory_space<vmem>>, %arg3: memref<1x864x128xbf16, #tpu.memory_space<vmem>>, %arg4: memref<32x1xf32, #tpu.memory_space<vmem>>, %arg5: memref<1x32x128xbf16, #tpu.memory_space<vmem>>, %arg6: memref<1x32x128xbf16, #tpu.memory_space<vmem>>) attributes {dimension_semantics = [#tpu.dimension_semantics<parallel>, #tpu.dimension_semantics<parallel>], iteration_bounds = array<i64: 2, 4>, scalar_prefetch = 0 : i64, scratch_operands = 0 : i64, tpu.core_type = #tpu.core_type<tc>, window_params = [{pipeline_mode = #tpu.pipeline_mode<synchronous>, transform_indices = @transform_0, window_bounds = array<i64: 32, 864>}, {transform_indices = @transform_1, window_bounds = array<i64: 1, 864, 128>}, {pipeline_mode = #tpu.pipeline_mode<synchronous>, transform_indices = @transform_2, window_bounds = array<i64: 32, 1>}, {transform_indices = @transform_3, window_bounds = array<i64: 1, 32, 128>}, {transform_indices = @transform_4, window_bounds = array<i64: 1, 32, 128>}]} {
    %c0 = arith.constant 0 : index
    %c0_0 = arith.constant 0 : index
    %0 = vector.load %arg2[%c0, %c0_0] : memref<32x864xbf16, #tpu.memory_space<vmem>>, vector<32x864xbf16>
    %c0_1 = arith.constant 0 : index
    %c0_2 = arith.constant 0 : index
    %c0_3 = arith.constant 0 : index
    %1 = vector.load %arg3[%c0_1, %c0_2, %c0_3] : memref<1x864x128xbf16, #tpu.memory_space<vmem>>, vector<1x864x128xbf16>
    %2 = vector.shape_cast %1 : vector<1x864x128xbf16> to vector<864x128xbf16>
    %cst = arith.constant dense<0.000000e+00> : vector<32x128xf32>
    %3 = tpu.matmul %0, %2, %cst {dimension_numbers = #tpu.dot_dimension_numbers<[1], [0], [0], [1], [0, 0, 1, 1], [], []>} : vector<32x864xbf16>, vector<864x128xbf16>, vector<32x128xf32> -> vector<32x128xf32>
    %c0_4 = arith.constant 0 : index
    %c0_5 = arith.constant 0 : index
    %4 = vector.load %arg4[%c0_4, %c0_5] : memref<32x1xf32, #tpu.memory_space<vmem>>, vector<32x1xf32>
    %5 = vector.broadcast %4 : vector<32x1xf32> to vector<32x128xf32>
    %6 = arith.addf %3, %5 : vector<32x128xf32>
    %c0_6 = arith.constant 0 : index
    %c0_7 = arith.constant 0 : index
    %c0_8 = arith.constant 0 : index
    %7 = vector.load %arg5[%c0_6, %c0_7, %c0_8] : memref<1x32x128xbf16, #tpu.memory_space<vmem>>, vector<1x32x128xbf16>
    %8 = vector.shape_cast %7 : vector<1x32x128xbf16> to vector<32x128xbf16>
    %9 = arith.extf %8 : vector<32x128xbf16> to vector<32x128xf32>
    %10 = arith.addf %6, %9 : vector<32x128xf32>
    %cst_9 = arith.constant 0.000000e+00 : f32
    %11 = vector.broadcast %cst_9 : f32 to vector<32x128xf32>
    %12 = arith.maximumf %10, %11 : vector<32x128xf32>
    %13 = arith.truncf %12 : vector<32x128xf32> to vector<32x128xbf16>
    %c0_10 = arith.constant 0 : index
    %c0_11 = arith.constant 0 : index
    %c0_12 = arith.constant 0 : index
    %14 = vector.load %arg6[%c0_10, %c0_11, %c0_12] : memref<1x32x128xbf16, #tpu.memory_space<vmem>>, vector<1x32x128xbf16>
    %15 = vector.shape_cast %14 : vector<1x32x128xbf16> to vector<32x128xbf16>
    %16 = vector.shape_cast %13 : vector<32x128xbf16> to vector<1x32x128xbf16>
    tpu.vector_store %arg6[%c0_10, %c0_11, %c0_12], %16 {strides = array<i32>} : memref<1x32x128xbf16, #tpu.memory_space<vmem>>, vector<1x32x128xbf16>,
    return
  }
  func.func @transform_0(%arg0: i32, %arg1: i32) -> (i32, i32) {
    %c0_i32 = arith.constant 0 : i32
    %c0_i32_0 = arith.constant 0 : i32
    %c0_i32_1 = arith.constant 0 : i32
    return %c0_i32, %c0_i32_0 : i32, i32
  }
  func.func @transform_1(%arg0: i32, %arg1: i32) -> (i32, i32, i32) {
    %c0_i32 = arith.constant 0 : i32
    %c0_i32_0 = arith.constant 0 : i32
    return %arg0, %c0_i32, %arg1 : i32, i32, i32
  }
  func.func @transform_2(%arg0: i32, %arg1: i32) -> (i32, i32) {
    %c0_i32 = arith.constant 0 : i32
    %c0_i32_0 = arith.constant 0 : i32
    %c0_i32_1 = arith.constant 0 : i32
    return %c0_i32, %c0_i32_0 : i32, i32
  }
  func.func @transform_3(%arg0: i32, %arg1: i32) -> (i32, i32, i32) {
    %c0_i32 = arith.constant 0 : i32
    %c0_i32_0 = arith.constant 0 : i32
    return %arg0, %c0_i32, %arg1 : i32, i32, i32
  }
  func.func @transform_4(%arg0: i32, %arg1: i32) -> (i32, i32, i32) {
    %c0_i32 = arith.constant 0 : i32
    %c0_i32_0 = arith.constant 0 : i32
    return %arg0, %c0_i32, %arg1 : i32, i32, i32
  }
}

</mosaic_0001>

<llo_original>
// kernel: encoder_block_forward.2
$region0: #{encoder_block_forward.2}
  #allocation0 [shape = 'u32[]', space=smem, size = 0x4, offset = 0x4, fixed_abs, tag = 'smem constant byte address 0x4 - core index']
  #allocation1 [shape = 'u32[144,128]{1,0:T(1,128)}', space=vmem, size = 0x12000, scoped, tag = 'internal scratch']
  %s0 = inlined_call_operand.vmem [shape: bf16[32,432], index: 0, kind: input, shape index: {}]
  %s1 = inlined_call_operand.vmem [shape: bf16[2,432,512], index: 1, kind: input, shape index: {}]
  %s2 = inlined_call_operand.vmem [shape: f32[32,1], index: 2, kind: input, shape index: {}]
  %s3 = inlined_call_operand.vmem [shape: bf16[32,16], index: 3, kind: input, shape index: {}]
  %s4 = inlined_call_operand.vmem [shape: f32[32,1], index: 4, kind: input, shape index: {}]
  %s5 = inlined_call_operand.vmem [shape: bf16[2,32,512], index: 5, kind: output, shape index: {0}]
  %s6 = inlined_call_operand.vmem [shape: bf16[2,32,512], index: 6, kind: output, shape index: {1}]
  %7 = xla_tuple %s5, %s6
  %s8 = sld [smem:[#allocation0]]
  $region176: #{encoder_block_forward.2} parent=0
    _
  %s10 = ssub.s32 1, %s8
  %s11 = scalar_select 0, %s10, %s8
  $region1: #{encoder_block_forward.2} parent=0
    #allocation2 [shape = 'u8[221184]{0}', space=vmem, size = 0x36000, scoped, tag = 'input window, operand 1']
    #allocation3 [shape = 'u8[16384]{0}', space=vmem, size = 0x4000, scoped, tag = 'output window, operand 0']
    #allocation4 [shape = 'u8[16384]{0}', space=vmem, size = 0x4000, scoped, tag = 'output window, operand 1']
    loop: start=0, step=1, limit=10
    $region2: #{encoder_block_forward.2} parent=1 // loop_pre_header
      _
    $region3: #{encoder_block_forward.2} parent=1 // loop_header
      %s13 = sphi 0, %s17
      %p14 = scmp.ge.s32.totalorder %s13, 10
      %s20 = sphi 0, %s32
      %s21 = sphi 0, %s28
      %s22 = sphi 0, %s20
      %s23 = sphi 0, %s21
      %s24 = sphi 0, %s22
      %s25 = sphi 0, %s23
      %s33 = sphi 0, %s33
      %s35 = sphi 0, %s33
      %s36 = sphi 0, %s35
      %s50 = sphi 0, %s36
      %s58 = sphi 0, %s60
      %s61 = sphi 0, %s58
      %s62 = sphi 0, %s61
      %s78 = sphi 0, %s62
      %s82 = sphi 0, %s82
      %s84 = sphi 0, %s82
      %s85 = sphi 0, %s84
      %s99 = sphi 0, %s85
      %s103 = sphi 0, %s103
      %s105 = sphi 0, %s103
      %s106 = sphi 0, %s105
      %s120 = sphi 0, %s106
      %s124 = sphi 0, %s124
      %s126 = sphi 0, %s124
      %s127 = sphi 0, %s126
      %s141 = sphi 0, %s127
      %s149 = sphi 0, %s151
      %s152 = sphi 0, %s149
      %s153 = sphi 0, %s152
      %s169 = sphi 0, %s153
      %s177 = sphi 0, %s179
      %s180 = sphi 0, %s177
      %s181 = sphi 0, %s180
      %s197 = sphi 0, %s181
    $region4: #{encoder_block_forward.2} parent=1 // loop_header_branch
      %16 = sbr.rel (%p14) target = $region8
    $region5: #{encoder_block_forward.2} parent=1 // loop_body
      %s18 = ssub.s32 %s13, 1
      %s19 = ssub.s32 %s13, 2
      %s26 = sadd.s32 1, %s21
      %p27 = scmp.ge.s32.totalorder %s26, 4
      %s28 = scalar_select %p27, 0, %s26
      %s29 = sadd.s32 1, %s20
      %s30 = scalar_select %p27, %s29, %s20
      %p31 = scmp.ge.s32.totalorder %s30, 2
      %s32 = scalar_select %p31, 0, %s30
      %s34 = sadd.s32 %s33, 1
      %p37 = scmp.eq.s32.totalorder %s13, 7
      %p38 = scmp.ne.s32.totalorder %s33, %s35
      %p39 = scmp.eq.s32.totalorder %s13, 0
      %p40 = por %p38, %p39
      %p41 = scmp.ne.s32.totalorder %s33, %s35
      %p42 = scmp.eq.s32.totalorder %s18, 7
      %p43 = por %p41, %p42
      %p44 = scmp.ne.s32.totalorder %s35, %s36
      %p45 = scmp.eq.s32.totalorder %s18, 0
      %p46 = por %p44, %p45
      %p47 = scmp.ne.s32.totalorder %s35, %s36
      %p48 = scmp.eq.s32.totalorder %s19, 7
      %p49 = por %p47, %p48
      %p51 = scmp.ne.s32.totalorder %s36, %s50
      %p52 = scmp.eq.s32.totalorder %s19, 0
      %p53 = por %p51, %p52
      %s54 = ssub.s32 %s20, %s32
      %s55 = ssub.s32 %s21, %s28
      %s56 = sor.u32 %s54, %s55
      %p57 = scmp.eq.s32.totalorder %s56, 0
      %s59 = sadd.s32 %s58, 1
      %s60 = scalar_select %p57, %s58, %s59
      %p63 = pneg %p57
      %p64 = scmp.eq.s32.totalorder %s13, 7
      %p65 = por %p63, %p64
      %p66 = scmp.ne.s32.totalorder %s58, %s61
      %p67 = scmp.eq.s32.totalorder %s13, 0
      %p68 = por %p66, %p67
      %p69 = scmp.ne.s32.totalorder %s58, %s61
      %p70 = scmp.eq.s32.totalorder %s18, 7
      %p71 = por %p69, %p70
      %p72 = scmp.ne.s32.totalorder %s61, %s62
      %p73 = scmp.eq.s32.totalorder %s18, 0
      %p74 = por %p72, %p73
      %p75 = scmp.ne.s32.totalorder %s61, %s62
      %p76 = scmp.eq.s32.totalorder %s19, 7
      %p77 = por %p75, %p76
      %p79 = scmp.ne.s32.totalorder %s62, %s78
      %p80 = scmp.eq.s32.totalorder %s19, 0
      %p81 = por %p79, %p80
      %s83 = sadd.s32 %s82, 1
      %p86 = scmp.eq.s32.totalorder %s13, 7
      %p87 = scmp.ne.s32.totalorder %s82, %s84
      %p88 = scmp.eq.s32.totalorder %s13, 0
      %p89 = por %p87, %p88
      %p90 = scmp.ne.s32.totalorder %s82, %s84
      %p91 = scmp.eq.s32.totalorder %s18, 7
      %p92 = por %p90, %p91
      %p93 = scmp.ne.s32.totalorder %s84, %s85
      %p94 = scmp.eq.s32.totalorder %s18, 0
      %p95 = por %p93, %p94
      %p96 = scmp.ne.s32.totalorder %s84, %s85
      %p97 = scmp.eq.s32.totalorder %s19, 7
      %p98 = por %p96, %p97
      %p100 = scmp.ne.s32.totalorder %s85, %s99
      %p101 = scmp.eq.s32.totalorder %s19, 0
      %p102 = por %p100, %p101
      %s104 = sadd.s32 %s103, 1
      %p107 = scmp.eq.s32.totalorder %s13, 7
      %p108 = scmp.ne.s32.totalorder %s103, %s105
      %p109 = scmp.eq.s32.totalorder %s13, 0
      %p110 = por %p108, %p109
      %p111 = scmp.ne.s32.totalorder %s103, %s105
      %p112 = scmp.eq.s32.totalorder %s18, 7
      %p113 = por %p111, %p112
      %p114 = scmp.ne.s32.totalorder %s105, %s106
      %p115 = scmp.eq.s32.totalorder %s18, 0
      %p116 = por %p114, %p115
      %p117 = scmp.ne.s32.totalorder %s105, %s106
      %p118 = scmp.eq.s32.totalorder %s19, 7
      %p119 = por %p117, %p118
      %p121 = scmp.ne.s32.totalorder %s106, %s120
      %p122 = scmp.eq.s32.totalorder %s19, 0
      %p123 = por %p121, %p122
      %s125 = sadd.s32 %s124, 1
      %p128 = scmp.eq.s32.totalorder %s13, 7
      %p129 = scmp.ne.s32.totalorder %s124, %s126
      %p130 = scmp.eq.s32.totalorder %s13, 0
      %p131 = por %p129, %p130
      %p132 = scmp.ne.s32.totalorder %s124, %s126
      %p133 = scmp.eq.s32.totalorder %s18, 7
      %p134 = por %p132, %p133
      %p135 = scmp.ne.s32.totalorder %s126, %s127
      %p136 = scmp.eq.s32.totalorder %s18, 0
      %p137 = por %p135, %p136
      %p138 = scmp.ne.s32.totalorder %s126, %s127
      %p139 = scmp.eq.s32.totalorder %s19, 7
      %p140 = por %p138, %p139
      %p142 = scmp.ne.s32.totalorder %s127, %s141
      %p143 = scmp.eq.s32.totalorder %s19, 0
      %p144 = por %p142, %p143
      %s145 = ssub.s32 %s20, %s32
      %s146 = ssub.s32 %s21, %s28
      %s147 = sor.u32 %s145, %s146
      %p148 = scmp.eq.s32.totalorder %s147, 0
      %s150 = sadd.s32 %s149, 1
      %s151 = scalar_select %p148, %s149, %s150
      %p154 = pneg %p148
      %p155 = scmp.eq.s32.totalorder %s13, 7
      %p156 = por %p154, %p155
      %p157 = scmp.ne.s32.totalorder %s149, %s152
      %p158 = scmp.eq.s32.totalorder %s13, 0
      %p159 = por %p157, %p158
      %p160 = scmp.ne.s32.totalorder %s149, %s152
      %p161 = scmp.eq.s32.totalorder %s18, 7
      %p162 = por %p160, %p161
      %p163 = scmp.ne.s32.totalorder %s152, %s153
      %p164 = scmp.eq.s32.totalorder %s18, 0
      %p165 = por %p163, %p164
      %p166 = scmp.ne.s32.totalorder %s152, %s153
      %p167 = scmp.eq.s32.totalorder %s19, 7
      %p168 = por %p166, %p167
      %p170 = scmp.ne.s32.totalorder %s153, %s169
      %p171 = scmp.eq.s32.totalorder %s19, 0
      %p172 = por %p170, %p171
      %s173 = ssub.s32 %s20, %s32
      %s174 = ssub.s32 %s21, %s28
      %s175 = sor.u32 %s173, %s174
      %p176 = scmp.eq.s32.totalorder %s175, 0
      %s178 = sadd.s32 %s177, 1
      %s179 = scalar_select %p176, %s177, %s178
      %p182 = pneg %p176
      %p183 = scmp.eq.s32.totalorder %s13, 7
      %p184 = por %p182, %p183
      %p185 = scmp.ne.s32.totalorder %s177, %s180
      %p186 = scmp.eq.s32.totalorder %s13, 0
      %p187 = por %p185, %p186
      %p188 = scmp.ne.s32.totalorder %s177, %s180
      %p189 = scmp.eq.s32.totalorder %s18, 7
      %p190 = por %p188, %p189
      %p191 = scmp.ne.s32.totalorder %s180, %s181
      %p192 = scmp.eq.s32.totalorder %s18, 0
      %p193 = por %p191, %p192
      %p194 = scmp.ne.s32.totalorder %s180, %s181
      %p195 = scmp.eq.s32.totalorder %s19, 7
      %p196 = por %p194, %p195
      %p198 = scmp.ne.s32.totalorder %s181, %s197
      %p199 = scmp.eq.s32.totalorder %s19, 0
      %p200 = por %p198, %p199
      %p201 = scmp.le.s32.totalorder 1, %s13
      %p202 = scmp.lt.s32.totalorder %s13, 9
      %p203 = pnand %p201, %p202
      %p204 = pneg %p203
      // Predicated region
      $region9: #{encoder_block_forward.2} parent=5 // pred_check
        _
      $region10: #{encoder_block_forward.2} parent=5 // pred_check_branch
        %206 = sbr.rel (%p203) target = $region12
      $region11: #{encoder_block_forward.2} parent=5 // pred_region
        %s207 = ssub.s32 %s13, 1
        // Predicated region
        $region13: #{encoder_block_forward.2} parent=11 // pred_check
          %p208 = pneg %p46
        $region14: #{encoder_block_forward.2} parent=11 // pred_check_branch
          %210 = sbr.rel (%p208) target = $region16
        $region15: #{encoder_block_forward.2} parent=11 // pred_region
          _
        $region16: #{encoder_block_forward.2} parent=11 // pred_fallthru
          _
        // Predicated region
        $region17: #{encoder_block_forward.2} parent=11 // pred_check
          %p211 = pneg %p95
        $region18: #{encoder_block_forward.2} parent=11 // pred_check_branch
          %213 = sbr.rel (%p211) target = $region20
        $region19: #{encoder_block_forward.2} parent=11 // pred_region
          _
        $region20: #{encoder_block_forward.2} parent=11 // pred_fallthru
          _
        // Predicated region
        $region21: #{encoder_block_forward.2} parent=11 // pred_check
          %p214 = pneg %p116
        $region22: #{encoder_block_forward.2} parent=11 // pred_check_branch
          %216 = sbr.rel (%p214) target = $region24
        $region23: #{encoder_block_forward.2} parent=11 // pred_region
          _
        $region24: #{encoder_block_forward.2} parent=11 // pred_fallthru
          _
        // Predicated region
        $region25: #{encoder_block_forward.2} parent=11 // pred_check
          %p217 = pneg %p137
        $region26: #{encoder_block_forward.2} parent=11 // pred_check_branch
          %219 = sbr.rel (%p217) target = $region28
        $region27: #{encoder_block_forward.2} parent=11 // pred_region
          _
        $region28: #{encoder_block_forward.2} parent=11 // pred_fallthru
          _
      $region12: #{encoder_block_forward.2} parent=5 // pred_fallthru
        _
      %p220 = scmp.lt.s32.totalorder %s13, 8
      // Predicated region
      $region29: #{encoder_block_forward.2} parent=5 // pred_check
        %p221 = pneg %p220
      $region30: #{encoder_block_forward.2} parent=5 // pred_check_branch
        %223 = sbr.rel (%p221) target = $region32
      $region31: #{encoder_block_forward.2} parent=5 // pred_region
        // Predicated region
        $region33: #{encoder_block_forward.2} parent=31 // pred_check
          %p224 = pneg %p68
        $region34: #{encoder_block_forward.2} parent=31 // pred_check_branch
          %226 = sbr.rel (%p224) target = $region36
        $region35: #{encoder_block_forward.2} parent=31 // pred_region
          %s227 = sand.u32 %s58, 1
          %s228 = sand.u32 %s58, 1
          %s229 = smul.addr %s228, 216
          %s230 = scalar_lea.vmem [#allocation2], %s229
          %s231 = smul.addr %s20, 216
          %s232 = sadd.s32 %s21, %s231
          %s233 = smul.addr %s232, 4
          %s234 = scalar_lea.vmem %s1, %s233
          // Predicated region
          $region37: #{encoder_block_forward.2} parent=35 // pred_check
            _
          $region38: #{encoder_block_forward.2} parent=35 // pred_check_branch
            %236 = sbr.rel (0) target = $region40
          $region39: #{encoder_block_forward.2} parent=35 // pred_region
            // Predicated region
            $region41: #{encoder_block_forward.2} parent=39 // pred_check
              _
            $region42: #{encoder_block_forward.2} parent=39 // pred_check_branch
              %238 = sbr.rel target = $region44
            $region43: #{encoder_block_forward.2} parent=39 // pred_region
              // Predicated region
              $region56: #{encoder_block_forward.2} parent=43 // pred_check
                _
              $region57: #{encoder_block_forward.2} parent=43 // pred_check_branch
                %360 = sbr.rel (0) target = $region59
              $region58: #{encoder_block_forward.2} parent=43 // pred_region
                loop: start=0, step=1, limit=1
                $region60: #{encoder_block_forward.2} parent=58 // loop_pre_header
                  _
                $region61: #{encoder_block_forward.2} parent=58 // loop_header
                  %s362 = sphi 0, %s366
                  %p363 = scmp.ge.s32.totalorder %s362, 1
                  %s367 = sphi %s234, %s234
                  %s368 = sphi %s230, %s230
                $region62: #{encoder_block_forward.2} parent=58 // loop_header_branch
                  %365 = sbr.rel (%p363) target = $region66
                $region63: #{encoder_block_forward.2} parent=58 // loop_body
                  _
                $region64: #{encoder_block_forward.2} parent=58 // loop_footer
                  %s366 = sadd.s32 1, %s362
                $region65: #{encoder_block_forward.2} parent=58 // loop_footer_branch
                  %361 = sbr.rel target = $region61
                $region66: #{encoder_block_forward.2} parent=58 // loop_exit
                  _
                %s370 = ssub.s32 16, 1
                loop: start=0, step=1, limit=1
                $region67: #{encoder_block_forward.2} parent=58 // loop_pre_header
                  _
                $region68: #{encoder_block_forward.2} parent=58 // loop_header
                  %s372 = sphi 0, %s376
                  %p373 = scmp.ge.s32.totalorder %s372, 1
                  %s377 = sphi %s234, %s234
                  %s378 = sphi %s230, %s230
                $region69: #{encoder_block_forward.2} parent=58 // loop_header_branch
                  %375 = sbr.rel (%p373) target = $region73
                $region70: #{encoder_block_forward.2} parent=58 // loop_body
                  %v379 = vld [vmem:[%s377] sm:%s370]
                  %380 = vst [vmem:[%s378] sm:%s370] %v379
                  %v381 = vld [vmem:[%s377 + $0x10] sm:%s370]
                  %382 = vst [vmem:[%s378 + $0x4] sm:%s370] %v381
                  %v383 = vld [vmem:[%s377 + $0x20] sm:%s370]
                  %384 = vst [vmem:[%s378 + $0x8] sm:%s370] %v383
                  %v385 = vld [vmem:[%s377 + $0x30] sm:%s370]
                  %386 = vst [vmem:[%s378 + $0xc] sm:%s370] %v385
                  %v387 = vld [vmem:[%s377 + $0x40] sm:%s370]
                  %388 = vst [vmem:[%s378 + $0x10] sm:%s370] %v387
                  %v389 = vld [vmem:[%s377 + $0x50] sm:%s370]
                  %390 = vst [vmem:[%s378 + $0x14] sm:%s370] %v389
                  %v391 = vld [vmem:[%s377 + $0x60] sm:%s370]
                  %392 = vst [vmem:[%s378 + $0x18] sm:%s370] %v391
                  %v393 = vld [vmem:[%s377 + $0x70] sm:%s370]
                  %394 = vst [vmem:[%s378 + $0x1c] sm:%s370] %v393
                  %v395 = vld [vmem:[%s377 + $0x80] sm:%s370]
                  %396 = vst [vmem:[%s378 + $0x20] sm:%s370] %v395
                  %v397 = vld [vmem:[%s377 + $0x90] sm:%s370]
                  %398 = vst [vmem:[%s378 + $0x24] sm:%s370] %v397
                  %v399 = vld [vmem:[%s377 + $0xa0] sm:%s370]
                  %400 = vst [vmem:[%s378 + $0x28] sm:%s370] %v399
                  %v401 = vld [vmem:[%s377 + $0xb0] sm:%s370]
                  %402 = vst [vmem:[%s378 + $0x2c] sm:%s370] %v401
                  %v403 = vld [vmem:[%s377 + $0xc0] sm:%s370]
                  %404 = vst [vmem:[%s378 + $0x30] sm:%s370] %v403
                  %v405 = vld [vmem:[%s377 + $0xd0] sm:%s370]
                  %406 = vst [vmem:[%s378 + $0x34] sm:%s370] %v405
                  %v407 = vld [vmem:[%s377 + $0xe0] sm:%s370]
                  %408 = vst [vmem:[%s378 + $0x38] sm:%s370] %v407
                  %v409 = vld [vmem:[%s377 + $0xf0] sm:%s370]
                  %410 = vst [vmem:[%s378 + $0x3c] sm:%s370] %v409
                  %v411 = vld [vmem:[%s377 + $0x100] sm:%s370]
                  %412 = vst [vmem:[%s378 + $0x40] sm:%s370] %v411
                  %v413 = vld [vmem:[%s377 + $0x110] sm:%s370]
                  %414 = vst [vmem:[%s378 + $0x44] sm:%s370] %v413
                  %v415 = vld [vmem:[%s377 + $0x120] sm:%s370]
                  %416 = vst [vmem:[%s378 + $0x48] sm:%s370] %v415
                  %v417 = vld [vmem:[%s377 + $0x130] sm:%s370]
                  %418 = vst [vmem:[%s378 + $0x4c] sm:%s370] %v417
                  %v419 = vld [vmem:[%s377 + $0x140] sm:%s370]
                  %420 = vst [vmem:[%s378 + $0x50] sm:%s370] %v419
                  %v421 = vld [vmem:[%s377 + $0x150] sm:%s370]
                  %422 = vst [vmem:[%s378 + $0x54] sm:%s370] %v421
                  %v423 = vld [vmem:[%s377 + $0x160] sm:%s370]
                  %424 = vst [vmem:[%s378 + $0x58] sm:%s370] %v423
                  %v425 = vld [vmem:[%s377 + $0x170] sm:%s370]
                  %426 = vst [vmem:[%s378 + $0x5c] sm:%s370] %v425
                  %v427 = vld [vmem:[%s377 + $0x180] sm:%s370]
                  %428 = vst [vmem:[%s378 + $0x60] sm:%s370] %v427
                  %v429 = vld [vmem:[%s377 + $0x190] sm:%s370]
                  %430 = vst [vmem:[%s378 + $0x64] sm:%s370] %v429
                  %v431 = vld [vmem:[%s377 + $0x1a0] sm:%s370]
                  %432 = vst [vmem:[%s378 + $0x68] sm:%s370] %v431
                  %v433 = vld [vmem:[%s377 + $0x1b0] sm:%s370]
                  %434 = vst [vmem:[%s378 + $0x6c] sm:%s370] %v433
                  %v435 = vld [vmem:[%s377 + $0x1c0] sm:%s370]
                  %436 = vst [vmem:[%s378 + $0x70] sm:%s370] %v435
                  %v437 = vld [vmem:[%s377 + $0x1d0] sm:%s370]
                  %438 = vst [vmem:[%s378 + $0x74] sm:%s370] %v437
                  %v439 = vld [vmem:[%s377 + $0x1e0] sm:%s370]
                  %440 = vst [vmem:[%s378 + $0x78] sm:%s370] %v439
                  %v441 = vld [vmem:[%s377 + $0x1f0] sm:%s370]
                  %442 = vst [vmem:[%s378 + $0x7c] sm:%s370] %v441
                  %v443 = vld [vmem:[%s377 + $0x200] sm:%s370]
                  %444 = vst [vmem:[%s378 + $0x80] sm:%s370] %v443
                  %v445 = vld [vmem:[%s377 + $0x210] sm:%s370]
                  %446 = vst [vmem:[%s378 + $0x84] sm:%s370] %v445
                  %v447 = vld [vmem:[%s377 + $0x220] sm:%s370]
                  %448 = vst [vmem:[%s378 + $0x88] sm:%s370] %v447
                  %v449 = vld [vmem:[%s377 + $0x230] sm:%s370]
                  %450 = vst [vmem:[%s378 + $0x8c] sm:%s370] %v449
                  %v451 = vld [vmem:[%s377 + $0x240] sm:%s370]
                  %452 = vst [vmem:[%s378 + $0x90] sm:%s370] %v451
                  %v453 = vld [vmem:[%s377 + $0x250] sm:%s370]
                  %454 = vst [vmem:[%s378 + $0x94] sm:%s370] %v453
                  %v455 = vld [vmem:[%s377 + $0x260] sm:%s370]
                  %456 = vst [vmem:[%s378 + $0x98] sm:%s370] %v455
                  %v457 = vld [vmem:[%s377 + $0x270] sm:%s370]
                  %458 = vst [vmem:[%s378 + $0x9c] sm:%s370] %v457
                  %v459 = vld [vmem:[%s377 + $0x280] sm:%s370]
                  %460 = vst [vmem:[%s378 + $0xa0] sm:%s370] %v459
                  %v461 = vld [vmem:[%s377 + $0x290] sm:%s370]
                  %462 = vst [vmem:[%s378 + $0xa4] sm:%s370] %v461
                  %v463 = vld [vmem:[%s377 + $0x2a0] sm:%s370]
                  %464 = vst [vmem:[%s378 + $0xa8] sm:%s370] %v463
                  %v465 = vld [vmem:[%s377 + $0x2b0] sm:%s370]
                  %466 = vst [vmem:[%s378 + $0xac] sm:%s370] %v465
                  %v467 = vld [vmem:[%s377 + $0x2c0] sm:%s370]
                  %468 = vst [vmem:[%s378 + $0xb0] sm:%s370] %v467
                  %v469 = vld [vmem:[%s377 + $0x2d0] sm:%s370]
                  %470 = vst [vmem:[%s378 + $0xb4] sm:%s370] %v469
                  %v471 = vld [vmem:[%s377 + $0x2e0] sm:%s370]
                  %472 = vst [vmem:[%s378 + $0xb8] sm:%s370] %v471
                  %v473 = vld [vmem:[%s377 + $0x2f0] sm:%s370]
                  %474 = vst [vmem:[%s378 + $0xbc] sm:%s370] %v473
                  %v475 = vld [vmem:[%s377 + $0x300] sm:%s370]
                  %476 = vst [vmem:[%s378 + $0xc0] sm:%s370] %v475
                  %v477 = vld [vmem:[%s377 + $0x310] sm:%s370]
                  %478 = vst [vmem:[%s378 + $0xc4] sm:%s370] %v477
                  %v479 = vld [vmem:[%s377 + $0x320] sm:%s370]
                  %480 = vst [vmem:[%s378 + $0xc8] sm:%s370] %v479
                  %v481 = vld [vmem:[%s377 + $0x330] sm:%s370]
                  %482 = vst [vmem:[%s378 + $0xcc] sm:%s370] %v481
                  %v483 = vld [vmem:[%s377 + $0x340] sm:%s370]
                  %484 = vst [vmem:[%s378 + $0xd0] sm:%s370] %v483
                  %v485 = vld [vmem:[%s377 + $0x350] sm:%s370]
                  %486 = vst [vmem:[%s378 + $0xd4] sm:%s370] %v485
                $region71: #{encoder_block_forward.2} parent=58 // loop_footer
                  %s376 = sadd.s32 1, %s372
                $region72: #{encoder_block_forward.2} parent=58 // loop_footer_branch
                  %371 = sbr.rel target = $region68
                $region73: #{encoder_block_forward.2} parent=58 // loop_exit
                  _
              $region59: #{encoder_block_forward.2} parent=43 // pred_fallthru
                _
            $region44: #{encoder_block_forward.2} parent=39 // pred_fallthru
              _
            // Predicated region
            $region45: #{encoder_block_forward.2} parent=39 // pred_check
              _
            $region46: #{encoder_block_forward.2} parent=39 // pred_check_branch
              %240 = sbr.rel (0) target = $region48
            $region47: #{encoder_block_forward.2} parent=39 // pred_region
              %s242 = ssub.s32 16, 1
              loop: start=0, step=1, limit=1
              $region49: #{encoder_block_forward.2} parent=47 // loop_pre_header
                _
              $region50: #{encoder_block_forward.2} parent=47 // loop_header
                %s244 = sphi 0, %s248
                %p245 = scmp.ge.s32.totalorder %s244, 1
                %s249 = sphi %s234, %s234
                %s250 = sphi %s230, %s230
              $region51: #{encoder_block_forward.2} parent=47 // loop_header_branch
                %247 = sbr.rel (%p245) target = $region55
              $region52: #{encoder_block_forward.2} parent=47 // loop_body
                %v251 = vld [vmem:[%s249] sm:%s242]
                %252 = vst [vmem:[%s250] sm:%s242] %v251
                %v253 = vld [vmem:[%s249 + $0x10] sm:%s242]
                %254 = vst [vmem:[%s250 + $0x4] sm:%s242] %v253
                %v255 = vld [vmem:[%s249 + $0x20] sm:%s242]
                %256 = vst [vmem:[%s250 + $0x8] sm:%s242] %v255
                %v257 = vld [vmem:[%s249 + $0x30] sm:%s242]
                %258 = vst [vmem:[%s250 + $0xc] sm:%s242] %v257
                %v259 = vld [vmem:[%s249 + $0x40] sm:%s242]
                %260 = vst [vmem:[%s250 + $0x10] sm:%s242] %v259
                %v261 = vld [vmem:[%s249 + $0x50] sm:%s242]
                %262 = vst [vmem:[%s250 + $0x14] sm:%s242] %v261
                %v263 = vld [vmem:[%s249 + $0x60] sm:%s242]
                %264 = vst [vmem:[%s250 + $0x18] sm:%s242] %v263
                %v265 = vld [vmem:[%s249 + $0x70] sm:%s242]
                %266 = vst [vmem:[%s250 + $0x1c] sm:%s242] %v265
                %v267 = vld [vmem:[%s249 + $0x80] sm:%s242]
                %268 = vst [vmem:[%s250 + $0x20] sm:%s242] %v267
                %v269 = vld [vmem:[%s249 + $0x90] sm:%s242]
                %270 = vst [vmem:[%s250 + $0x24] sm:%s242] %v269
                %v271 = vld [vmem:[%s249 + $0xa0] sm:%s242]
                %272 = vst [vmem:[%s250 + $0x28] sm:%s242] %v271
                %v273 = vld [vmem:[%s249 + $0xb0] sm:%s242]
                %274 = vst [vmem:[%s250 + $0x2c] sm:%s242] %v273
                %v275 = vld [vmem:[%s249 + $0xc0] sm:%s242]
                %276 = vst [vmem:[%s250 + $0x30] sm:%s242] %v275
                %v277 = vld [vmem:[%s249 + $0xd0] sm:%s242]
                %278 = vst [vmem:[%s250 + $0x34] sm:%s242] %v277
                %v279 = vld [vmem:[%s249 + $0xe0] sm:%s242]
                %280 = vst [vmem:[%s250 + $0x38] sm:%s242] %v279
                %v281 = vld [vmem:[%s249 + $0xf0] sm:%s242]
                %282 = vst [vmem:[%s250 + $0x3c] sm:%s242] %v281
                %v283 = vld [vmem:[%s249 + $0x100] sm:%s242]
                %284 = vst [vmem:[%s250 + $0x40] sm:%s242] %v283
                %v285 = vld [vmem:[%s249 + $0x110] sm:%s242]
                %286 = vst [vmem:[%s250 + $0x44] sm:%s242] %v285
                %v287 = vld [vmem:[%s249 + $0x120] sm:%s242]
                %288 = vst [vmem:[%s250 + $0x48] sm:%s242] %v287
                %v289 = vld [vmem:[%s249 + $0x130] sm:%s242]
                %290 = vst [vmem:[%s250 + $0x4c] sm:%s242] %v289
                %v291 = vld [vmem:[%s249 + $0x140] sm:%s242]
                %292 = vst [vmem:[%s250 + $0x50] sm:%s242] %v291
                %v293 = vld [vmem:[%s249 + $0x150] sm:%s242]
                %294 = vst [vmem:[%s250 + $0x54] sm:%s242] %v293
                %v295 = vld [vmem:[%s249 + $0x160] sm:%s242]
                %296 = vst [vmem:[%s250 + $0x58] sm:%s242] %v295
                %v297 = vld [vmem:[%s249 + $0x170] sm:%s242]
                %298 = vst [vmem:[%s250 + $0x5c] sm:%s242] %v297
                %v299 = vld [vmem:[%s249 + $0x180] sm:%s242]
                %300 = vst [vmem:[%s250 + $0x60] sm:%s242] %v299
                %v301 = vld [vmem:[%s249 + $0x190] sm:%s242]
                %302 = vst [vmem:[%s250 + $0x64] sm:%s242] %v301
                %v303 = vld [vmem:[%s249 + $0x1a0] sm:%s242]
                %304 = vst [vmem:[%s250 + $0x68] sm:%s242] %v303
                %v305 = vld [vmem:[%s249 + $0x1b0] sm:%s242]
                %306 = vst [vmem:[%s250 + $0x6c] sm:%s242] %v305
                %v307 = vld [vmem:[%s249 + $0x1c0] sm:%s242]
                %308 = vst [vmem:[%s250 + $0x70] sm:%s242] %v307
                %v309 = vld [vmem:[%s249 + $0x1d0] sm:%s242]
                %310 = vst [vmem:[%s250 + $0x74] sm:%s242] %v309
                %v311 = vld [vmem:[%s249 + $0x1e0] sm:%s242]
                %312 = vst [vmem:[%s250 + $0x78] sm:%s242] %v311
                %v313 = vld [vmem:[%s249 + $0x1f0] sm:%s242]
                %314 = vst [vmem:[%s250 + $0x7c] sm:%s242] %v313
                %v315 = vld [vmem:[%s249 + $0x200] sm:%s242]
                %316 = vst [vmem:[%s250 + $0x80] sm:%s242] %v315
                %v317 = vld [vmem:[%s249 + $0x210] sm:%s242]
                %318 = vst [vmem:[%s250 + $0x84] sm:%s242] %v317
                %v319 = vld [vmem:[%s249 + $0x220] sm:%s242]
                %320 = vst [vmem:[%s250 + $0x88] sm:%s242] %v319
                %v321 = vld [vmem:[%s249 + $0x230] sm:%s242]
                %322 = vst [vmem:[%s250 + $0x8c] sm:%s242] %v321
                %v323 = vld [vmem:[%s249 + $0x240] sm:%s242]
                %324 = vst [vmem:[%s250 + $0x90] sm:%s242] %v323
                %v325 = vld [vmem:[%s249 + $0x250] sm:%s242]
                %326 = vst [vmem:[%s250 + $0x94] sm:%s242] %v325
                %v327 = vld [vmem:[%s249 + $0x260] sm:%s242]
                %328 = vst [vmem:[%s250 + $0x98] sm:%s242] %v327
                %v329 = vld [vmem:[%s249 + $0x270] sm:%s242]
                %330 = vst [vmem:[%s250 + $0x9c] sm:%s242] %v329
                %v331 = vld [vmem:[%s249 + $0x280] sm:%s242]
                %332 = vst [vmem:[%s250 + $0xa0] sm:%s242] %v331
                %v333 = vld [vmem:[%s249 + $0x290] sm:%s242]
                %334 = vst [vmem:[%s250 + $0xa4] sm:%s242] %v333
                %v335 = vld [vmem:[%s249 + $0x2a0] sm:%s242]
                %336 = vst [vmem:[%s250 + $0xa8] sm:%s242] %v335
                %v337 = vld [vmem:[%s249 + $0x2b0] sm:%s242]
                %338 = vst [vmem:[%s250 + $0xac] sm:%s242] %v337
                %v339 = vld [vmem:[%s249 + $0x2c0] sm:%s242]
                %340 = vst [vmem:[%s250 + $0xb0] sm:%s242] %v339
                %v341 = vld [vmem:[%s249 + $0x2d0] sm:%s242]
                %342 = vst [vmem:[%s250 + $0xb4] sm:%s242] %v341
                %v343 = vld [vmem:[%s249 + $0x2e0] sm:%s242]
                %344 = vst [vmem:[%s250 + $0xb8] sm:%s242] %v343
                %v345 = vld [vmem:[%s249 + $0x2f0] sm:%s242]
                %346 = vst [vmem:[%s250 + $0xbc] sm:%s242] %v345
                %v347 = vld [vmem:[%s249 + $0x300] sm:%s242]
                %348 = vst [vmem:[%s250 + $0xc0] sm:%s242] %v347
                %v349 = vld [vmem:[%s249 + $0x310] sm:%s242]
                %350 = vst [vmem:[%s250 + $0xc4] sm:%s242] %v349
                %v351 = vld [vmem:[%s249 + $0x320] sm:%s242]
                %352 = vst [vmem:[%s250 + $0xc8] sm:%s242] %v351
                %v353 = vld [vmem:[%s249 + $0x330] sm:%s242]
                %354 = vst [vmem:[%s250 + $0xcc] sm:%s242] %v353
                %v355 = vld [vmem:[%s249 + $0x340] sm:%s242]
                %356 = vst [vmem:[%s250 + $0xd0] sm:%s242] %v355
                %v357 = vld [vmem:[%s249 + $0x350] sm:%s242]
                %358 = vst [vmem:[%s250 + $0xd4] sm:%s242] %v357
              $region53: #{encoder_block_forward.2} parent=47 // loop_footer
                %s248 = sadd.s32 1, %s244
              $region54: #{encoder_block_forward.2} parent=47 // loop_footer_branch
                %243 = sbr.rel target = $region50
              $region55: #{encoder_block_forward.2} parent=47 // loop_exit
                _
            $region48: #{encoder_block_forward.2} parent=39 // pred_fallthru
              _
          $region40: #{encoder_block_forward.2} parent=35 // pred_fallthru
            _
          %487 = vnop
        $region36: #{encoder_block_forward.2} parent=31 // pred_fallthru
          _
      $region32: #{encoder_block_forward.2} parent=5 // pred_fallthru
        _
      %p488 = scmp.le.s32.totalorder 1, %s13
      %p489 = scmp.lt.s32.totalorder %s13, 9
      %p490 = pnand %p488, %p489
      %p491 = pneg %p490
      // Predicated region
      $region74: #{encoder_block_forward.2} parent=5 // pred_check
        _
      $region75: #{encoder_block_forward.2} parent=5 // pred_check_branch
        %493 = sbr.rel (%p490) target = $region77
      $region76: #{encoder_block_forward.2} parent=5 // pred_region
        %s494 = ssub.s32 %s13, 1
        %s495 = sand.u32 %s61, 1
        %s496 = sand.u32 %s61, 1
        %s497 = smul.addr %s496, 216
        %s498 = scalar_lea.vmem [#allocation2], %s497
        // Predicated region
        $region78: #{encoder_block_forward.2} parent=76 // pred_check
          %p499 = pneg %p74
        $region79: #{encoder_block_forward.2} parent=76 // pred_check_branch
          %501 = sbr.rel (%p499) target = $region81
        $region80: #{encoder_block_forward.2} parent=76 // pred_region
          _
        $region81: #{encoder_block_forward.2} parent=76 // pred_fallthru
          _
        %p502 = pneg %p46
        %p503 = pneg %p43
        %s504 = sand.u32 %s61, 1
        %s505 = sand.u32 %s61, 1
        %s506 = smul.addr %s505, 216
        %s507 = scalar_lea.vmem [#allocation2], %s506
        %p508 = pneg %p74
        %p509 = pneg %p71
        %p510 = pneg %p95
        %p511 = pneg %p92
        %p512 = pneg %p116
        %p513 = pneg %p113
        %p514 = pneg %p137
        %p515 = pneg %p134
        %p516 = pneg %p165
        %p517 = pneg %p162
        %s518 = sand.u32 %s152, 1
        %s519 = sand.u32 %s152, 1
        %s520 = smul.addr %s519, 16
        %s521 = scalar_lea.vmem [#allocation3], %s520
        %p522 = pneg %p193
        %p523 = pneg %p190
        %s524 = sand.u32 %s180, 1
        %s525 = sand.u32 %s180, 1
        %s526 = smul.addr %s525, 16
        %s527 = scalar_lea.vmem [#allocation4], %s526
        %v529 = vld [vmem:[%s0] sm:$0xff]
        %v530 = vld [vmem:[%s0 + $0x8] sm:$0xff]
        %v531 = vld [vmem:[%s0 + $0x10] sm:$0xff]
        %v532 = vld [vmem:[%s0 + $0x18] sm:$0xff]
        %v533 = vld [vmem:[%s0 + $0x20] sm:$0xff]
        %v534 = vld [vmem:[%s0 + $0x28] sm:$0xff]
        %v535 = vld [vmem:[%s0 + $0x30] sm:$0xff]
        %v536 = vld [vmem:[%s0 + $0x38] sm:$0xff]
        %v537 = vld [vmem:[%s498] sm:$0xf]
        %v538 = vld [vmem:[%s498 + $0x4] sm:$0xf]
        %v539 = vld [vmem:[%s498 + $0x8] sm:$0xf]
        %v540 = vld [vmem:[%s498 + $0xc] sm:$0xf]
        %v541 = vld [vmem:[%s498 + $0x10] sm:$0xf]
        %v542 = vld [vmem:[%s498 + $0x14] sm:$0xf]
        %v543 = vld [vmem:[%s498 + $0x18] sm:$0xf]
        %v544 = vld [vmem:[%s498 + $0x1c] sm:$0xf]
        %v545 = vld [vmem:[%s498 + $0x20] sm:$0xf]
        %v546 = vld [vmem:[%s498 + $0x24] sm:$0xf]
        %v547 = vld [vmem:[%s498 + $0x28] sm:$0xf]
        %v548 = vld [vmem:[%s498 + $0x2c] sm:$0xf]
        %v549 = vld [vmem:[%s498 + $0x30] sm:$0xf]
        %v550 = vld [vmem:[%s498 + $0x34] sm:$0xf]
        %v551 = vld [vmem:[%s498 + $0x38] sm:$0xf]
        %v552 = vld [vmem:[%s498 + $0x3c] sm:$0xf]
        %v553 = vld [vmem:[%s498 + $0x40] sm:$0xf]
        %v554 = vld [vmem:[%s498 + $0x44] sm:$0xf]
        %v555 = vld [vmem:[%s498 + $0x48] sm:$0xf]
        %v556 = vld [vmem:[%s498 + $0x4c] sm:$0xf]
        %v557 = vld [vmem:[%s498 + $0x50] sm:$0xf]
        %v558 = vld [vmem:[%s498 + $0x54] sm:$0xf]
        %v559 = vld [vmem:[%s498 + $0x58] sm:$0xf]
        %v560 = vld [vmem:[%s498 + $0x5c] sm:$0xf]
        %v561 = vld [vmem:[%s498 + $0x60] sm:$0xf]
        %v562 = vld [vmem:[%s498 + $0x64] sm:$0xf]
        %v563 = vld [vmem:[%s498 + $0x68] sm:$0xf]
        %v564 = vld [vmem:[%s498 + $0x6c] sm:$0xf]
        %v565 = vld [vmem:[%s498 + $0x70] sm:$0xf]
        %v566 = vld [vmem:[%s498 + $0x74] sm:$0xf]
        %v567 = vld [vmem:[%s498 + $0x78] sm:$0xf]
        %v568 = vld [vmem:[%s498 + $0x7c] sm:$0xf]
        %v569 = vld [vmem:[%s498 + $0x80] sm:$0xf]
        %v570 = vld [vmem:[%s498 + $0x84] sm:$0xf]
        %v571 = vld [vmem:[%s498 + $0x88] sm:$0xf]
        %v572 = vld [vmem:[%s498 + $0x8c] sm:$0xf]
        %v573 = vld [vmem:[%s498 + $0x90] sm:$0xf]
        %v574 = vld [vmem:[%s498 + $0x94] sm:$0xf]
        %v575 = vld [vmem:[%s498 + $0x98] sm:$0xf]
        %v576 = vld [vmem:[%s498 + $0x9c] sm:$0xf]
        %v577 = vld [vmem:[%s498 + $0xa0] sm:$0xf]
        %v578 = vld [vmem:[%s498 + $0xa4] sm:$0xf]
        %v579 = vld [vmem:[%s498 + $0xa8] sm:$0xf]
        %v580 = vld [vmem:[%s498 + $0xac] sm:$0xf]
        %v581 = vld [vmem:[%s498 + $0xb0] sm:$0xf]
        %v582 = vld [vmem:[%s498 + $0xb4] sm:$0xf]
        %v583 = vld [vmem:[%s498 + $0xb8] sm:$0xf]
        %v584 = vld [vmem:[%s498 + $0xbc] sm:$0xf]
        %v585 = vld [vmem:[%s498 + $0xc0] sm:$0xf]
        %v586 = vld [vmem:[%s498 + $0xc4] sm:$0xf]
        %v587 = vld [vmem:[%s498 + $0xc8] sm:$0xf]
        %v588 = vld [vmem:[%s498 + $0xcc] sm:$0xf]
        %v589 = vld [vmem:[%s498 + $0xd0] sm:$0xf]
        %v590 = vld [vmem:[%s498 + $0xd4] sm:$0xf]
        %v591 = vld [vmem:[%s2] sm:$0xff]
        %v592 = vld [vmem:[%s2 + $0x8] sm:$0xff]
        %v593 = vld [vmem:[%s2 + $0x10] sm:$0xff]
        %v594 = vld [vmem:[%s2 + $0x18] sm:$0xff]
        %596 = vset.pattern.permute.xlu0 0
        %597 = vperm.xlu0 %596, %v591
        %v598 = vpop.permute.xlu0 %597
        %601 = vset.pattern.permute.xlu0 0
        %602 = vperm.xlu0 %601, %v592
        %v603 = vpop.permute.xlu0 %602
        %606 = vset.pattern.permute.xlu0 0
        %607 = vperm.xlu0 %606, %v593
        %v608 = vpop.permute.xlu0 %607
        %611 = vset.pattern.permute.xlu0 0
        %612 = vperm.xlu0 %611, %v594
        %v613 = vpop.permute.xlu0 %612
        %v623 = vunpack.c.l.b16 %v529
        %v624 = vunpack.c.h.b16 %v529
        %v625 = vunpack.c.l.b16 %v530
        %v626 = vunpack.c.h.b16 %v530
        %v627 = vunpack.c.l.b16 %v531
        %v628 = vunpack.c.h.b16 %v531
        %v629 = vunpack.c.l.b16 %v532
        %v630 = vunpack.c.h.b16 %v532
        %v631 = vunpack.c.l.b16 %v533
        %v632 = vunpack.c.h.b16 %v533
        %v633 = vunpack.c.l.b16 %v534
        %v634 = vunpack.c.h.b16 %v534
        %v635 = vunpack.c.l.b16 %v535
        %v636 = vunpack.c.h.b16 %v535
        %v637 = vunpack.c.l.b16 %v536
        %v638 = vunpack.c.h.b16 %v536
        %v639 = vpack.c.b16 %v627, %v623
        %v640 = vpack.c.b16 %v628, %v624
        %v641 = vpack.c.b16 %v629, %v625
        %v642 = vpack.c.b16 %v630, %v626
        %v643 = vpack.c.b16 %v635, %v631
        %v644 = vpack.c.b16 %v636, %v632
        %v645 = vpack.c.b16 %v637, %v633
        %v646 = vpack.c.b16 %v638, %v634
        %v707 = vunpack.c.l.b16 %v537
        %v708 = vunpack.c.l.b16 %v538
        %v709 = vunpack.c.l.b16 %v539
        %v710 = vunpack.c.l.b16 %v540
        %v711 = vunpack.c.l.b16 %v541
        %v712 = vunpack.c.l.b16 %v542
        %v713 = vunpack.c.l.b16 %v543
        %v714 = vunpack.c.l.b16 %v544
        %v715 = vunpack.c.l.b16 %v545
        %v716 = vunpack.c.l.b16 %v546
        %v717 = vunpack.c.l.b16 %v547
        %v718 = vunpack.c.l.b16 %v548
        %v719 = vunpack.c.l.b16 %v549
        %v720 = vunpack.c.l.b16 %v550
        %v721 = vunpack.c.l.b16 %v551
        %v722 = vunpack.c.l.b16 %v552
        %v723 = vunpack.c.l.b16 %v553
        %v724 = vunpack.c.l.b16 %v554
        %v725 = vunpack.c.l.b16 %v555
        %v726 = vunpack.c.l.b16 %v556
        %v727 = vunpack.c.l.b16 %v557
        %v728 = vunpack.c.l.b16 %v558
        %v729 = vunpack.c.l.b16 %v559
        %v730 = vunpack.c.l.b16 %v560
        %v731 = vunpack.c.l.b16 %v561
        %v732 = vunpack.c.l.b16 %v562
        %v733 = vunpack.c.l.b16 %v563
        %v734 = vunpack.c.l.b16 %v564
        %v735 = vunpack.c.l.b16 %v565
        %v736 = vunpack.c.l.b16 %v566
        %v737 = vunpack.c.l.b16 %v567
        %v738 = vunpack.c.l.b16 %v568
        %v739 = vunpack.c.l.b16 %v569
        %v740 = vunpack.c.l.b16 %v570
        %v741 = vunpack.c.l.b16 %v571
        %v742 = vunpack.c.l.b16 %v572
        %v743 = vunpack.c.l.b16 %v573
        %v744 = vunpack.c.l.b16 %v574
        %v745 = vunpack.c.l.b16 %v575
        %v746 = vunpack.c.l.b16 %v576
        %v747 = vunpack.c.l.b16 %v577
        %v748 = vunpack.c.l.b16 %v578
        %v749 = vunpack.c.l.b16 %v579
        %v750 = vunpack.c.l.b16 %v580
        %v751 = vunpack.c.l.b16 %v581
        %v752 = vunpack.c.l.b16 %v582
        %v753 = vunpack.c.l.b16 %v583
        %v754 = vunpack.c.l.b16 %v584
        %v755 = vunpack.c.l.b16 %v585
        %v756 = vunpack.c.l.b16 %v586
        %v757 = vunpack.c.l.b16 %v587
        %v758 = vunpack.c.l.b16 %v588
        %v759 = vunpack.c.l.b16 %v589
        %v760 = vunpack.c.l.b16 %v590
        %v761 = vpack.c.b16 %v708, %v707
        %v762 = vpack.c.b16 %v710, %v709
        %v763 = vpack.c.b16 %v712, %v711
        %v764 = vpack.c.b16 %v714, %v713
        %v765 = vpack.c.b16 %v716, %v715
        %v766 = vpack.c.b16 %v718, %v717
        %v767 = vpack.c.b16 %v720, %v719
        %v768 = vpack.c.b16 %v722, %v721
        %v769 = vpack.c.b16 %v724, %v723
        %v770 = vpack.c.b16 %v726, %v725
        %v771 = vpack.c.b16 %v728, %v727
        %v772 = vpack.c.b16 %v730, %v729
        %v773 = vpack.c.b16 %v732, %v731
        %v774 = vpack.c.b16 %v734, %v733
        %v775 = vpack.c.b16 %v736, %v735
        %v776 = vpack.c.b16 %v738, %v737
        %v777 = vpack.c.b16 %v740, %v739
        %v778 = vpack.c.b16 %v742, %v741
        %v779 = vpack.c.b16 %v744, %v743
        %v780 = vpack.c.b16 %v746, %v745
        %v781 = vpack.c.b16 %v748, %v747
        %v782 = vpack.c.b16 %v750, %v749
        %v783 = vpack.c.b16 %v752, %v751
        %v784 = vpack.c.b16 %v754, %v753
        %v785 = vpack.c.b16 %v756, %v755
        %v786 = vpack.c.b16 %v758, %v757
        %v787 = vpack.c.b16 %v760, %v759
        %vm815 = vcmask 392192
        %v817 = vsel %vm815, %v642, 0
        %v820 = vsel %vm815, %v646, 0
        %822 = vmatprep.subr.bf16.mxu0 0
        %823 = vmatpush1.bf16.msra.mxu0 %v768
        %824 = vmatprep.subr.bf16.mxu0 0
        %825 = vmatpush1.bf16.msra.mxu0 %v767
        %826 = vmatprep.subr.bf16.mxu0 0
        %827 = vmatpush1.bf16.msra.mxu0 %v766
        %828 = vmatprep.subr.bf16.mxu0 0
        %829 = vmatpush1.bf16.msra.mxu0 %v765
        %830 = vmatprep.subr.bf16.mxu0 0
        %831 = vmatpush1.bf16.msra.mxu0 %v764
        %832 = vmatprep.subr.bf16.mxu0 0
        %833 = vmatpush1.bf16.msra.mxu0 %v763
        %834 = vmatprep.subr.bf16.mxu0 0
        %835 = vmatpush1.bf16.msra.mxu0 %v762
        %836 = vmatprep.subr.bf16.mxu0 0
        %837 = vmatpush1.bf16.msra.mxu0 %v761
        %838 = vmatprep.subr.bf16.mxu0 0
        %839 = vmatpush2.bf16.msra.mxu0 %v776
        %840 = vmatprep.subr.bf16.mxu0 0
        %841 = vmatpush2.bf16.msra.mxu0 %v775
        %842 = vmatprep.subr.bf16.mxu0 0
        %843 = vmatpush2.bf16.msra.mxu0 %v774
        %844 = vmatprep.subr.bf16.mxu0 0
        %845 = vmatpush2.bf16.msra.mxu0 %v773
        %846 = vmatprep.subr.bf16.mxu0 0
        %847 = vmatpush2.bf16.msra.mxu0 %v772
        %848 = vmatprep.subr.bf16.mxu0 0
        %849 = vmatpush2.bf16.msra.mxu0 %v771
        %850 = vmatprep.subr.bf16.mxu0 0
        %851 = vmatpush2.bf16.msra.mxu0 %v770
        %852 = vmatprep.subr.bf16.mxu0 0
        %853 = vmatpush2.bf16.msra.mxu0 %v769
        %854 = vmatprep.mubr.bf16.mxu0 %v640
        %855 = vmatmul.mubr.bf16.gmra.mxu0 %v639
        %v856 = vpop.f32.mrf.mxu0
        %v857 = vadd.f32 %v598, %v856
        %v858 = vpop.f32.mrf.mxu0
        %v859 = vpop.f32.mrf.mxu0
        %v860 = vadd.f32 %v603, %v859
        %v861 = vpop.f32.mrf.mxu0
        %862 = vmatprep.mubr.bf16.mxu0 %v644
        %863 = vmatmul.mubr.bf16.gmra.mxu0 %v643
        %v864 = vpop.f32.mrf.mxu0
        %v865 = vadd.f32 %v608, %v864
        %v866 = vpop.f32.mrf.mxu0
        %v867 = vpop.f32.mrf.mxu0
        %v868 = vadd.f32 %v613, %v867
        %v869 = vpop.f32.mrf.mxu0
        %870 = vdwg.mxu0
        %871 = vmatprep.subr.bf16.mxu0 0
        %872 = vmatpush1.bf16.msra.mxu0 %v784
        %873 = vmatprep.subr.bf16.mxu0 0
        %874 = vmatpush1.bf16.msra.mxu0 %v783
        %875 = vmatprep.subr.bf16.mxu0 0
        %876 = vmatpush1.bf16.msra.mxu0 %v782
        %877 = vmatprep.subr.bf16.mxu0 0
        %878 = vmatpush1.bf16.msra.mxu0 %v781
        %879 = vmatprep.subr.bf16.mxu0 0
        %880 = vmatpush1.bf16.msra.mxu0 %v780
        %881 = vmatprep.subr.bf16.mxu0 0
        %882 = vmatpush1.bf16.msra.mxu0 %v779
        %883 = vmatprep.subr.bf16.mxu0 0
        %884 = vmatpush1.bf16.msra.mxu0 %v778
        %885 = vmatprep.subr.bf16.mxu0 0
        %886 = vmatpush1.bf16.msra.mxu0 %v777
        %887 = vmatprep.subr.bf16.mxu0 0
        %888 = vmatpush2.bf16.msra.mxu0 0
        %889 = vmatprep.subr.bf16.mxu0 0
        %890 = vmatpush2.bf16.msra.mxu0 0
        %891 = vmatprep.subr.bf16.mxu0 0
        %892 = vmatpush2.bf16.msra.mxu0 0
        %893 = vmatprep.subr.bf16.mxu0 0
        %894 = vmatpush2.bf16.msra.mxu0 0
        %895 = vmatprep.subr.bf16.mxu0 0
        %896 = vmatpush2.bf16.msra.mxu0 0
        %897 = vmatprep.subr.bf16.mxu0 0
        %898 = vmatpush2.bf16.msra.mxu0 %v787
        %899 = vmatprep.subr.bf16.mxu0 0
        %900 = vmatpush2.bf16.msra.mxu0 %v786
        %901 = vmatprep.subr.bf16.mxu0 0
        %902 = vmatpush2.bf16.msra.mxu0 %v785
        %903 = vmatprep.mubr.bf16.mxu0 %v817
        %904 = vmatmul.mubr.bf16.gmra.mxu0 %v641
        %v905 = vpop.f32.mrf.mxu0
        %v906 = vadd.f32 %v857, %v905
        %v907 = vpop.f32.mrf.mxu0
        %v908 = vpop.f32.mrf.mxu0
        %v909 = vadd.f32 %v860, %v908
        %v910 = vpop.f32.mrf.mxu0
        %911 = vmatprep.mubr.bf16.mxu0 %v820
        %912 = vmatmul.mubr.bf16.gmra.mxu0 %v645
        %v913 = vpop.f32.mrf.mxu0
        %v914 = vadd.f32 %v865, %v913
        %v915 = vpop.f32.mrf.mxu0
        %v916 = vpop.f32.mrf.mxu0
        %v917 = vadd.f32 %v868, %v916
        %v918 = vpop.f32.mrf.mxu0
        %919 = vdwg.mxu0
        %v920 = vmax.f32 %v906, 0.0
        %v921 = vmax.f32 %v909, 0.0
        %v922 = vmax.f32 %v914, 0.0
        %v923 = vmax.f32 %v917, 0.0
        %v924 = vpack.c.bf16 %v921, %v920
        %v925 = vpack.c.bf16 %v923, %v922
        %v928 = vunpack.c.l.b16 %v924
        %v929 = vunpack.c.h.b16 %v924
        %v930 = vunpack.c.l.b16 %v925
        %v931 = vunpack.c.h.b16 %v925
        %v932 = vpack.c.b16 %v928, %v928
        %v933 = vpack.c.b16 %v929, %v929
        %v934 = vpack.c.b16 %v930, %v930
        %v935 = vpack.c.b16 %v931, %v931
        %940 = vst [vmem:[%s521] sm:$0xf] %v932
        %941 = vst [vmem:[%s521 + $0x4] sm:$0xf] %v933
        %942 = vst [vmem:[%s521 + $0x8] sm:$0xf] %v934
        %943 = vst [vmem:[%s521 + $0xc] sm:$0xf] %v935
        %v944 = vld [vmem:[%s498 + $0x68] sm:$0xf]
        %v945 = vld [vmem:[%s498 + $0x6c] sm:$0xf]
        %v946 = vld [vmem:[%s3] sm:$0xf]
        %v947 = vld [vmem:[%s3 + $0x4] sm:$0xf]
        %v948 = vld [vmem:[%s3 + $0x8] sm:$0xf]
        %v949 = vld [vmem:[%s3 + $0xc] sm:$0xf]
        %v950 = vld [vmem:[%s4] sm:$0xff]
        %v951 = vld [vmem:[%s4 + $0x8] sm:$0xff]
        %v952 = vld [vmem:[%s4 + $0x10] sm:$0xff]
        %v953 = vld [vmem:[%s4 + $0x18] sm:$0xff]
        %955 = vset.pattern.permute.xlu0 0
        %956 = vperm.xlu0 %955, %v950
        %v957 = vpop.permute.xlu0 %956
        %960 = vset.pattern.permute.xlu0 0
        %961 = vperm.xlu0 %960, %v951
        %v962 = vpop.permute.xlu0 %961
        %965 = vset.pattern.permute.xlu0 0
        %966 = vperm.xlu0 %965, %v952
        %v967 = vpop.permute.xlu0 %966
        %970 = vset.pattern.permute.xlu0 0
        %971 = vperm.xlu0 %970, %v953
        %v972 = vpop.permute.xlu0 %971
        %v978 = vunpack.c.l.b16 %v946
        %v979 = vunpack.c.l.b16 %v947
        %v980 = vunpack.c.l.b16 %v948
        %v981 = vunpack.c.l.b16 %v949
        %v982 = vpack.c.b16 %v979, %v978
        %v983 = vpack.c.b16 %v981, %v980
        %v986 = vunpack.c.l.b16 %v944
        %v987 = vunpack.c.l.b16 %v945
        %v988 = vpack.c.b16 %v987, %v986
        %vm990 = vcmask 130048
        %v992 = vsel %vm990, %v982, 0
        %v995 = vsel %vm990, %v983, 0
        %997 = vmatprep.subr.bf16.mxu0 0
        %998 = vmatpush1.bf16.msra.mxu0 0
        %999 = vmatprep.subr.bf16.mxu0 0
        %1000 = vmatpush1.bf16.msra.mxu0 0
        %1001 = vmatprep.subr.bf16.mxu0 0
        %1002 = vmatpush1.bf16.msra.mxu0 0
        %1003 = vmatprep.subr.bf16.mxu0 0
        %1004 = vmatpush1.bf16.msra.mxu0 0
        %1005 = vmatprep.subr.bf16.mxu0 0
        %1006 = vmatpush1.bf16.msra.mxu0 0
        %1007 = vmatprep.subr.bf16.mxu0 0
        %1008 = vmatpush1.bf16.msra.mxu0 0
        %1009 = vmatprep.subr.bf16.mxu0 0
        %1010 = vmatpush1.bf16.msra.mxu0 0
        %1011 = vmatprep.subr.bf16.mxu0 0
        %1012 = vmatpush1.bf16.msra.mxu0 %v988
        %1013 = vmatprep.subr.bf16.mxu0 0
        %1014 = vmatpush2.bf16.msra.mxu0 0
        %1015 = vmatprep.subr.bf16.mxu0 0
        %1016 = vmatpush2.bf16.msra.mxu0 0
        %1017 = vmatprep.subr.bf16.mxu0 0
        %1018 = vmatpush2.bf16.msra.mxu0 0
        %1019 = vmatprep.subr.bf16.mxu0 0
        %1020 = vmatpush2.bf16.msra.mxu0 0
        %1021 = vmatprep.subr.bf16.mxu0 0
        %1022 = vmatpush2.bf16.msra.mxu0 0
        %1023 = vmatprep.subr.bf16.mxu0 0
        %1024 = vmatpush2.bf16.msra.mxu0 0
        %1025 = vmatprep.subr.bf16.mxu0 0
        %1026 = vmatpush2.bf16.msra.mxu0 0
        %1027 = vmatprep.subr.bf16.mxu0 0
        %1028 = vmatpush2.bf16.msra.mxu0 0
        %1029 = vmatprep.mubr.bf16.mxu0 0
        %1030 = vmatmul.mubr.bf16.gmra.mxu0 %v992
        %v1031 = vpop.f32.mrf.mxu0
        %v1032 = vadd.f32 %v957, %v1031
        %v1033 = vpop.f32.mrf.mxu0
        %v1034 = vpop.f32.mrf.mxu0
        %v1035 = vadd.f32 %v962, %v1034
        %v1036 = vpop.f32.mrf.mxu0
        %1037 = vmatprep.mubr.bf16.mxu0 0
        %1038 = vmatmul.mubr.bf16.gmra.mxu0 %v995
        %v1039 = vpop.f32.mrf.mxu0
        %v1040 = vadd.f32 %v967, %v1039
        %v1041 = vpop.f32.mrf.mxu0
        %v1042 = vpop.f32.mrf.mxu0
        %v1043 = vadd.f32 %v972, %v1042
        %v1044 = vpop.f32.mrf.mxu0
        %1045 = vdwg.mxu0
        %v1046 = vpack.c.bf16 %v1035, %v1032
        %v1047 = vpack.c.bf16 %v1043, %v1040
        %v1050 = vunpack.c.l.b16 %v1046
        %v1051 = vunpack.c.h.b16 %v1046
        %v1052 = vunpack.c.l.b16 %v1047
        %v1053 = vunpack.c.h.b16 %v1047
        %v1054 = vpack.c.b16 %v1050, %v1050
        %v1055 = vpack.c.b16 %v1051, %v1051
        %v1056 = vpack.c.b16 %v1052, %v1052
        %v1057 = vpack.c.b16 %v1053, %v1053
        %1062 = vst [vmem:[%s527] sm:$0xf] %v1054
        %1063 = vst [vmem:[%s527 + $0x4] sm:$0xf] %v1055
        %1064 = vst [vmem:[%s527 + $0x8] sm:$0xf] %v1056
        %1065 = vst [vmem:[%s527 + $0xc] sm:$0xf] %v1057
        %s1066 = sand.u32 %s152, 1
        %s1067 = sand.u32 %s152, 1
        %s1068 = smul.addr %s1067, 16
        %s1069 = scalar_lea.vmem [#allocation3], %s1068
        %s1070 = sand.u32 %s180, 1
        %s1071 = sand.u32 %s180, 1
        %s1072 = smul.addr %s1071, 16
        %s1073 = scalar_lea.vmem [#allocation4], %s1072
        // Predicated region
        $region82: #{encoder_block_forward.2} parent=76 // pred_check
          %p1074 = pneg %p162
        $region83: #{encoder_block_forward.2} parent=76 // pred_check_branch
          %1076 = sbr.rel (%p1074) target = $region85
        $region84: #{encoder_block_forward.2} parent=76 // pred_region
          %s1077 = smul.addr %s22, 16
          %s1078 = sadd.s32 %s23, %s1077
          %s1079 = smul.addr %s1078, 4
          %s1080 = scalar_lea.vmem %s5, %s1079
          // Predicated region
          $region86: #{encoder_block_forward.2} parent=84 // pred_check
            _
          $region87: #{encoder_block_forward.2} parent=84 // pred_check_branch
            %1082 = sbr.rel (0) target = $region89
          $region88: #{encoder_block_forward.2} parent=84 // pred_region
            // Predicated region
            $region90: #{encoder_block_forward.2} parent=88 // pred_check
              _
            $region91: #{encoder_block_forward.2} parent=88 // pred_check_branch
              %1084 = sbr.rel target = $region93
            $region92: #{encoder_block_forward.2} parent=88 // pred_region
              // Predicated region
              $region105: #{encoder_block_forward.2} parent=92 // pred_check
                _
              $region106: #{encoder_block_forward.2} parent=92 // pred_check_branch
                %1106 = sbr.rel (0) target = $region108
              $region107: #{encoder_block_forward.2} parent=92 // pred_region
                loop: start=0, step=1, limit=1
                $region109: #{encoder_block_forward.2} parent=107 // loop_pre_header
                  _
                $region110: #{encoder_block_forward.2} parent=107 // loop_header
                  %s1108 = sphi 0, %s1112
                  %p1109 = scmp.ge.s32.totalorder %s1108, 1
                  %s1113 = sphi %s1069, %s1069
                  %s1114 = sphi %s1080, %s1080
                $region111: #{encoder_block_forward.2} parent=107 // loop_header_branch
                  %1111 = sbr.rel (%p1109) target = $region115
                $region112: #{encoder_block_forward.2} parent=107 // loop_body
                  _
                $region113: #{encoder_block_forward.2} parent=107 // loop_footer
                  %s1112 = sadd.s32 1, %s1108
                $region114: #{encoder_block_forward.2} parent=107 // loop_footer_branch
                  %1107 = sbr.rel target = $region110
                $region115: #{encoder_block_forward.2} parent=107 // loop_exit
                  _
                %s1116 = ssub.s32 16, 1
                loop: start=0, step=1, limit=1
                $region116: #{encoder_block_forward.2} parent=107 // loop_pre_header
                  _
                $region117: #{encoder_block_forward.2} parent=107 // loop_header
                  %s1118 = sphi 0, %s1122
                  %p1119 = scmp.ge.s32.totalorder %s1118, 1
                  %s1123 = sphi %s1069, %s1069
                  %s1124 = sphi %s1080, %s1080
                $region118: #{encoder_block_forward.2} parent=107 // loop_header_branch
                  %1121 = sbr.rel (%p1119) target = $region122
                $region119: #{encoder_block_forward.2} parent=107 // loop_body
                  %v1125 = vld [vmem:[%s1123] sm:%s1116]
                  %1126 = vst [vmem:[%s1124] sm:%s1116] %v1125
                  %v1127 = vld [vmem:[%s1123 + $0x4] sm:%s1116]
                  %1128 = vst [vmem:[%s1124 + $0x10] sm:%s1116] %v1127
                  %v1129 = vld [vmem:[%s1123 + $0x8] sm:%s1116]
                  %1130 = vst [vmem:[%s1124 + $0x20] sm:%s1116] %v1129
                  %v1131 = vld [vmem:[%s1123 + $0xc] sm:%s1116]
                  %1132 = vst [vmem:[%s1124 + $0x30] sm:%s1116] %v1131
                $region120: #{encoder_block_forward.2} parent=107 // loop_footer
                  %s1122 = sadd.s32 1, %s1118
                $region121: #{encoder_block_forward.2} parent=107 // loop_footer_branch
                  %1117 = sbr.rel target = $region117
                $region122: #{encoder_block_forward.2} parent=107 // loop_exit
                  _
              $region108: #{encoder_block_forward.2} parent=92 // pred_fallthru
                _
            $region93: #{encoder_block_forward.2} parent=88 // pred_fallthru
              _
            // Predicated region
            $region94: #{encoder_block_forward.2} parent=88 // pred_check
              _
            $region95: #{encoder_block_forward.2} parent=88 // pred_check_branch
              %1086 = sbr.rel (0) target = $region97
            $region96: #{encoder_block_forward.2} parent=88 // pred_region
              %s1088 = ssub.s32 16, 1
              loop: start=0, step=1, limit=1
              $region98: #{encoder_block_forward.2} parent=96 // loop_pre_header
                _
              $region99: #{encoder_block_forward.2} parent=96 // loop_header
                %s1090 = sphi 0, %s1094
                %p1091 = scmp.ge.s32.totalorder %s1090, 1
                %s1095 = sphi %s1069, %s1069
                %s1096 = sphi %s1080, %s1080
              $region100: #{encoder_block_forward.2} parent=96 // loop_header_branch
                %1093 = sbr.rel (%p1091) target = $region104
              $region101: #{encoder_block_forward.2} parent=96 // loop_body
                %v1097 = vld [vmem:[%s1095] sm:%s1088]
                %1098 = vst [vmem:[%s1096] sm:%s1088] %v1097
                %v1099 = vld [vmem:[%s1095 + $0x4] sm:%s1088]
                %1100 = vst [vmem:[%s1096 + $0x10] sm:%s1088] %v1099
                %v1101 = vld [vmem:[%s1095 + $0x8] sm:%s1088]
                %1102 = vst [vmem:[%s1096 + $0x20] sm:%s1088] %v1101
                %v1103 = vld [vmem:[%s1095 + $0xc] sm:%s1088]
                %1104 = vst [vmem:[%s1096 + $0x30] sm:%s1088] %v1103
              $region102: #{encoder_block_forward.2} parent=96 // loop_footer
                %s1094 = sadd.s32 1, %s1090
              $region103: #{encoder_block_forward.2} parent=96 // loop_footer_branch
                %1089 = sbr.rel target = $region99
              $region104: #{encoder_block_forward.2} parent=96 // loop_exit
                _
            $region97: #{encoder_block_forward.2} parent=88 // pred_fallthru
              _
          $region89: #{encoder_block_forward.2} parent=84 // pred_fallthru
            _
          %1133 = vnop
        $region85: #{encoder_block_forward.2} parent=76 // pred_fallthru
          _
        // Predicated region
        $region123: #{encoder_block_forward.2} parent=76 // pred_check
          %p1134 = pneg %p190
        $region124: #{encoder_block_forward.2} parent=76 // pred_check_branch
          %1136 = sbr.rel (%p1134) target = $region126
        $region125: #{encoder_block_forward.2} parent=76 // pred_region
          %s1137 = smul.addr %s22, 16
          %s1138 = sadd.s32 %s23, %s1137
          %s1139 = smul.addr %s1138, 4
          %s1140 = scalar_lea.vmem %s6, %s1139
          // Predicated region
          $region127: #{encoder_block_forward.2} parent=125 // pred_check
            _
          $region128: #{encoder_block_forward.2} parent=125 // pred_check_branch
            %1142 = sbr.rel (0) target = $region130
          $region129: #{encoder_block_forward.2} parent=125 // pred_region
            // Predicated region
            $region131: #{encoder_block_forward.2} parent=129 // pred_check
              _
            $region132: #{encoder_block_forward.2} parent=129 // pred_check_branch
              %1144 = sbr.rel target = $region134
            $region133: #{encoder_block_forward.2} parent=129 // pred_region
              // Predicated region
              $region146: #{encoder_block_forward.2} parent=133 // pred_check
                _
              $region147: #{encoder_block_forward.2} parent=133 // pred_check_branch
                %1166 = sbr.rel (0) target = $region149
              $region148: #{encoder_block_forward.2} parent=133 // pred_region
                loop: start=0, step=1, limit=1
                $region150: #{encoder_block_forward.2} parent=148 // loop_pre_header
                  _
                $region151: #{encoder_block_forward.2} parent=148 // loop_header
                  %s1168 = sphi 0, %s1172
                  %p1169 = scmp.ge.s32.totalorder %s1168, 1
                  %s1173 = sphi %s1073, %s1073
                  %s1174 = sphi %s1140, %s1140
                $region152: #{encoder_block_forward.2} parent=148 // loop_header_branch
                  %1171 = sbr.rel (%p1169) target = $region156
                $region153: #{encoder_block_forward.2} parent=148 // loop_body
                  _
                $region154: #{encoder_block_forward.2} parent=148 // loop_footer
                  %s1172 = sadd.s32 1, %s1168
                $region155: #{encoder_block_forward.2} parent=148 // loop_footer_branch
                  %1167 = sbr.rel target = $region151
                $region156: #{encoder_block_forward.2} parent=148 // loop_exit
                  _
                %s1176 = ssub.s32 16, 1
                loop: start=0, step=1, limit=1
                $region157: #{encoder_block_forward.2} parent=148 // loop_pre_header
                  _
                $region158: #{encoder_block_forward.2} parent=148 // loop_header
                  %s1178 = sphi 0, %s1182
                  %p1179 = scmp.ge.s32.totalorder %s1178, 1
                  %s1183 = sphi %s1073, %s1073
                  %s1184 = sphi %s1140, %s1140
                $region159: #{encoder_block_forward.2} parent=148 // loop_header_branch
                  %1181 = sbr.rel (%p1179) target = $region163
                $region160: #{encoder_block_forward.2} parent=148 // loop_body
                  %v1185 = vld [vmem:[%s1183] sm:%s1176]
                  %1186 = vst [vmem:[%s1184] sm:%s1176] %v1185
                  %v1187 = vld [vmem:[%s1183 + $0x4] sm:%s1176]
                  %1188 = vst [vmem:[%s1184 + $0x10] sm:%s1176] %v1187
                  %v1189 = vld [vmem:[%s1183 + $0x8] sm:%s1176]
                  %1190 = vst [vmem:[%s1184 + $0x20] sm:%s1176] %v1189
                  %v1191 = vld [vmem:[%s1183 + $0xc] sm:%s1176]
                  %1192 = vst [vmem:[%s1184 + $0x30] sm:%s1176] %v1191
                $region161: #{encoder_block_forward.2} parent=148 // loop_footer
                  %s1182 = sadd.s32 1, %s1178
                $region162: #{encoder_block_forward.2} parent=148 // loop_footer_branch
                  %1177 = sbr.rel target = $region158
                $region163: #{encoder_block_forward.2} parent=148 // loop_exit
                  _
              $region149: #{encoder_block_forward.2} parent=133 // pred_fallthru
                _
            $region134: #{encoder_block_forward.2} parent=129 // pred_fallthru
              _
            // Predicated region
            $region135: #{encoder_block_forward.2} parent=129 // pred_check
              _
            $region136: #{encoder_block_forward.2} parent=129 // pred_check_branch
              %1146 = sbr.rel (0) target = $region138
            $region137: #{encoder_block_forward.2} parent=129 // pred_region
              %s1148 = ssub.s32 16, 1
              loop: start=0, step=1, limit=1
              $region139: #{encoder_block_forward.2} parent=137 // loop_pre_header
                _
              $region140: #{encoder_block_forward.2} parent=137 // loop_header
                %s1150 = sphi 0, %s1154
                %p1151 = scmp.ge.s32.totalorder %s1150, 1
                %s1155 = sphi %s1073, %s1073
                %s1156 = sphi %s1140, %s1140
              $region141: #{encoder_block_forward.2} parent=137 // loop_header_branch
                %1153 = sbr.rel (%p1151) target = $region145
              $region142: #{encoder_block_forward.2} parent=137 // loop_body
                %v1157 = vld [vmem:[%s1155] sm:%s1148]
                %1158 = vst [vmem:[%s1156] sm:%s1148] %v1157
                %v1159 = vld [vmem:[%s1155 + $0x4] sm:%s1148]
                %1160 = vst [vmem:[%s1156 + $0x10] sm:%s1148] %v1159
                %v1161 = vld [vmem:[%s1155 + $0x8] sm:%s1148]
                %1162 = vst [vmem:[%s1156 + $0x20] sm:%s1148] %v1161
                %v1163 = vld [vmem:[%s1155 + $0xc] sm:%s1148]
                %1164 = vst [vmem:[%s1156 + $0x30] sm:%s1148] %v1163
              $region143: #{encoder_block_forward.2} parent=137 // loop_footer
                %s1154 = sadd.s32 1, %s1150
              $region144: #{encoder_block_forward.2} parent=137 // loop_footer_branch
                %1149 = sbr.rel target = $region140
              $region145: #{encoder_block_forward.2} parent=137 // loop_exit
                _
            $region138: #{encoder_block_forward.2} parent=129 // pred_fallthru
              _
          $region130: #{encoder_block_forward.2} parent=125 // pred_fallthru
            _
          %1193 = vnop
        $region126: #{encoder_block_forward.2} parent=76 // pred_fallthru
          _
      $region77: #{encoder_block_forward.2} parent=5 // pred_fallthru
        _
      %p1194 = scmp.le.s32.totalorder 2, %s13
      // Predicated region
      $region164: #{encoder_block_forward.2} parent=5 // pred_check
        %p1195 = pneg %p1194
      $region165: #{encoder_block_forward.2} parent=5 // pred_check_branch
        %1197 = sbr.rel (%p1195) target = $region167
      $region166: #{encoder_block_forward.2} parent=5 // pred_region
        %s1198 = ssub.s32 %s13, 2
        // Predicated region
        $region168: #{encoder_block_forward.2} parent=166 // pred_check
          %p1199 = pneg %p168
        $region169: #{encoder_block_forward.2} parent=166 // pred_check_branch
          %1201 = sbr.rel (%p1199) target = $region171
        $region170: #{encoder_block_forward.2} parent=166 // pred_region
          %s1202 = sand.u32 %s153, 1
          %s1203 = sand.u32 %s153, 1
          %s1204 = smul.addr %s1203, 16
          %s1205 = scalar_lea.vmem [#allocation3], %s1204
        $region171: #{encoder_block_forward.2} parent=166 // pred_fallthru
          _
        // Predicated region
        $region172: #{encoder_block_forward.2} parent=166 // pred_check
          %p1206 = pneg %p196
        $region173: #{encoder_block_forward.2} parent=166 // pred_check_branch
          %1208 = sbr.rel (%p1206) target = $region175
        $region174: #{encoder_block_forward.2} parent=166 // pred_region
          %s1209 = sand.u32 %s181, 1
          %s1210 = sand.u32 %s181, 1
          %s1211 = smul.addr %s1210, 16
          %s1212 = scalar_lea.vmem [#allocation4], %s1211
        $region175: #{encoder_block_forward.2} parent=166 // pred_fallthru
          _
      $region167: #{encoder_block_forward.2} parent=5 // pred_fallthru
        _
    $region6: #{encoder_block_forward.2} parent=1 // loop_footer
      %s17 = sadd.s32 1, %s13
    $region7: #{encoder_block_forward.2} parent=1 // loop_footer_branch
      %12 = sbr.rel target = $region3
    $region8: #{encoder_block_forward.2} parent=1 // loop_exit
      _

// kernel: encoder_block_forward.3
$region0: #{encoder_block_forward.3}
  #allocation0 [shape = 'u32[]', space=smem, size = 0x4, offset = 0x4, fixed_abs, tag = 'smem constant byte address 0x4 - core index']
  #allocation1 [shape = 'u32[144,128]{1,0:T(1,128)}', space=vmem, size = 0x12000, scoped, tag = 'internal scratch']
  %s0 = inlined_call_operand.vmem [shape: bf16[32,864], index: 0, kind: input, shape index: {}]
  %s1 = inlined_call_operand.vmem [shape: bf16[2,864,512], index: 1, kind: input, shape index: {}]
  %s2 = inlined_call_operand.vmem [shape: f32[32,1], index: 2, kind: input, shape index: {}]
  %s3 = inlined_call_operand.vmem [shape: bf16[2,32,512], index: 3, kind: input, shape index: {}]
  %s4 = inlined_call_operand.vmem [shape: bf16[2,32,512], index: 4, kind: output, shape index: {}]
  %s5 = sld [smem:[#allocation0]]
  $region168: #{encoder_block_forward.3} parent=0
    _
  %s7 = ssub.s32 1, %s5
  %s8 = scalar_select 0, %s7, %s5
  $region1: #{encoder_block_forward.3} parent=0
    #allocation2 [shape = 'u8[442368]{0}', space=vmem, size = 0x6c000, scoped, tag = 'input window, operand 1']
    #allocation3 [shape = 'u8[16384]{0}', space=vmem, size = 0x4000, scoped, tag = 'input window, operand 3']
    #allocation4 [shape = 'u8[16384]{0}', space=vmem, size = 0x4000, scoped, tag = 'output window, operand 0']
    loop: start=0, step=1, limit=10
    $region2: #{encoder_block_forward.3} parent=1 // loop_pre_header
      _
    $region3: #{encoder_block_forward.3} parent=1 // loop_header
      %s10 = sphi 0, %s14
      %p11 = scmp.ge.s32.totalorder %s10, 10
      %s17 = sphi 0, %s29
      %s18 = sphi 0, %s25
      %s19 = sphi 0, %s17
      %s20 = sphi 0, %s18
      %s21 = sphi 0, %s19
      %s22 = sphi 0, %s20
      %s30 = sphi 0, %s30
      %s32 = sphi 0, %s30
      %s33 = sphi 0, %s32
      %s47 = sphi 0, %s33
      %s55 = sphi 0, %s57
      %s58 = sphi 0, %s55
      %s59 = sphi 0, %s58
      %s75 = sphi 0, %s59
      %s79 = sphi 0, %s79
      %s81 = sphi 0, %s79
      %s82 = sphi 0, %s81
      %s96 = sphi 0, %s82
      %s104 = sphi 0, %s106
      %s107 = sphi 0, %s104
      %s108 = sphi 0, %s107
      %s124 = sphi 0, %s108
      %s132 = sphi 0, %s134
      %s135 = sphi 0, %s132
      %s136 = sphi 0, %s135
      %s152 = sphi 0, %s136
    $region4: #{encoder_block_forward.3} parent=1 // loop_header_branch
      %13 = sbr.rel (%p11) target = $region8
    $region5: #{encoder_block_forward.3} parent=1 // loop_body
      %s15 = ssub.s32 %s10, 1
      %s16 = ssub.s32 %s10, 2
      %s23 = sadd.s32 1, %s18
      %p24 = scmp.ge.s32.totalorder %s23, 4
      %s25 = scalar_select %p24, 0, %s23
      %s26 = sadd.s32 1, %s17
      %s27 = scalar_select %p24, %s26, %s17
      %p28 = scmp.ge.s32.totalorder %s27, 2
      %s29 = scalar_select %p28, 0, %s27
      %s31 = sadd.s32 %s30, 1
      %p34 = scmp.eq.s32.totalorder %s10, 7
      %p35 = scmp.ne.s32.totalorder %s30, %s32
      %p36 = scmp.eq.s32.totalorder %s10, 0
      %p37 = por %p35, %p36
      %p38 = scmp.ne.s32.totalorder %s30, %s32
      %p39 = scmp.eq.s32.totalorder %s15, 7
      %p40 = por %p38, %p39
      %p41 = scmp.ne.s32.totalorder %s32, %s33
      %p42 = scmp.eq.s32.totalorder %s15, 0
      %p43 = por %p41, %p42
      %p44 = scmp.ne.s32.totalorder %s32, %s33
      %p45 = scmp.eq.s32.totalorder %s16, 7
      %p46 = por %p44, %p45
      %p48 = scmp.ne.s32.totalorder %s33, %s47
      %p49 = scmp.eq.s32.totalorder %s16, 0
      %p50 = por %p48, %p49
      %s51 = ssub.s32 %s17, %s29
      %s52 = ssub.s32 %s18, %s25
      %s53 = sor.u32 %s51, %s52
      %p54 = scmp.eq.s32.totalorder %s53, 0
      %s56 = sadd.s32 %s55, 1
      %s57 = scalar_select %p54, %s55, %s56
      %p60 = pneg %p54
      %p61 = scmp.eq.s32.totalorder %s10, 7
      %p62 = por %p60, %p61
      %p63 = scmp.ne.s32.totalorder %s55, %s58
      %p64 = scmp.eq.s32.totalorder %s10, 0
      %p65 = por %p63, %p64
      %p66 = scmp.ne.s32.totalorder %s55, %s58
      %p67 = scmp.eq.s32.totalorder %s15, 7
      %p68 = por %p66, %p67
      %p69 = scmp.ne.s32.totalorder %s58, %s59
      %p70 = scmp.eq.s32.totalorder %s15, 0
      %p71 = por %p69, %p70
      %p72 = scmp.ne.s32.totalorder %s58, %s59
      %p73 = scmp.eq.s32.totalorder %s16, 7
      %p74 = por %p72, %p73
      %p76 = scmp.ne.s32.totalorder %s59, %s75
      %p77 = scmp.eq.s32.totalorder %s16, 0
      %p78 = por %p76, %p77
      %s80 = sadd.s32 %s79, 1
      %p83 = scmp.eq.s32.totalorder %s10, 7
      %p84 = scmp.ne.s32.totalorder %s79, %s81
      %p85 = scmp.eq.s32.totalorder %s10, 0
      %p86 = por %p84, %p85
      %p87 = scmp.ne.s32.totalorder %s79, %s81
      %p88 = scmp.eq.s32.totalorder %s15, 7
      %p89 = por %p87, %p88
      %p90 = scmp.ne.s32.totalorder %s81, %s82
      %p91 = scmp.eq.s32.totalorder %s15, 0
      %p92 = por %p90, %p91
      %p93 = scmp.ne.s32.totalorder %s81, %s82
      %p94 = scmp.eq.s32.totalorder %s16, 7
      %p95 = por %p93, %p94
      %p97 = scmp.ne.s32.totalorder %s82, %s96
      %p98 = scmp.eq.s32.totalorder %s16, 0
      %p99 = por %p97, %p98
      %s100 = ssub.s32 %s17, %s29
      %s101 = ssub.s32 %s18, %s25
      %s102 = sor.u32 %s100, %s101
      %p103 = scmp.eq.s32.totalorder %s102, 0
      %s105 = sadd.s32 %s104, 1
      %s106 = scalar_select %p103, %s104, %s105
      %p109 = pneg %p103
      %p110 = scmp.eq.s32.totalorder %s10, 7
      %p111 = por %p109, %p110
      %p112 = scmp.ne.s32.totalorder %s104, %s107
      %p113 = scmp.eq.s32.totalorder %s10, 0
      %p114 = por %p112, %p113
      %p115 = scmp.ne.s32.totalorder %s104, %s107
      %p116 = scmp.eq.s32.totalorder %s15, 7
      %p117 = por %p115, %p116
      %p118 = scmp.ne.s32.totalorder %s107, %s108
      %p119 = scmp.eq.s32.totalorder %s15, 0
      %p120 = por %p118, %p119
      %p121 = scmp.ne.s32.totalorder %s107, %s108
      %p122 = scmp.eq.s32.totalorder %s16, 7
      %p123 = por %p121, %p122
      %p125 = scmp.ne.s32.totalorder %s108, %s124
      %p126 = scmp.eq.s32.totalorder %s16, 0
      %p127 = por %p125, %p126
      %s128 = ssub.s32 %s17, %s29
      %s129 = ssub.s32 %s18, %s25
      %s130 = sor.u32 %s128, %s129
      %p131 = scmp.eq.s32.totalorder %s130, 0
      %s133 = sadd.s32 %s132, 1
      %s134 = scalar_select %p131, %s132, %s133
      %p137 = pneg %p131
      %p138 = scmp.eq.s32.totalorder %s10, 7
      %p139 = por %p137, %p138
      %p140 = scmp.ne.s32.totalorder %s132, %s135
      %p141 = scmp.eq.s32.totalorder %s10, 0
      %p142 = por %p140, %p141
      %p143 = scmp.ne.s32.totalorder %s132, %s135
      %p144 = scmp.eq.s32.totalorder %s15, 7
      %p145 = por %p143, %p144
      %p146 = scmp.ne.s32.totalorder %s135, %s136
      %p147 = scmp.eq.s32.totalorder %s15, 0
      %p148 = por %p146, %p147
      %p149 = scmp.ne.s32.totalorder %s135, %s136
      %p150 = scmp.eq.s32.totalorder %s16, 7
      %p151 = por %p149, %p150
      %p153 = scmp.ne.s32.totalorder %s136, %s152
      %p154 = scmp.eq.s32.totalorder %s16, 0
      %p155 = por %p153, %p154
      %p156 = scmp.le.s32.totalorder 1, %s10
      %p157 = scmp.lt.s32.totalorder %s10, 9
      %p158 = pnand %p156, %p157
      %p159 = pneg %p158
      // Predicated region
      $region9: #{encoder_block_forward.3} parent=5 // pred_check
        _
      $region10: #{encoder_block_forward.3} parent=5 // pred_check_branch
        %161 = sbr.rel (%p158) target = $region12
      $region11: #{encoder_block_forward.3} parent=5 // pred_region
        %s162 = ssub.s32 %s10, 1
        // Predicated region
        $region13: #{encoder_block_forward.3} parent=11 // pred_check
          %p163 = pneg %p43
        $region14: #{encoder_block_forward.3} parent=11 // pred_check_branch
          %165 = sbr.rel (%p163) target = $region16
        $region15: #{encoder_block_forward.3} parent=11 // pred_region
          _
        $region16: #{encoder_block_forward.3} parent=11 // pred_fallthru
          _
        // Predicated region
        $region17: #{encoder_block_forward.3} parent=11 // pred_check
          %p166 = pneg %p92
        $region18: #{encoder_block_forward.3} parent=11 // pred_check_branch
          %168 = sbr.rel (%p166) target = $region20
        $region19: #{encoder_block_forward.3} parent=11 // pred_region
          _
        $region20: #{encoder_block_forward.3} parent=11 // pred_fallthru
          _
      $region12: #{encoder_block_forward.3} parent=5 // pred_fallthru
        _
      %p169 = scmp.lt.s32.totalorder %s10, 8
      // Predicated region
      $region21: #{encoder_block_forward.3} parent=5 // pred_check
        %p170 = pneg %p169
      $region22: #{encoder_block_forward.3} parent=5 // pred_check_branch
        %172 = sbr.rel (%p170) target = $region24
      $region23: #{encoder_block_forward.3} parent=5 // pred_region
        // Predicated region
        $region25: #{encoder_block_forward.3} parent=23 // pred_check
          %p173 = pneg %p65
        $region26: #{encoder_block_forward.3} parent=23 // pred_check_branch
          %175 = sbr.rel (%p173) target = $region28
        $region27: #{encoder_block_forward.3} parent=23 // pred_region
          %s176 = sand.u32 %s55, 1
          %s177 = sand.u32 %s55, 1
          %s178 = smul.addr %s177, 432
          %s179 = scalar_lea.vmem [#allocation2], %s178
          %s180 = smul.addr %s17, 432
          %s181 = sadd.s32 %s18, %s180
          %s182 = smul.addr %s181, 4
          %s183 = scalar_lea.vmem %s1, %s182
          // Predicated region
          $region29: #{encoder_block_forward.3} parent=27 // pred_check
            _
          $region30: #{encoder_block_forward.3} parent=27 // pred_check_branch
            %185 = sbr.rel (0) target = $region32
          $region31: #{encoder_block_forward.3} parent=27 // pred_region
            // Predicated region
            $region33: #{encoder_block_forward.3} parent=31 // pred_check
              _
            $region34: #{encoder_block_forward.3} parent=31 // pred_check_branch
              %187 = sbr.rel target = $region36
            $region35: #{encoder_block_forward.3} parent=31 // pred_region
              // Predicated region
              $region48: #{encoder_block_forward.3} parent=35 // pred_check
                _
              $region49: #{encoder_block_forward.3} parent=35 // pred_check_branch
                %417 = sbr.rel (0) target = $region51
              $region50: #{encoder_block_forward.3} parent=35 // pred_region
                loop: start=0, step=1, limit=1
                $region52: #{encoder_block_forward.3} parent=50 // loop_pre_header
                  _
                $region53: #{encoder_block_forward.3} parent=50 // loop_header
                  %s419 = sphi 0, %s423
                  %p420 = scmp.ge.s32.totalorder %s419, 1
                  %s424 = sphi %s183, %s183
                  %s425 = sphi %s179, %s179
                $region54: #{encoder_block_forward.3} parent=50 // loop_header_branch
                  %422 = sbr.rel (%p420) target = $region58
                $region55: #{encoder_block_forward.3} parent=50 // loop_body
                  _
                $region56: #{encoder_block_forward.3} parent=50 // loop_footer
                  %s423 = sadd.s32 1, %s419
                $region57: #{encoder_block_forward.3} parent=50 // loop_footer_branch
                  %418 = sbr.rel target = $region53
                $region58: #{encoder_block_forward.3} parent=50 // loop_exit
                  _
                %s427 = ssub.s32 16, 1
                loop: start=0, step=1, limit=1
                $region59: #{encoder_block_forward.3} parent=50 // loop_pre_header
                  _
                $region60: #{encoder_block_forward.3} parent=50 // loop_header
                  %s429 = sphi 0, %s433
                  %p430 = scmp.ge.s32.totalorder %s429, 1
                  %s434 = sphi %s183, %s183
                  %s435 = sphi %s179, %s179
                $region61: #{encoder_block_forward.3} parent=50 // loop_header_branch
                  %432 = sbr.rel (%p430) target = $region65
                $region62: #{encoder_block_forward.3} parent=50 // loop_body
                  %v436 = vld [vmem:[%s434] sm:%s427]
                  %437 = vst [vmem:[%s435] sm:%s427] %v436
                  %v438 = vld [vmem:[%s434 + $0x10] sm:%s427]
                  %439 = vst [vmem:[%s435 + $0x4] sm:%s427] %v438
                  %v440 = vld [vmem:[%s434 + $0x20] sm:%s427]
                  %441 = vst [vmem:[%s435 + $0x8] sm:%s427] %v440
                  %v442 = vld [vmem:[%s434 + $0x30] sm:%s427]
                  %443 = vst [vmem:[%s435 + $0xc] sm:%s427] %v442
                  %v444 = vld [vmem:[%s434 + $0x40] sm:%s427]
                  %445 = vst [vmem:[%s435 + $0x10] sm:%s427] %v444
                  %v446 = vld [vmem:[%s434 + $0x50] sm:%s427]
                  %447 = vst [vmem:[%s435 + $0x14] sm:%s427] %v446
                  %v448 = vld [vmem:[%s434 + $0x60] sm:%s427]
                  %449 = vst [vmem:[%s435 + $0x18] sm:%s427] %v448
                  %v450 = vld [vmem:[%s434 + $0x70] sm:%s427]
                  %451 = vst [vmem:[%s435 + $0x1c] sm:%s427] %v450
                  %v452 = vld [vmem:[%s434 + $0x80] sm:%s427]
                  %453 = vst [vmem:[%s435 + $0x20] sm:%s427] %v452
                  %v454 = vld [vmem:[%s434 + $0x90] sm:%s427]
                  %455 = vst [vmem:[%s435 + $0x24] sm:%s427] %v454
                  %v456 = vld [vmem:[%s434 + $0xa0] sm:%s427]
                  %457 = vst [vmem:[%s435 + $0x28] sm:%s427] %v456
                  %v458 = vld [vmem:[%s434 + $0xb0] sm:%s427]
                  %459 = vst [vmem:[%s435 + $0x2c] sm:%s427] %v458
                  %v460 = vld [vmem:[%s434 + $0xc0] sm:%s427]
                  %461 = vst [vmem:[%s435 + $0x30] sm:%s427] %v460
                  %v462 = vld [vmem:[%s434 + $0xd0] sm:%s427]
                  %463 = vst [vmem:[%s435 + $0x34] sm:%s427] %v462
                  %v464 = vld [vmem:[%s434 + $0xe0] sm:%s427]
                  %465 = vst [vmem:[%s435 + $0x38] sm:%s427] %v464
                  %v466 = vld [vmem:[%s434 + $0xf0] sm:%s427]
                  %467 = vst [vmem:[%s435 + $0x3c] sm:%s427] %v466
                  %v468 = vld [vmem:[%s434 + $0x100] sm:%s427]
                  %469 = vst [vmem:[%s435 + $0x40] sm:%s427] %v468
                  %v470 = vld [vmem:[%s434 + $0x110] sm:%s427]
                  %471 = vst [vmem:[%s435 + $0x44] sm:%s427] %v470
                  %v472 = vld [vmem:[%s434 + $0x120] sm:%s427]
                  %473 = vst [vmem:[%s435 + $0x48] sm:%s427] %v472
                  %v474 = vld [vmem:[%s434 + $0x130] sm:%s427]
                  %475 = vst [vmem:[%s435 + $0x4c] sm:%s427] %v474
                  %v476 = vld [vmem:[%s434 + $0x140] sm:%s427]
                  %477 = vst [vmem:[%s435 + $0x50] sm:%s427] %v476
                  %v478 = vld [vmem:[%s434 + $0x150] sm:%s427]
                  %479 = vst [vmem:[%s435 + $0x54] sm:%s427] %v478
                  %v480 = vld [vmem:[%s434 + $0x160] sm:%s427]
                  %481 = vst [vmem:[%s435 + $0x58] sm:%s427] %v480
                  %v482 = vld [vmem:[%s434 + $0x170] sm:%s427]
                  %483 = vst [vmem:[%s435 + $0x5c] sm:%s427] %v482
                  %v484 = vld [vmem:[%s434 + $0x180] sm:%s427]
                  %485 = vst [vmem:[%s435 + $0x60] sm:%s427] %v484
                  %v486 = vld [vmem:[%s434 + $0x190] sm:%s427]
                  %487 = vst [vmem:[%s435 + $0x64] sm:%s427] %v486
                  %v488 = vld [vmem:[%s434 + $0x1a0] sm:%s427]
                  %489 = vst [vmem:[%s435 + $0x68] sm:%s427] %v488
                  %v490 = vld [vmem:[%s434 + $0x1b0] sm:%s427]
                  %491 = vst [vmem:[%s435 + $0x6c] sm:%s427] %v490
                  %v492 = vld [vmem:[%s434 + $0x1c0] sm:%s427]
                  %493 = vst [vmem:[%s435 + $0x70] sm:%s427] %v492
                  %v494 = vld [vmem:[%s434 + $0x1d0] sm:%s427]
                  %495 = vst [vmem:[%s435 + $0x74] sm:%s427] %v494
                  %v496 = vld [vmem:[%s434 + $0x1e0] sm:%s427]
                  %497 = vst [vmem:[%s435 + $0x78] sm:%s427] %v496
                  %v498 = vld [vmem:[%s434 + $0x1f0] sm:%s427]
                  %499 = vst [vmem:[%s435 + $0x7c] sm:%s427] %v498
                  %v500 = vld [vmem:[%s434 + $0x200] sm:%s427]
                  %501 = vst [vmem:[%s435 + $0x80] sm:%s427] %v500
                  %v502 = vld [vmem:[%s434 + $0x210] sm:%s427]
                  %503 = vst [vmem:[%s435 + $0x84] sm:%s427] %v502
                  %v504 = vld [vmem:[%s434 + $0x220] sm:%s427]
                  %505 = vst [vmem:[%s435 + $0x88] sm:%s427] %v504
                  %v506 = vld [vmem:[%s434 + $0x230] sm:%s427]
                  %507 = vst [vmem:[%s435 + $0x8c] sm:%s427] %v506
                  %v508 = vld [vmem:[%s434 + $0x240] sm:%s427]
                  %509 = vst [vmem:[%s435 + $0x90] sm:%s427] %v508
                  %v510 = vld [vmem:[%s434 + $0x250] sm:%s427]
                  %511 = vst [vmem:[%s435 + $0x94] sm:%s427] %v510
                  %v512 = vld [vmem:[%s434 + $0x260] sm:%s427]
                  %513 = vst [vmem:[%s435 + $0x98] sm:%s427] %v512
                  %v514 = vld [vmem:[%s434 + $0x270] sm:%s427]
                  %515 = vst [vmem:[%s435 + $0x9c] sm:%s427] %v514
                  %v516 = vld [vmem:[%s434 + $0x280] sm:%s427]
                  %517 = vst [vmem:[%s435 + $0xa0] sm:%s427] %v516
                  %v518 = vld [vmem:[%s434 + $0x290] sm:%s427]
                  %519 = vst [vmem:[%s435 + $0xa4] sm:%s427] %v518
                  %v520 = vld [vmem:[%s434 + $0x2a0] sm:%s427]
                  %521 = vst [vmem:[%s435 + $0xa8] sm:%s427] %v520
                  %v522 = vld [vmem:[%s434 + $0x2b0] sm:%s427]
                  %523 = vst [vmem:[%s435 + $0xac] sm:%s427] %v522
                  %v524 = vld [vmem:[%s434 + $0x2c0] sm:%s427]
                  %525 = vst [vmem:[%s435 + $0xb0] sm:%s427] %v524
                  %v526 = vld [vmem:[%s434 + $0x2d0] sm:%s427]
                  %527 = vst [vmem:[%s435 + $0xb4] sm:%s427] %v526
                  %v528 = vld [vmem:[%s434 + $0x2e0] sm:%s427]
                  %529 = vst [vmem:[%s435 + $0xb8] sm:%s427] %v528
                  %v530 = vld [vmem:[%s434 + $0x2f0] sm:%s427]
                  %531 = vst [vmem:[%s435 + $0xbc] sm:%s427] %v530
                  %v532 = vld [vmem:[%s434 + $0x300] sm:%s427]
                  %533 = vst [vmem:[%s435 + $0xc0] sm:%s427] %v532
                  %v534 = vld [vmem:[%s434 + $0x310] sm:%s427]
                  %535 = vst [vmem:[%s435 + $0xc4] sm:%s427] %v534
                  %v536 = vld [vmem:[%s434 + $0x320] sm:%s427]
                  %537 = vst [vmem:[%s435 + $0xc8] sm:%s427] %v536
                  %v538 = vld [vmem:[%s434 + $0x330] sm:%s427]
                  %539 = vst [vmem:[%s435 + $0xcc] sm:%s427] %v538
                  %v540 = vld [vmem:[%s434 + $0x340] sm:%s427]
                  %541 = vst [vmem:[%s435 + $0xd0] sm:%s427] %v540
                  %v542 = vld [vmem:[%s434 + $0x350] sm:%s427]
                  %543 = vst [vmem:[%s435 + $0xd4] sm:%s427] %v542
                  %v544 = vld [vmem:[%s434 + $0x360] sm:%s427]
                  %545 = vst [vmem:[%s435 + $0xd8] sm:%s427] %v544
                  %v546 = vld [vmem:[%s434 + $0x370] sm:%s427]
                  %547 = vst [vmem:[%s435 + $0xdc] sm:%s427] %v546
                  %v548 = vld [vmem:[%s434 + $0x380] sm:%s427]
                  %549 = vst [vmem:[%s435 + $0xe0] sm:%s427] %v548
                  %v550 = vld [vmem:[%s434 + $0x390] sm:%s427]
                  %551 = vst [vmem:[%s435 + $0xe4] sm:%s427] %v550
                  %v552 = vld [vmem:[%s434 + $0x3a0] sm:%s427]
                  %553 = vst [vmem:[%s435 + $0xe8] sm:%s427] %v552
                  %v554 = vld [vmem:[%s434 + $0x3b0] sm:%s427]
                  %555 = vst [vmem:[%s435 + $0xec] sm:%s427] %v554
                  %v556 = vld [vmem:[%s434 + $0x3c0] sm:%s427]
                  %557 = vst [vmem:[%s435 + $0xf0] sm:%s427] %v556
                  %v558 = vld [vmem:[%s434 + $0x3d0] sm:%s427]
                  %559 = vst [vmem:[%s435 + $0xf4] sm:%s427] %v558
                  %v560 = vld [vmem:[%s434 + $0x3e0] sm:%s427]
                  %561 = vst [vmem:[%s435 + $0xf8] sm:%s427] %v560
                  %v562 = vld [vmem:[%s434 + $0x3f0] sm:%s427]
                  %563 = vst [vmem:[%s435 + $0xfc] sm:%s427] %v562
                  %v564 = vld [vmem:[%s434 + $0x400] sm:%s427]
                  %565 = vst [vmem:[%s435 + $0x100] sm:%s427] %v564
                  %v566 = vld [vmem:[%s434 + $0x410] sm:%s427]
                  %567 = vst [vmem:[%s435 + $0x104] sm:%s427] %v566
                  %v568 = vld [vmem:[%s434 + $0x420] sm:%s427]
                  %569 = vst [vmem:[%s435 + $0x108] sm:%s427] %v568
                  %v570 = vld [vmem:[%s434 + $0x430] sm:%s427]
                  %571 = vst [vmem:[%s435 + $0x10c] sm:%s427] %v570
                  %v572 = vld [vmem:[%s434 + $0x440] sm:%s427]
                  %573 = vst [vmem:[%s435 + $0x110] sm:%s427] %v572
                  %v574 = vld [vmem:[%s434 + $0x450] sm:%s427]
                  %575 = vst [vmem:[%s435 + $0x114] sm:%s427] %v574
                  %v576 = vld [vmem:[%s434 + $0x460] sm:%s427]
                  %577 = vst [vmem:[%s435 + $0x118] sm:%s427] %v576
                  %v578 = vld [vmem:[%s434 + $0x470] sm:%s427]
                  %579 = vst [vmem:[%s435 + $0x11c] sm:%s427] %v578
                  %v580 = vld [vmem:[%s434 + $0x480] sm:%s427]
                  %581 = vst [vmem:[%s435 + $0x120] sm:%s427] %v580
                  %v582 = vld [vmem:[%s434 + $0x490] sm:%s427]
                  %583 = vst [vmem:[%s435 + $0x124] sm:%s427] %v582
                  %v584 = vld [vmem:[%s434 + $0x4a0] sm:%s427]
                  %585 = vst [vmem:[%s435 + $0x128] sm:%s427] %v584
                  %v586 = vld [vmem:[%s434 + $0x4b0] sm:%s427]
                  %587 = vst [vmem:[%s435 + $0x12c] sm:%s427] %v586
                  %v588 = vld [vmem:[%s434 + $0x4c0] sm:%s427]
                  %589 = vst [vmem:[%s435 + $0x130] sm:%s427] %v588
                  %v590 = vld [vmem:[%s434 + $0x4d0] sm:%s427]
                  %591 = vst [vmem:[%s435 + $0x134] sm:%s427] %v590
                  %v592 = vld [vmem:[%s434 + $0x4e0] sm:%s427]
                  %593 = vst [vmem:[%s435 + $0x138] sm:%s427] %v592
                  %v594 = vld [vmem:[%s434 + $0x4f0] sm:%s427]
                  %595 = vst [vmem:[%s435 + $0x13c] sm:%s427] %v594
                  %v596 = vld [vmem:[%s434 + $0x500] sm:%s427]
                  %597 = vst [vmem:[%s435 + $0x140] sm:%s427] %v596
                  %v598 = vld [vmem:[%s434 + $0x510] sm:%s427]
                  %599 = vst [vmem:[%s435 + $0x144] sm:%s427] %v598
                  %v600 = vld [vmem:[%s434 + $0x520] sm:%s427]
                  %601 = vst [vmem:[%s435 + $0x148] sm:%s427] %v600
                  %v602 = vld [vmem:[%s434 + $0x530] sm:%s427]
                  %603 = vst [vmem:[%s435 + $0x14c] sm:%s427] %v602
                  %v604 = vld [vmem:[%s434 + $0x540] sm:%s427]
                  %605 = vst [vmem:[%s435 + $0x150] sm:%s427] %v604
                  %v606 = vld [vmem:[%s434 + $0x550] sm:%s427]
                  %607 = vst [vmem:[%s435 + $0x154] sm:%s427] %v606
                  %v608 = vld [vmem:[%s434 + $0x560] sm:%s427]
                  %609 = vst [vmem:[%s435 + $0x158] sm:%s427] %v608
                  %v610 = vld [vmem:[%s434 + $0x570] sm:%s427]
                  %611 = vst [vmem:[%s435 + $0x15c] sm:%s427] %v610
                  %v612 = vld [vmem:[%s434 + $0x580] sm:%s427]
                  %613 = vst [vmem:[%s435 + $0x160] sm:%s427] %v612
                  %v614 = vld [vmem:[%s434 + $0x590] sm:%s427]
                  %615 = vst [vmem:[%s435 + $0x164] sm:%s427] %v614
                  %v616 = vld [vmem:[%s434 + $0x5a0] sm:%s427]
                  %617 = vst [vmem:[%s435 + $0x168] sm:%s427] %v616
                  %v618 = vld [vmem:[%s434 + $0x5b0] sm:%s427]
                  %619 = vst [vmem:[%s435 + $0x16c] sm:%s427] %v618
                  %v620 = vld [vmem:[%s434 + $0x5c0] sm:%s427]
                  %621 = vst [vmem:[%s435 + $0x170] sm:%s427] %v620
                  %v622 = vld [vmem:[%s434 + $0x5d0] sm:%s427]
                  %623 = vst [vmem:[%s435 + $0x174] sm:%s427] %v622
                  %v624 = vld [vmem:[%s434 + $0x5e0] sm:%s427]
                  %625 = vst [vmem:[%s435 + $0x178] sm:%s427] %v624
                  %v626 = vld [vmem:[%s434 + $0x5f0] sm:%s427]
                  %627 = vst [vmem:[%s435 + $0x17c] sm:%s427] %v626
                  %v628 = vld [vmem:[%s434 + $0x600] sm:%s427]
                  %629 = vst [vmem:[%s435 + $0x180] sm:%s427] %v628
                  %v630 = vld [vmem:[%s434 + $0x610] sm:%s427]
                  %631 = vst [vmem:[%s435 + $0x184] sm:%s427] %v630
                  %v632 = vld [vmem:[%s434 + $0x620] sm:%s427]
                  %633 = vst [vmem:[%s435 + $0x188] sm:%s427] %v632
                  %v634 = vld [vmem:[%s434 + $0x630] sm:%s427]
                  %635 = vst [vmem:[%s435 + $0x18c] sm:%s427] %v634
                  %v636 = vld [vmem:[%s434 + $0x640] sm:%s427]
                  %637 = vst [vmem:[%s435 + $0x190] sm:%s427] %v636
                  %v638 = vld [vmem:[%s434 + $0x650] sm:%s427]
                  %639 = vst [vmem:[%s435 + $0x194] sm:%s427] %v638
                  %v640 = vld [vmem:[%s434 + $0x660] sm:%s427]
                  %641 = vst [vmem:[%s435 + $0x198] sm:%s427] %v640
                  %v642 = vld [vmem:[%s434 + $0x670] sm:%s427]
                  %643 = vst [vmem:[%s435 + $0x19c] sm:%s427] %v642
                  %v644 = vld [vmem:[%s434 + $0x680] sm:%s427]
                  %645 = vst [vmem:[%s435 + $0x1a0] sm:%s427] %v644
                  %v646 = vld [vmem:[%s434 + $0x690] sm:%s427]
                  %647 = vst [vmem:[%s435 + $0x1a4] sm:%s427] %v646
                  %v648 = vld [vmem:[%s434 + $0x6a0] sm:%s427]
                  %649 = vst [vmem:[%s435 + $0x1a8] sm:%s427] %v648
                  %v650 = vld [vmem:[%s434 + $0x6b0] sm:%s427]
                  %651 = vst [vmem:[%s435 + $0x1ac] sm:%s427] %v650
                $region63: #{encoder_block_forward.3} parent=50 // loop_footer
                  %s433 = sadd.s32 1, %s429
                $region64: #{encoder_block_forward.3} parent=50 // loop_footer_branch
                  %428 = sbr.rel target = $region60
                $region65: #{encoder_block_forward.3} parent=50 // loop_exit
                  _
              $region51: #{encoder_block_forward.3} parent=35 // pred_fallthru
                _
            $region36: #{encoder_block_forward.3} parent=31 // pred_fallthru
              _
            // Predicated region
            $region37: #{encoder_block_forward.3} parent=31 // pred_check
              _
            $region38: #{encoder_block_forward.3} parent=31 // pred_check_branch
              %189 = sbr.rel (0) target = $region40
            $region39: #{encoder_block_forward.3} parent=31 // pred_region
              %s191 = ssub.s32 16, 1
              loop: start=0, step=1, limit=1
              $region41: #{encoder_block_forward.3} parent=39 // loop_pre_header
                _
              $region42: #{encoder_block_forward.3} parent=39 // loop_header
                %s193 = sphi 0, %s197
                %p194 = scmp.ge.s32.totalorder %s193, 1
                %s198 = sphi %s183, %s183
                %s199 = sphi %s179, %s179
              $region43: #{encoder_block_forward.3} parent=39 // loop_header_branch
                %196 = sbr.rel (%p194) target = $region47
              $region44: #{encoder_block_forward.3} parent=39 // loop_body
                %v200 = vld [vmem:[%s198] sm:%s191]
                %201 = vst [vmem:[%s199] sm:%s191] %v200
                %v202 = vld [vmem:[%s198 + $0x10] sm:%s191]
                %203 = vst [vmem:[%s199 + $0x4] sm:%s191] %v202
                %v204 = vld [vmem:[%s198 + $0x20] sm:%s191]
                %205 = vst [vmem:[%s199 + $0x8] sm:%s191] %v204
                %v206 = vld [vmem:[%s198 + $0x30] sm:%s191]
                %207 = vst [vmem:[%s199 + $0xc] sm:%s191] %v206
                %v208 = vld [vmem:[%s198 + $0x40] sm:%s191]
                %209 = vst [vmem:[%s199 + $0x10] sm:%s191] %v208
                %v210 = vld [vmem:[%s198 + $0x50] sm:%s191]
                %211 = vst [vmem:[%s199 + $0x14] sm:%s191] %v210
                %v212 = vld [vmem:[%s198 + $0x60] sm:%s191]
                %213 = vst [vmem:[%s199 + $0x18] sm:%s191] %v212
                %v214 = vld [vmem:[%s198 + $0x70] sm:%s191]
                %215 = vst [vmem:[%s199 + $0x1c] sm:%s191] %v214
                %v216 = vld [vmem:[%s198 + $0x80] sm:%s191]
                %217 = vst [vmem:[%s199 + $0x20] sm:%s191] %v216
                %v218 = vld [vmem:[%s198 + $0x90] sm:%s191]
                %219 = vst [vmem:[%s199 + $0x24] sm:%s191] %v218
                %v220 = vld [vmem:[%s198 + $0xa0] sm:%s191]
                %221 = vst [vmem:[%s199 + $0x28] sm:%s191] %v220
                %v222 = vld [vmem:[%s198 + $0xb0] sm:%s191]
                %223 = vst [vmem:[%s199 + $0x2c] sm:%s191] %v222
                %v224 = vld [vmem:[%s198 + $0xc0] sm:%s191]
                %225 = vst [vmem:[%s199 + $0x30] sm:%s191] %v224
                %v226 = vld [vmem:[%s198 + $0xd0] sm:%s191]
                %227 = vst [vmem:[%s199 + $0x34] sm:%s191] %v226
                %v228 = vld [vmem:[%s198 + $0xe0] sm:%s191]
                %229 = vst [vmem:[%s199 + $0x38] sm:%s191] %v228
                %v230 = vld [vmem:[%s198 + $0xf0] sm:%s191]
                %231 = vst [vmem:[%s199 + $0x3c] sm:%s191] %v230
                %v232 = vld [vmem:[%s198 + $0x100] sm:%s191]
                %233 = vst [vmem:[%s199 + $0x40] sm:%s191] %v232
                %v234 = vld [vmem:[%s198 + $0x110] sm:%s191]
                %235 = vst [vmem:[%s199 + $0x44] sm:%s191] %v234
                %v236 = vld [vmem:[%s198 + $0x120] sm:%s191]
                %237 = vst [vmem:[%s199 + $0x48] sm:%s191] %v236
                %v238 = vld [vmem:[%s198 + $0x130] sm:%s191]
                %239 = vst [vmem:[%s199 + $0x4c] sm:%s191] %v238
                %v240 = vld [vmem:[%s198 + $0x140] sm:%s191]
                %241 = vst [vmem:[%s199 + $0x50] sm:%s191] %v240
                %v242 = vld [vmem:[%s198 + $0x150] sm:%s191]
                %243 = vst [vmem:[%s199 + $0x54] sm:%s191] %v242
                %v244 = vld [vmem:[%s198 + $0x160] sm:%s191]
                %245 = vst [vmem:[%s199 + $0x58] sm:%s191] %v244
                %v246 = vld [vmem:[%s198 + $0x170] sm:%s191]
                %247 = vst [vmem:[%s199 + $0x5c] sm:%s191] %v246
                %v248 = vld [vmem:[%s198 + $0x180] sm:%s191]
                %249 = vst [vmem:[%s199 + $0x60] sm:%s191] %v248
                %v250 = vld [vmem:[%s198 + $0x190] sm:%s191]
                %251 = vst [vmem:[%s199 + $0x64] sm:%s191] %v250
                %v252 = vld [vmem:[%s198 + $0x1a0] sm:%s191]
                %253 = vst [vmem:[%s199 + $0x68] sm:%s191] %v252
                %v254 = vld [vmem:[%s198 + $0x1b0] sm:%s191]
                %255 = vst [vmem:[%s199 + $0x6c] sm:%s191] %v254
                %v256 = vld [vmem:[%s198 + $0x1c0] sm:%s191]
                %257 = vst [vmem:[%s199 + $0x70] sm:%s191] %v256
                %v258 = vld [vmem:[%s198 + $0x1d0] sm:%s191]
                %259 = vst [vmem:[%s199 + $0x74] sm:%s191] %v258
                %v260 = vld [vmem:[%s198 + $0x1e0] sm:%s191]
                %261 = vst [vmem:[%s199 + $0x78] sm:%s191] %v260
                %v262 = vld [vmem:[%s198 + $0x1f0] sm:%s191]
                %263 = vst [vmem:[%s199 + $0x7c] sm:%s191] %v262
                %v264 = vld [vmem:[%s198 + $0x200] sm:%s191]
                %265 = vst [vmem:[%s199 + $0x80] sm:%s191] %v264
                %v266 = vld [vmem:[%s198 + $0x210] sm:%s191]
                %267 = vst [vmem:[%s199 + $0x84] sm:%s191] %v266
                %v268 = vld [vmem:[%s198 + $0x220] sm:%s191]
                %269 = vst [vmem:[%s199 + $0x88] sm:%s191] %v268
                %v270 = vld [vmem:[%s198 + $0x230] sm:%s191]
                %271 = vst [vmem:[%s199 + $0x8c] sm:%s191] %v270
                %v272 = vld [vmem:[%s198 + $0x240] sm:%s191]
                %273 = vst [vmem:[%s199 + $0x90] sm:%s191] %v272
                %v274 = vld [vmem:[%s198 + $0x250] sm:%s191]
                %275 = vst [vmem:[%s199 + $0x94] sm:%s191] %v274
                %v276 = vld [vmem:[%s198 + $0x260] sm:%s191]
                %277 = vst [vmem:[%s199 + $0x98] sm:%s191] %v276
                %v278 = vld [vmem:[%s198 + $0x270] sm:%s191]
                %279 = vst [vmem:[%s199 + $0x9c] sm:%s191] %v278
                %v280 = vld [vmem:[%s198 + $0x280] sm:%s191]
                %281 = vst [vmem:[%s199 + $0xa0] sm:%s191] %v280
                %v282 = vld [vmem:[%s198 + $0x290] sm:%s191]
                %283 = vst [vmem:[%s199 + $0xa4] sm:%s191] %v282
                %v284 = vld [vmem:[%s198 + $0x2a0] sm:%s191]
                %285 = vst [vmem:[%s199 + $0xa8] sm:%s191] %v284
                %v286 = vld [vmem:[%s198 + $0x2b0] sm:%s191]
                %287 = vst [vmem:[%s199 + $0xac] sm:%s191] %v286
                %v288 = vld [vmem:[%s198 + $0x2c0] sm:%s191]
                %289 = vst [vmem:[%s199 + $0xb0] sm:%s191] %v288
                %v290 = vld [vmem:[%s198 + $0x2d0] sm:%s191]
                %291 = vst [vmem:[%s199 + $0xb4] sm:%s191] %v290
                %v292 = vld [vmem:[%s198 + $0x2e0] sm:%s191]
                %293 = vst [vmem:[%s199 + $0xb8] sm:%s191] %v292
                %v294 = vld [vmem:[%s198 + $0x2f0] sm:%s191]
                %295 = vst [vmem:[%s199 + $0xbc] sm:%s191] %v294
                %v296 = vld [vmem:[%s198 + $0x300] sm:%s191]
                %297 = vst [vmem:[%s199 + $0xc0] sm:%s191] %v296
                %v298 = vld [vmem:[%s198 + $0x310] sm:%s191]
                %299 = vst [vmem:[%s199 + $0xc4] sm:%s191] %v298
                %v300 = vld [vmem:[%s198 + $0x320] sm:%s191]
                %301 = vst [vmem:[%s199 + $0xc8] sm:%s191] %v300
                %v302 = vld [vmem:[%s198 + $0x330] sm:%s191]
                %303 = vst [vmem:[%s199 + $0xcc] sm:%s191] %v302
                %v304 = vld [vmem:[%s198 + $0x340] sm:%s191]
                %305 = vst [vmem:[%s199 + $0xd0] sm:%s191] %v304
                %v306 = vld [vmem:[%s198 + $0x350] sm:%s191]
                %307 = vst [vmem:[%s199 + $0xd4] sm:%s191] %v306
                %v308 = vld [vmem:[%s198 + $0x360] sm:%s191]
                %309 = vst [vmem:[%s199 + $0xd8] sm:%s191] %v308
                %v310 = vld [vmem:[%s198 + $0x370] sm:%s191]
                %311 = vst [vmem:[%s199 + $0xdc] sm:%s191] %v310
                %v312 = vld [vmem:[%s198 + $0x380] sm:%s191]
                %313 = vst [vmem:[%s199 + $0xe0] sm:%s191] %v312
                %v314 = vld [vmem:[%s198 + $0x390] sm:%s191]
                %315 = vst [vmem:[%s199 + $0xe4] sm:%s191] %v314
                %v316 = vld [vmem:[%s198 + $0x3a0] sm:%s191]
                %317 = vst [vmem:[%s199 + $0xe8] sm:%s191] %v316
                %v318 = vld [vmem:[%s198 + $0x3b0] sm:%s191]
                %319 = vst [vmem:[%s199 + $0xec] sm:%s191] %v318
                %v320 = vld [vmem:[%s198 + $0x3c0] sm:%s191]
                %321 = vst [vmem:[%s199 + $0xf0] sm:%s191] %v320
                %v322 = vld [vmem:[%s198 + $0x3d0] sm:%s191]
                %323 = vst [vmem:[%s199 + $0xf4] sm:%s191] %v322
                %v324 = vld [vmem:[%s198 + $0x3e0] sm:%s191]
                %325 = vst [vmem:[%s199 + $0xf8] sm:%s191] %v324
                %v326 = vld [vmem:[%s198 + $0x3f0] sm:%s191]
                %327 = vst [vmem:[%s199 + $0xfc] sm:%s191] %v326
                %v328 = vld [vmem:[%s198 + $0x400] sm:%s191]
                %329 = vst [vmem:[%s199 + $0x100] sm:%s191] %v328
                %v330 = vld [vmem:[%s198 + $0x410] sm:%s191]
                %331 = vst [vmem:[%s199 + $0x104] sm:%s191] %v330
                %v332 = vld [vmem:[%s198 + $0x420] sm:%s191]
                %333 = vst [vmem:[%s199 + $0x108] sm:%s191] %v332
                %v334 = vld [vmem:[%s198 + $0x430] sm:%s191]
                %335 = vst [vmem:[%s199 + $0x10c] sm:%s191] %v334
                %v336 = vld [vmem:[%s198 + $0x440] sm:%s191]
                %337 = vst [vmem:[%s199 + $0x110] sm:%s191] %v336
                %v338 = vld [vmem:[%s198 + $0x450] sm:%s191]
                %339 = vst [vmem:[%s199 + $0x114] sm:%s191] %v338
                %v340 = vld [vmem:[%s198 + $0x460] sm:%s191]
                %341 = vst [vmem:[%s199 + $0x118] sm:%s191] %v340
                %v342 = vld [vmem:[%s198 + $0x470] sm:%s191]
                %343 = vst [vmem:[%s199 + $0x11c] sm:%s191] %v342
                %v344 = vld [vmem:[%s198 + $0x480] sm:%s191]
                %345 = vst [vmem:[%s199 + $0x120] sm:%s191] %v344
                %v346 = vld [vmem:[%s198 + $0x490] sm:%s191]
                %347 = vst [vmem:[%s199 + $0x124] sm:%s191] %v346
                %v348 = vld [vmem:[%s198 + $0x4a0] sm:%s191]
                %349 = vst [vmem:[%s199 + $0x128] sm:%s191] %v348
                %v350 = vld [vmem:[%s198 + $0x4b0] sm:%s191]
                %351 = vst [vmem:[%s199 + $0x12c] sm:%s191] %v350
                %v352 = vld [vmem:[%s198 + $0x4c0] sm:%s191]
                %353 = vst [vmem:[%s199 + $0x130] sm:%s191] %v352
                %v354 = vld [vmem:[%s198 + $0x4d0] sm:%s191]
                %355 = vst [vmem:[%s199 + $0x134] sm:%s191] %v354
                %v356 = vld [vmem:[%s198 + $0x4e0] sm:%s191]
                %357 = vst [vmem:[%s199 + $0x138] sm:%s191] %v356
                %v358 = vld [vmem:[%s198 + $0x4f0] sm:%s191]
                %359 = vst [vmem:[%s199 + $0x13c] sm:%s191] %v358
                %v360 = vld [vmem:[%s198 + $0x500] sm:%s191]
                %361 = vst [vmem:[%s199 + $0x140] sm:%s191] %v360
                %v362 = vld [vmem:[%s198 + $0x510] sm:%s191]
                %363 = vst [vmem:[%s199 + $0x144] sm:%s191] %v362
                %v364 = vld [vmem:[%s198 + $0x520] sm:%s191]
                %365 = vst [vmem:[%s199 + $0x148] sm:%s191] %v364
                %v366 = vld [vmem:[%s198 + $0x530] sm:%s191]
                %367 = vst [vmem:[%s199 + $0x14c] sm:%s191] %v366
                %v368 = vld [vmem:[%s198 + $0x540] sm:%s191]
                %369 = vst [vmem:[%s199 + $0x150] sm:%s191] %v368
                %v370 = vld [vmem:[%s198 + $0x550] sm:%s191]
                %371 = vst [vmem:[%s199 + $0x154] sm:%s191] %v370
                %v372 = vld [vmem:[%s198 + $0x560] sm:%s191]
                %373 = vst [vmem:[%s199 + $0x158] sm:%s191] %v372
                %v374 = vld [vmem:[%s198 + $0x570] sm:%s191]
                %375 = vst [vmem:[%s199 + $0x15c] sm:%s191] %v374
                %v376 = vld [vmem:[%s198 + $0x580] sm:%s191]
                %377 = vst [vmem:[%s199 + $0x160] sm:%s191] %v376
                %v378 = vld [vmem:[%s198 + $0x590] sm:%s191]
                %379 = vst [vmem:[%s199 + $0x164] sm:%s191] %v378
                %v380 = vld [vmem:[%s198 + $0x5a0] sm:%s191]
                %381 = vst [vmem:[%s199 + $0x168] sm:%s191] %v380
                %v382 = vld [vmem:[%s198 + $0x5b0] sm:%s191]
                %383 = vst [vmem:[%s199 + $0x16c] sm:%s191] %v382
                %v384 = vld [vmem:[%s198 + $0x5c0] sm:%s191]
                %385 = vst [vmem:[%s199 + $0x170] sm:%s191] %v384
                %v386 = vld [vmem:[%s198 + $0x5d0] sm:%s191]
                %387 = vst [vmem:[%s199 + $0x174] sm:%s191] %v386
                %v388 = vld [vmem:[%s198 + $0x5e0] sm:%s191]
                %389 = vst [vmem:[%s199 + $0x178] sm:%s191] %v388
                %v390 = vld [vmem:[%s198 + $0x5f0] sm:%s191]
                %391 = vst [vmem:[%s199 + $0x17c] sm:%s191] %v390
                %v392 = vld [vmem:[%s198 + $0x600] sm:%s191]
                %393 = vst [vmem:[%s199 + $0x180] sm:%s191] %v392
                %v394 = vld [vmem:[%s198 + $0x610] sm:%s191]
                %395 = vst [vmem:[%s199 + $0x184] sm:%s191] %v394
                %v396 = vld [vmem:[%s198 + $0x620] sm:%s191]
                %397 = vst [vmem:[%s199 + $0x188] sm:%s191] %v396
                %v398 = vld [vmem:[%s198 + $0x630] sm:%s191]
                %399 = vst [vmem:[%s199 + $0x18c] sm:%s191] %v398
                %v400 = vld [vmem:[%s198 + $0x640] sm:%s191]
                %401 = vst [vmem:[%s199 + $0x190] sm:%s191] %v400
                %v402 = vld [vmem:[%s198 + $0x650] sm:%s191]
                %403 = vst [vmem:[%s199 + $0x194] sm:%s191] %v402
                %v404 = vld [vmem:[%s198 + $0x660] sm:%s191]
                %405 = vst [vmem:[%s199 + $0x198] sm:%s191] %v404
                %v406 = vld [vmem:[%s198 + $0x670] sm:%s191]
                %407 = vst [vmem:[%s199 + $0x19c] sm:%s191] %v406
                %v408 = vld [vmem:[%s198 + $0x680] sm:%s191]
                %409 = vst [vmem:[%s199 + $0x1a0] sm:%s191] %v408
                %v410 = vld [vmem:[%s198 + $0x690] sm:%s191]
                %411 = vst [vmem:[%s199 + $0x1a4] sm:%s191] %v410
                %v412 = vld [vmem:[%s198 + $0x6a0] sm:%s191]
                %413 = vst [vmem:[%s199 + $0x1a8] sm:%s191] %v412
                %v414 = vld [vmem:[%s198 + $0x6b0] sm:%s191]
                %415 = vst [vmem:[%s199 + $0x1ac] sm:%s191] %v414
              $region45: #{encoder_block_forward.3} parent=39 // loop_footer
                %s197 = sadd.s32 1, %s193
              $region46: #{encoder_block_forward.3} parent=39 // loop_footer_branch
                %192 = sbr.rel target = $region42
              $region47: #{encoder_block_forward.3} parent=39 // loop_exit
                _
            $region40: #{encoder_block_forward.3} parent=31 // pred_fallthru
              _
          $region32: #{encoder_block_forward.3} parent=27 // pred_fallthru
            _
          %652 = vnop
        $region28: #{encoder_block_forward.3} parent=23 // pred_fallthru
          _
        // Predicated region
        $region66: #{encoder_block_forward.3} parent=23 // pred_check
          %p653 = pneg %p114
        $region67: #{encoder_block_forward.3} parent=23 // pred_check_branch
          %655 = sbr.rel (%p653) target = $region69
        $region68: #{encoder_block_forward.3} parent=23 // pred_region
          %s656 = sand.u32 %s104, 1
          %s657 = sand.u32 %s104, 1
          %s658 = smul.addr %s657, 16
          %s659 = scalar_lea.vmem [#allocation3], %s658
          %s660 = smul.addr %s17, 16
          %s661 = sadd.s32 %s18, %s660
          %s662 = smul.addr %s661, 4
          %s663 = scalar_lea.vmem %s3, %s662
          // Predicated region
          $region70: #{encoder_block_forward.3} parent=68 // pred_check
            _
          $region71: #{encoder_block_forward.3} parent=68 // pred_check_branch
            %665 = sbr.rel (0) target = $region73
          $region72: #{encoder_block_forward.3} parent=68 // pred_region
            // Predicated region
            $region74: #{encoder_block_forward.3} parent=72 // pred_check
              _
            $region75: #{encoder_block_forward.3} parent=72 // pred_check_branch
              %667 = sbr.rel target = $region77
            $region76: #{encoder_block_forward.3} parent=72 // pred_region
              // Predicated region
              $region89: #{encoder_block_forward.3} parent=76 // pred_check
                _
              $region90: #{encoder_block_forward.3} parent=76 // pred_check_branch
                %689 = sbr.rel (0) target = $region92
              $region91: #{encoder_block_forward.3} parent=76 // pred_region
                loop: start=0, step=1, limit=1
                $region93: #{encoder_block_forward.3} parent=91 // loop_pre_header
                  _
                $region94: #{encoder_block_forward.3} parent=91 // loop_header
                  %s691 = sphi 0, %s695
                  %p692 = scmp.ge.s32.totalorder %s691, 1
                  %s696 = sphi %s663, %s663
                  %s697 = sphi %s659, %s659
                $region95: #{encoder_block_forward.3} parent=91 // loop_header_branch
                  %694 = sbr.rel (%p692) target = $region99
                $region96: #{encoder_block_forward.3} parent=91 // loop_body
                  _
                $region97: #{encoder_block_forward.3} parent=91 // loop_footer
                  %s695 = sadd.s32 1, %s691
                $region98: #{encoder_block_forward.3} parent=91 // loop_footer_branch
                  %690 = sbr.rel target = $region94
                $region99: #{encoder_block_forward.3} parent=91 // loop_exit
                  _
                %s699 = ssub.s32 16, 1
                loop: start=0, step=1, limit=1
                $region100: #{encoder_block_forward.3} parent=91 // loop_pre_header
                  _
                $region101: #{encoder_block_forward.3} parent=91 // loop_header
                  %s701 = sphi 0, %s705
                  %p702 = scmp.ge.s32.totalorder %s701, 1
                  %s706 = sphi %s663, %s663
                  %s707 = sphi %s659, %s659
                $region102: #{encoder_block_forward.3} parent=91 // loop_header_branch
                  %704 = sbr.rel (%p702) target = $region106
                $region103: #{encoder_block_forward.3} parent=91 // loop_body
                  %v708 = vld [vmem:[%s706] sm:%s699]
                  %709 = vst [vmem:[%s707] sm:%s699] %v708
                  %v710 = vld [vmem:[%s706 + $0x10] sm:%s699]
                  %711 = vst [vmem:[%s707 + $0x4] sm:%s699] %v710
                  %v712 = vld [vmem:[%s706 + $0x20] sm:%s699]
                  %713 = vst [vmem:[%s707 + $0x8] sm:%s699] %v712
                  %v714 = vld [vmem:[%s706 + $0x30] sm:%s699]
                  %715 = vst [vmem:[%s707 + $0xc] sm:%s699] %v714
                $region104: #{encoder_block_forward.3} parent=91 // loop_footer
                  %s705 = sadd.s32 1, %s701
                $region105: #{encoder_block_forward.3} parent=91 // loop_footer_branch
                  %700 = sbr.rel target = $region101
                $region106: #{encoder_block_forward.3} parent=91 // loop_exit
                  _
              $region92: #{encoder_block_forward.3} parent=76 // pred_fallthru
                _
            $region77: #{encoder_block_forward.3} parent=72 // pred_fallthru
              _
            // Predicated region
            $region78: #{encoder_block_forward.3} parent=72 // pred_check
              _
            $region79: #{encoder_block_forward.3} parent=72 // pred_check_branch
              %669 = sbr.rel (0) target = $region81
            $region80: #{encoder_block_forward.3} parent=72 // pred_region
              %s671 = ssub.s32 16, 1
              loop: start=0, step=1, limit=1
              $region82: #{encoder_block_forward.3} parent=80 // loop_pre_header
                _
              $region83: #{encoder_block_forward.3} parent=80 // loop_header
                %s673 = sphi 0, %s677
                %p674 = scmp.ge.s32.totalorder %s673, 1
                %s678 = sphi %s663, %s663
                %s679 = sphi %s659, %s659
              $region84: #{encoder_block_forward.3} parent=80 // loop_header_branch
                %676 = sbr.rel (%p674) target = $region88
              $region85: #{encoder_block_forward.3} parent=80 // loop_body
                %v680 = vld [vmem:[%s678] sm:%s671]
                %681 = vst [vmem:[%s679] sm:%s671] %v680
                %v682 = vld [vmem:[%s678 + $0x10] sm:%s671]
                %683 = vst [vmem:[%s679 + $0x4] sm:%s671] %v682
                %v684 = vld [vmem:[%s678 + $0x20] sm:%s671]
                %685 = vst [vmem:[%s679 + $0x8] sm:%s671] %v684
                %v686 = vld [vmem:[%s678 + $0x30] sm:%s671]
                %687 = vst [vmem:[%s679 + $0xc] sm:%s671] %v686
              $region86: #{encoder_block_forward.3} parent=80 // loop_footer
                %s677 = sadd.s32 1, %s673
              $region87: #{encoder_block_forward.3} parent=80 // loop_footer_branch
                %672 = sbr.rel target = $region83
              $region88: #{encoder_block_forward.3} parent=80 // loop_exit
                _
            $region81: #{encoder_block_forward.3} parent=72 // pred_fallthru
              _
          $region73: #{encoder_block_forward.3} parent=68 // pred_fallthru
            _
          %716 = vnop
        $region69: #{encoder_block_forward.3} parent=23 // pred_fallthru
          _
      $region24: #{encoder_block_forward.3} parent=5 // pred_fallthru
        _
      %p717 = scmp.le.s32.totalorder 1, %s10
      %p718 = scmp.lt.s32.totalorder %s10, 9
      %p719 = pnand %p717, %p718
      %p720 = pneg %p719
      // Predicated region
      $region107: #{encoder_block_forward.3} parent=5 // pred_check
        _
      $region108: #{encoder_block_forward.3} parent=5 // pred_check_branch
        %722 = sbr.rel (%p719) target = $region110
      $region109: #{encoder_block_forward.3} parent=5 // pred_region
        %s723 = ssub.s32 %s10, 1
        %s724 = sand.u32 %s58, 1
        %s725 = sand.u32 %s58, 1
        %s726 = smul.addr %s725, 432
        %s727 = scalar_lea.vmem [#allocation2], %s726
        // Predicated region
        $region111: #{encoder_block_forward.3} parent=109 // pred_check
          %p728 = pneg %p71
        $region112: #{encoder_block_forward.3} parent=109 // pred_check_branch
          %730 = sbr.rel (%p728) target = $region114
        $region113: #{encoder_block_forward.3} parent=109 // pred_region
          _
        $region114: #{encoder_block_forward.3} parent=109 // pred_fallthru
          _
        %s731 = sand.u32 %s107, 1
        %s732 = sand.u32 %s107, 1
        %s733 = smul.addr %s732, 16
        %s734 = scalar_lea.vmem [#allocation3], %s733
        // Predicated region
        $region115: #{encoder_block_forward.3} parent=109 // pred_check
          %p735 = pneg %p120
        $region116: #{encoder_block_forward.3} parent=109 // pred_check_branch
          %737 = sbr.rel (%p735) target = $region118
        $region117: #{encoder_block_forward.3} parent=109 // pred_region
          _
        $region118: #{encoder_block_forward.3} parent=109 // pred_fallthru
          _
        %p738 = pneg %p43
        %p739 = pneg %p40
        %s740 = sand.u32 %s58, 1
        %s741 = sand.u32 %s58, 1
        %s742 = smul.addr %s741, 432
        %s743 = scalar_lea.vmem [#allocation2], %s742
        %p744 = pneg %p71
        %p745 = pneg %p68
        %p746 = pneg %p92
        %p747 = pneg %p89
        %s748 = sand.u32 %s107, 1
        %s749 = sand.u32 %s107, 1
        %s750 = smul.addr %s749, 16
        %s751 = scalar_lea.vmem [#allocation3], %s750
        %p752 = pneg %p120
        %p753 = pneg %p117
        %p754 = pneg %p148
        %p755 = pneg %p145
        %s756 = sand.u32 %s135, 1
        %s757 = sand.u32 %s135, 1
        %s758 = smul.addr %s757, 16
        %s759 = scalar_lea.vmem [#allocation4], %s758
        %v761 = vld [vmem:[%s0] sm:$0xff]
        %v762 = vld [vmem:[%s0 + $0x8] sm:$0xff]
        %v763 = vld [vmem:[%s0 + $0x10] sm:$0xff]
        %v764 = vld [vmem:[%s0 + $0x18] sm:$0xf]
        %v765 = vld [vmem:[%s0 + $0x1c] sm:$0xff]
        %v766 = vld [vmem:[%s0 + $0x24] sm:$0xff]
        %v767 = vld [vmem:[%s0 + $0x2c] sm:$0xff]
        %v768 = vld [vmem:[%s0 + $0x34] sm:$0xf]
        %v769 = vld [vmem:[%s0 + $0x38] sm:$0xff]
        %v770 = vld [vmem:[%s0 + $0x40] sm:$0xff]
        %v771 = vld [vmem:[%s0 + $0x48] sm:$0xff]
        %v772 = vld [vmem:[%s0 + $0x50] sm:$0xf]
        %v773 = vld [vmem:[%s0 + $0x54] sm:$0xff]
        %v774 = vld [vmem:[%s0 + $0x5c] sm:$0xff]
        %v775 = vld [vmem:[%s0 + $0x64] sm:$0xff]
        %v776 = vld [vmem:[%s0 + $0x6c] sm:$0xf]
        %v777 = vld [vmem:[%s727] sm:$0xf]
        %v778 = vld [vmem:[%s727 + $0x4] sm:$0xf]
        %v779 = vld [vmem:[%s727 + $0x8] sm:$0xf]
        %v780 = vld [vmem:[%s727 + $0xc] sm:$0xf]
        %v781 = vld [vmem:[%s727 + $0x10] sm:$0xf]
        %v782 = vld [vmem:[%s727 + $0x14] sm:$0xf]
        %v783 = vld [vmem:[%s727 + $0x18] sm:$0xf]
        %v784 = vld [vmem:[%s727 + $0x1c] sm:$0xf]
        %v785 = vld [vmem:[%s727 + $0x20] sm:$0xf]
        %v786 = vld [vmem:[%s727 + $0x24] sm:$0xf]
        %v787 = vld [vmem:[%s727 + $0x28] sm:$0xf]
        %v788 = vld [vmem:[%s727 + $0x2c] sm:$0xf]
        %v789 = vld [vmem:[%s727 + $0x30] sm:$0xf]
        %v790 = vld [vmem:[%s727 + $0x34] sm:$0xf]
        %v791 = vld [vmem:[%s727 + $0x38] sm:$0xf]
        %v792 = vld [vmem:[%s727 + $0x3c] sm:$0xf]
        %v793 = vld [vmem:[%s727 + $0x40] sm:$0xf]
        %v794 = vld [vmem:[%s727 + $0x44] sm:$0xf]
        %v795 = vld [vmem:[%s727 + $0x48] sm:$0xf]
        %v796 = vld [vmem:[%s727 + $0x4c] sm:$0xf]
        %v797 = vld [vmem:[%s727 + $0x50] sm:$0xf]
        %v798 = vld [vmem:[%s727 + $0x54] sm:$0xf]
        %v799 = vld [vmem:[%s727 + $0x58] sm:$0xf]
        %v800 = vld [vmem:[%s727 + $0x5c] sm:$0xf]
        %v801 = vld [vmem:[%s727 + $0x60] sm:$0xf]
        %v802 = vld [vmem:[%s727 + $0x64] sm:$0xf]
        %v803 = vld [vmem:[%s727 + $0x68] sm:$0xf]
        %v804 = vld [vmem:[%s727 + $0x6c] sm:$0xf]
        %v805 = vld [vmem:[%s727 + $0x70] sm:$0xf]
        %v806 = vld [vmem:[%s727 + $0x74] sm:$0xf]
        %v807 = vld [vmem:[%s727 + $0x78] sm:$0xf]
        %v808 = vld [vmem:[%s727 + $0x7c] sm:$0xf]
        %v809 = vld [vmem:[%s727 + $0x80] sm:$0xf]
        %v810 = vld [vmem:[%s727 + $0x84] sm:$0xf]
        %v811 = vld [vmem:[%s727 + $0x88] sm:$0xf]
        %v812 = vld [vmem:[%s727 + $0x8c] sm:$0xf]
        %v813 = vld [vmem:[%s727 + $0x90] sm:$0xf]
        %v814 = vld [vmem:[%s727 + $0x94] sm:$0xf]
        %v815 = vld [vmem:[%s727 + $0x98] sm:$0xf]
        %v816 = vld [vmem:[%s727 + $0x9c] sm:$0xf]
        %v817 = vld [vmem:[%s727 + $0xa0] sm:$0xf]
        %v818 = vld [vmem:[%s727 + $0xa4] sm:$0xf]
        %v819 = vld [vmem:[%s727 + $0xa8] sm:$0xf]
        %v820 = vld [vmem:[%s727 + $0xac] sm:$0xf]
        %v821 = vld [vmem:[%s727 + $0xb0] sm:$0xf]
        %v822 = vld [vmem:[%s727 + $0xb4] sm:$0xf]
        %v823 = vld [vmem:[%s727 + $0xb8] sm:$0xf]
        %v824 = vld [vmem:[%s727 + $0xbc] sm:$0xf]
        %v825 = vld [vmem:[%s727 + $0xc0] sm:$0xf]
        %v826 = vld [vmem:[%s727 + $0xc4] sm:$0xf]
        %v827 = vld [vmem:[%s727 + $0xc8] sm:$0xf]
        %v828 = vld [vmem:[%s727 + $0xcc] sm:$0xf]
        %v829 = vld [vmem:[%s727 + $0xd0] sm:$0xf]
        %v830 = vld [vmem:[%s727 + $0xd4] sm:$0xf]
        %v831 = vld [vmem:[%s727 + $0xd8] sm:$0xf]
        %v832 = vld [vmem:[%s727 + $0xdc] sm:$0xf]
        %v833 = vld [vmem:[%s727 + $0xe0] sm:$0xf]
        %v834 = vld [vmem:[%s727 + $0xe4] sm:$0xf]
        %v835 = vld [vmem:[%s727 + $0xe8] sm:$0xf]
        %v836 = vld [vmem:[%s727 + $0xec] sm:$0xf]
        %v837 = vld [vmem:[%s727 + $0xf0] sm:$0xf]
        %v838 = vld [vmem:[%s727 + $0xf4] sm:$0xf]
        %v839 = vld [vmem:[%s727 + $0xf8] sm:$0xf]
        %v840 = vld [vmem:[%s727 + $0xfc] sm:$0xf]
        %v841 = vld [vmem:[%s727 + $0x100] sm:$0xf]
        %v842 = vld [vmem:[%s727 + $0x104] sm:$0xf]
        %v843 = vld [vmem:[%s727 + $0x108] sm:$0xf]
        %v844 = vld [vmem:[%s727 + $0x10c] sm:$0xf]
        %v845 = vld [vmem:[%s727 + $0x110] sm:$0xf]
        %v846 = vld [vmem:[%s727 + $0x114] sm:$0xf]
        %v847 = vld [vmem:[%s727 + $0x118] sm:$0xf]
        %v848 = vld [vmem:[%s727 + $0x11c] sm:$0xf]
        %v849 = vld [vmem:[%s727 + $0x120] sm:$0xf]
        %v850 = vld [vmem:[%s727 + $0x124] sm:$0xf]
        %v851 = vld [vmem:[%s727 + $0x128] sm:$0xf]
        %v852 = vld [vmem:[%s727 + $0x12c] sm:$0xf]
        %v853 = vld [vmem:[%s727 + $0x130] sm:$0xf]
        %v854 = vld [vmem:[%s727 + $0x134] sm:$0xf]
        %v855 = vld [vmem:[%s727 + $0x138] sm:$0xf]
        %v856 = vld [vmem:[%s727 + $0x13c] sm:$0xf]
        %v857 = vld [vmem:[%s727 + $0x140] sm:$0xf]
        %v858 = vld [vmem:[%s727 + $0x144] sm:$0xf]
        %v859 = vld [vmem:[%s727 + $0x148] sm:$0xf]
        %v860 = vld [vmem:[%s727 + $0x14c] sm:$0xf]
        %v861 = vld [vmem:[%s727 + $0x150] sm:$0xf]
        %v862 = vld [vmem:[%s727 + $0x154] sm:$0xf]
        %v863 = vld [vmem:[%s727 + $0x158] sm:$0xf]
        %v864 = vld [vmem:[%s727 + $0x15c] sm:$0xf]
        %v865 = vld [vmem:[%s727 + $0x160] sm:$0xf]
        %v866 = vld [vmem:[%s727 + $0x164] sm:$0xf]
        %v867 = vld [vmem:[%s727 + $0x168] sm:$0xf]
        %v868 = vld [vmem:[%s727 + $0x16c] sm:$0xf]
        %v869 = vld [vmem:[%s727 + $0x170] sm:$0xf]
        %v870 = vld [vmem:[%s727 + $0x174] sm:$0xf]
        %v871 = vld [vmem:[%s727 + $0x178] sm:$0xf]
        %v872 = vld [vmem:[%s727 + $0x17c] sm:$0xf]
        %v873 = vld [vmem:[%s727 + $0x180] sm:$0xf]
        %v874 = vld [vmem:[%s727 + $0x184] sm:$0xf]
        %v875 = vld [vmem:[%s727 + $0x188] sm:$0xf]
        %v876 = vld [vmem:[%s727 + $0x18c] sm:$0xf]
        %v877 = vld [vmem:[%s727 + $0x190] sm:$0xf]
        %v878 = vld [vmem:[%s727 + $0x194] sm:$0xf]
        %v879 = vld [vmem:[%s727 + $0x198] sm:$0xf]
        %v880 = vld [vmem:[%s727 + $0x19c] sm:$0xf]
        %v881 = vld [vmem:[%s727 + $0x1a0] sm:$0xf]
        %v882 = vld [vmem:[%s727 + $0x1a4] sm:$0xf]
        %v883 = vld [vmem:[%s727 + $0x1a8] sm:$0xf]
        %v884 = vld [vmem:[%s727 + $0x1ac] sm:$0xf]
        %v885 = vld [vmem:[%s2] sm:$0xff]
        %v886 = vld [vmem:[%s2 + $0x8] sm:$0xff]
        %v887 = vld [vmem:[%s2 + $0x10] sm:$0xff]
        %v888 = vld [vmem:[%s2 + $0x18] sm:$0xff]
        %890 = vset.pattern.permute.xlu0 0
        %891 = vperm.xlu0 %890, %v885
        %v892 = vpop.permute.xlu0 %891
        %895 = vset.pattern.permute.xlu0 0
        %896 = vperm.xlu0 %895, %v886
        %v897 = vpop.permute.xlu0 %896
        %900 = vset.pattern.permute.xlu0 0
        %901 = vperm.xlu0 %900, %v887
        %v902 = vpop.permute.xlu0 %901
        %905 = vset.pattern.permute.xlu0 0
        %906 = vperm.xlu0 %905, %v888
        %v907 = vpop.permute.xlu0 %906
        %v925 = vunpack.c.l.b16 %v761
        %v926 = vunpack.c.h.b16 %v761
        %v927 = vunpack.c.l.b16 %v762
        %v928 = vunpack.c.h.b16 %v762
        %v929 = vunpack.c.l.b16 %v763
        %v930 = vunpack.c.h.b16 %v763
        %v931 = vunpack.c.l.b16 %v764
        %v932 = vunpack.c.l.b16 %v765
        %v933 = vunpack.c.h.b16 %v765
        %v934 = vunpack.c.l.b16 %v766
        %v935 = vunpack.c.h.b16 %v766
        %v936 = vunpack.c.l.b16 %v767
        %v937 = vunpack.c.h.b16 %v767
        %v938 = vunpack.c.l.b16 %v768
        %v939 = vunpack.c.l.b16 %v769
        %v940 = vunpack.c.h.b16 %v769
        %v941 = vunpack.c.l.b16 %v770
        %v942 = vunpack.c.h.b16 %v770
        %v943 = vunpack.c.l.b16 %v771
        %v944 = vunpack.c.h.b16 %v771
        %v945 = vunpack.c.l.b16 %v772
        %v946 = vunpack.c.l.b16 %v773
        %v947 = vunpack.c.h.b16 %v773
        %v948 = vunpack.c.l.b16 %v774
        %v949 = vunpack.c.h.b16 %v774
        %v950 = vunpack.c.l.b16 %v775
        %v951 = vunpack.c.h.b16 %v775
        %v952 = vunpack.c.l.b16 %v776
        %v953 = vpack.c.b16 %v932, %v925
        %v954 = vpack.c.b16 %v933, %v926
        %v955 = vpack.c.b16 %v934, %v927
        %v956 = vpack.c.b16 %v935, %v928
        %v957 = vpack.c.b16 %v936, %v929
        %v958 = vpack.c.b16 %v937, %v930
        %v959 = vpack.c.b16 %v938, %v931
        %v960 = vpack.c.b16 %v946, %v939
        %v961 = vpack.c.b16 %v947, %v940
        %v962 = vpack.c.b16 %v948, %v941
        %v963 = vpack.c.b16 %v949, %v942
        %v964 = vpack.c.b16 %v950, %v943
        %v965 = vpack.c.b16 %v951, %v944
        %v966 = vpack.c.b16 %v952, %v945
        %v1087 = vunpack.c.l.b16 %v777
        %v1088 = vunpack.c.l.b16 %v778
        %v1089 = vunpack.c.l.b16 %v779
        %v1090 = vunpack.c.l.b16 %v780
        %v1091 = vunpack.c.l.b16 %v781
        %v1092 = vunpack.c.l.b16 %v782
        %v1093 = vunpack.c.l.b16 %v783
        %v1094 = vunpack.c.l.b16 %v784
        %v1095 = vunpack.c.l.b16 %v785
        %v1096 = vunpack.c.l.b16 %v786
        %v1097 = vunpack.c.l.b16 %v787
        %v1098 = vunpack.c.l.b16 %v788
        %v1099 = vunpack.c.l.b16 %v789
        %v1100 = vunpack.c.l.b16 %v790
        %v1101 = vunpack.c.l.b16 %v791
        %v1102 = vunpack.c.l.b16 %v792
        %v1103 = vunpack.c.l.b16 %v793
        %v1104 = vunpack.c.l.b16 %v794
        %v1105 = vunpack.c.l.b16 %v795
        %v1106 = vunpack.c.l.b16 %v796
        %v1107 = vunpack.c.l.b16 %v797
        %v1108 = vunpack.c.l.b16 %v798
        %v1109 = vunpack.c.l.b16 %v799
        %v1110 = vunpack.c.l.b16 %v800
        %v1111 = vunpack.c.l.b16 %v801
        %v1112 = vunpack.c.l.b16 %v802
        %v1113 = vunpack.c.l.b16 %v803
        %v1114 = vunpack.c.l.b16 %v804
        %v1115 = vunpack.c.l.b16 %v805
        %v1116 = vunpack.c.l.b16 %v806
        %v1117 = vunpack.c.l.b16 %v807
        %v1118 = vunpack.c.l.b16 %v808
        %v1119 = vunpack.c.l.b16 %v809
        %v1120 = vunpack.c.l.b16 %v810
        %v1121 = vunpack.c.l.b16 %v811
        %v1122 = vunpack.c.l.b16 %v812
        %v1123 = vunpack.c.l.b16 %v813
        %v1124 = vunpack.c.l.b16 %v814
        %v1125 = vunpack.c.l.b16 %v815
        %v1126 = vunpack.c.l.b16 %v816
        %v1127 = vunpack.c.l.b16 %v817
        %v1128 = vunpack.c.l.b16 %v818
        %v1129 = vunpack.c.l.b16 %v819
        %v1130 = vunpack.c.l.b16 %v820
        %v1131 = vunpack.c.l.b16 %v821
        %v1132 = vunpack.c.l.b16 %v822
        %v1133 = vunpack.c.l.b16 %v823
        %v1134 = vunpack.c.l.b16 %v824
        %v1135 = vunpack.c.l.b16 %v825
        %v1136 = vunpack.c.l.b16 %v826
        %v1137 = vunpack.c.l.b16 %v827
        %v1138 = vunpack.c.l.b16 %v828
        %v1139 = vunpack.c.l.b16 %v829
        %v1140 = vunpack.c.l.b16 %v830
        %v1141 = vunpack.c.l.b16 %v831
        %v1142 = vunpack.c.l.b16 %v832
        %v1143 = vunpack.c.l.b16 %v833
        %v1144 = vunpack.c.l.b16 %v834
        %v1145 = vunpack.c.l.b16 %v835
        %v1146 = vunpack.c.l.b16 %v836
        %v1147 = vunpack.c.l.b16 %v837
        %v1148 = vunpack.c.l.b16 %v838
        %v1149 = vunpack.c.l.b16 %v839
        %v1150 = vunpack.c.l.b16 %v840
        %v1151 = vunpack.c.l.b16 %v841
        %v1152 = vunpack.c.l.b16 %v842
        %v1153 = vunpack.c.l.b16 %v843
        %v1154 = vunpack.c.l.b16 %v844
        %v1155 = vunpack.c.l.b16 %v845
        %v1156 = vunpack.c.l.b16 %v846
        %v1157 = vunpack.c.l.b16 %v847
        %v1158 = vunpack.c.l.b16 %v848
        %v1159 = vunpack.c.l.b16 %v849
        %v1160 = vunpack.c.l.b16 %v850
        %v1161 = vunpack.c.l.b16 %v851
        %v1162 = vunpack.c.l.b16 %v852
        %v1163 = vunpack.c.l.b16 %v853
        %v1164 = vunpack.c.l.b16 %v854
        %v1165 = vunpack.c.l.b16 %v855
        %v1166 = vunpack.c.l.b16 %v856
        %v1167 = vunpack.c.l.b16 %v857
        %v1168 = vunpack.c.l.b16 %v858
        %v1169 = vunpack.c.l.b16 %v859
        %v1170 = vunpack.c.l.b16 %v860
        %v1171 = vunpack.c.l.b16 %v861
        %v1172 = vunpack.c.l.b16 %v862
        %v1173 = vunpack.c.l.b16 %v863
        %v1174 = vunpack.c.l.b16 %v864
        %v1175 = vunpack.c.l.b16 %v865
        %v1176 = vunpack.c.l.b16 %v866
        %v1177 = vunpack.c.l.b16 %v867
        %v1178 = vunpack.c.l.b16 %v868
        %v1179 = vunpack.c.l.b16 %v869
        %v1180 = vunpack.c.l.b16 %v870
        %v1181 = vunpack.c.l.b16 %v871
        %v1182 = vunpack.c.l.b16 %v872
        %v1183 = vunpack.c.l.b16 %v873
        %v1184 = vunpack.c.l.b16 %v874
        %v1185 = vunpack.c.l.b16 %v875
        %v1186 = vunpack.c.l.b16 %v876
        %v1187 = vunpack.c.l.b16 %v877
        %v1188 = vunpack.c.l.b16 %v878
        %v1189 = vunpack.c.l.b16 %v879
        %v1190 = vunpack.c.l.b16 %v880
        %v1191 = vunpack.c.l.b16 %v881
        %v1192 = vunpack.c.l.b16 %v882
        %v1193 = vunpack.c.l.b16 %v883
        %v1194 = vunpack.c.l.b16 %v884
        %v1195 = vpack.c.b16 %v1088, %v1087
        %v1196 = vpack.c.b16 %v1090, %v1089
        %v1197 = vpack.c.b16 %v1092, %v1091
        %v1198 = vpack.c.b16 %v1094, %v1093
        %v1199 = vpack.c.b16 %v1096, %v1095
        %v1200 = vpack.c.b16 %v1098, %v1097
        %v1201 = vpack.c.b16 %v1100, %v1099
        %v1202 = vpack.c.b16 %v1102, %v1101
        %v1203 = vpack.c.b16 %v1104, %v1103
        %v1204 = vpack.c.b16 %v1106, %v1105
        %v1205 = vpack.c.b16 %v1108, %v1107
        %v1206 = vpack.c.b16 %v1110, %v1109
        %v1207 = vpack.c.b16 %v1112, %v1111
        %v1208 = vpack.c.b16 %v1114, %v1113
        %v1209 = vpack.c.b16 %v1116, %v1115
        %v1210 = vpack.c.b16 %v1118, %v1117
        %v1211 = vpack.c.b16 %v1120, %v1119
        %v1212 = vpack.c.b16 %v1122, %v1121
        %v1213 = vpack.c.b16 %v1124, %v1123
        %v1214 = vpack.c.b16 %v1126, %v1125
        %v1215 = vpack.c.b16 %v1128, %v1127
        %v1216 = vpack.c.b16 %v1130, %v1129
        %v1217 = vpack.c.b16 %v1132, %v1131
        %v1218 = vpack.c.b16 %v1134, %v1133
        %v1219 = vpack.c.b16 %v1136, %v1135
        %v1220 = vpack.c.b16 %v1138, %v1137
        %v1221 = vpack.c.b16 %v1140, %v1139
        %v1222 = vpack.c.b16 %v1142, %v1141
        %v1223 = vpack.c.b16 %v1144, %v1143
        %v1224 = vpack.c.b16 %v1146, %v1145
        %v1225 = vpack.c.b16 %v1148, %v1147
        %v1226 = vpack.c.b16 %v1150, %v1149
        %v1227 = vpack.c.b16 %v1152, %v1151
        %v1228 = vpack.c.b16 %v1154, %v1153
        %v1229 = vpack.c.b16 %v1156, %v1155
        %v1230 = vpack.c.b16 %v1158, %v1157
        %v1231 = vpack.c.b16 %v1160, %v1159
        %v1232 = vpack.c.b16 %v1162, %v1161
        %v1233 = vpack.c.b16 %v1164, %v1163
        %v1234 = vpack.c.b16 %v1166, %v1165
        %v1235 = vpack.c.b16 %v1168, %v1167
        %v1236 = vpack.c.b16 %v1170, %v1169
        %v1237 = vpack.c.b16 %v1172, %v1171
        %v1238 = vpack.c.b16 %v1174, %v1173
        %v1239 = vpack.c.b16 %v1176, %v1175
        %v1240 = vpack.c.b16 %v1178, %v1177
        %v1241 = vpack.c.b16 %v1180, %v1179
        %v1242 = vpack.c.b16 %v1182, %v1181
        %v1243 = vpack.c.b16 %v1184, %v1183
        %v1244 = vpack.c.b16 %v1186, %v1185
        %v1245 = vpack.c.b16 %v1188, %v1187
        %v1246 = vpack.c.b16 %v1190, %v1189
        %v1247 = vpack.c.b16 %v1192, %v1191
        %v1248 = vpack.c.b16 %v1194, %v1193
        %vm1303 = vcmask 785408
        %v1305 = vsel %vm1303, %v959, 0
        %v1308 = vsel %vm1303, %v966, 0
        %1310 = vmatprep.subr.bf16.mxu0 0
        %1311 = vmatpush1.bf16.msra.mxu0 %v1202
        %1312 = vmatprep.subr.bf16.mxu0 0
        %1313 = vmatpush1.bf16.msra.mxu0 %v1201
        %1314 = vmatprep.subr.bf16.mxu0 0
        %1315 = vmatpush1.bf16.msra.mxu0 %v1200
        %1316 = vmatprep.subr.bf16.mxu0 0
        %1317 = vmatpush1.bf16.msra.mxu0 %v1199
        %1318 = vmatprep.subr.bf16.mxu0 0
        %1319 = vmatpush1.bf16.msra.mxu0 %v1198
        %1320 = vmatprep.subr.bf16.mxu0 0
        %1321 = vmatpush1.bf16.msra.mxu0 %v1197
        %1322 = vmatprep.subr.bf16.mxu0 0
        %1323 = vmatpush1.bf16.msra.mxu0 %v1196
        %1324 = vmatprep.subr.bf16.mxu0 0
        %1325 = vmatpush1.bf16.msra.mxu0 %v1195
        %1326 = vmatprep.subr.bf16.mxu0 0
        %1327 = vmatpush2.bf16.msra.mxu0 %v1210
        %1328 = vmatprep.subr.bf16.mxu0 0
        %1329 = vmatpush2.bf16.msra.mxu0 %v1209
        %1330 = vmatprep.subr.bf16.mxu0 0
        %1331 = vmatpush2.bf16.msra.mxu0 %v1208
        %1332 = vmatprep.subr.bf16.mxu0 0
        %1333 = vmatpush2.bf16.msra.mxu0 %v1207
        %1334 = vmatprep.subr.bf16.mxu0 0
        %1335 = vmatpush2.bf16.msra.mxu0 %v1206
        %1336 = vmatprep.subr.bf16.mxu0 0
        %1337 = vmatpush2.bf16.msra.mxu0 %v1205
        %1338 = vmatprep.subr.bf16.mxu0 0
        %1339 = vmatpush2.bf16.msra.mxu0 %v1204
        %1340 = vmatprep.subr.bf16.mxu0 0
        %1341 = vmatpush2.bf16.msra.mxu0 %v1203
        %1342 = vmatprep.mubr.bf16.mxu0 %v954
        %1343 = vmatmul.mubr.bf16.gmra.mxu0 %v953
        %v1344 = vpop.f32.mrf.mxu0
        %v1345 = vadd.f32 %v892, %v1344
        %v1346 = vpop.f32.mrf.mxu0
        %v1347 = vpop.f32.mrf.mxu0
        %v1348 = vadd.f32 %v897, %v1347
        %v1349 = vpop.f32.mrf.mxu0
        %1350 = vmatprep.mubr.bf16.mxu0 %v961
        %1351 = vmatmul.mubr.bf16.gmra.mxu0 %v960
        %v1352 = vpop.f32.mrf.mxu0
        %v1353 = vadd.f32 %v902, %v1352
        %v1354 = vpop.f32.mrf.mxu0
        %v1355 = vpop.f32.mrf.mxu0
        %v1356 = vadd.f32 %v907, %v1355
        %v1357 = vpop.f32.mrf.mxu0
        %1358 = vdwg.mxu0
        %1359 = vmatprep.subr.bf16.mxu0 0
        %1360 = vmatpush1.bf16.msra.mxu0 %v1218
        %1361 = vmatprep.subr.bf16.mxu0 0
        %1362 = vmatpush1.bf16.msra.mxu0 %v1217
        %1363 = vmatprep.subr.bf16.mxu0 0
        %1364 = vmatpush1.bf16.msra.mxu0 %v1216
        %1365 = vmatprep.subr.bf16.mxu0 0
        %1366 = vmatpush1.bf16.msra.mxu0 %v1215
        %1367 = vmatprep.subr.bf16.mxu0 0
        %1368 = vmatpush1.bf16.msra.mxu0 %v1214
        %1369 = vmatprep.subr.bf16.mxu0 0
        %1370 = vmatpush1.bf16.msra.mxu0 %v1213
        %1371 = vmatprep.subr.bf16.mxu0 0
        %1372 = vmatpush1.bf16.msra.mxu0 %v1212
        %1373 = vmatprep.subr.bf16.mxu0 0
        %1374 = vmatpush1.bf16.msra.mxu0 %v1211
        %1375 = vmatprep.subr.bf16.mxu0 0
        %1376 = vmatpush2.bf16.msra.mxu0 %v1226
        %1377 = vmatprep.subr.bf16.mxu0 0
        %1378 = vmatpush2.bf16.msra.mxu0 %v1225
        %1379 = vmatprep.subr.bf16.mxu0 0
        %1380 = vmatpush2.bf16.msra.mxu0 %v1224
        %1381 = vmatprep.subr.bf16.mxu0 0
        %1382 = vmatpush2.bf16.msra.mxu0 %v1223
        %1383 = vmatprep.subr.bf16.mxu0 0
        %1384 = vmatpush2.bf16.msra.mxu0 %v1222
        %1385 = vmatprep.subr.bf16.mxu0 0
        %1386 = vmatpush2.bf16.msra.mxu0 %v1221
        %1387 = vmatprep.subr.bf16.mxu0 0
        %1388 = vmatpush2.bf16.msra.mxu0 %v1220
        %1389 = vmatprep.subr.bf16.mxu0 0
        %1390 = vmatpush2.bf16.msra.mxu0 %v1219
        %1391 = vmatprep.mubr.bf16.mxu0 %v956
        %1392 = vmatmul.mubr.bf16.gmra.mxu0 %v955
        %v1393 = vpop.f32.mrf.mxu0
        %v1394 = vadd.f32 %v1345, %v1393
        %v1395 = vpop.f32.mrf.mxu0
        %v1396 = vpop.f32.mrf.mxu0
        %v1397 = vadd.f32 %v1348, %v1396
        %v1398 = vpop.f32.mrf.mxu0
        %1399 = vmatprep.mubr.bf16.mxu0 %v963
        %1400 = vmatmul.mubr.bf16.gmra.mxu0 %v962
        %v1401 = vpop.f32.mrf.mxu0
        %v1402 = vadd.f32 %v1353, %v1401
        %v1403 = vpop.f32.mrf.mxu0
        %v1404 = vpop.f32.mrf.mxu0
        %v1405 = vadd.f32 %v1356, %v1404
        %v1406 = vpop.f32.mrf.mxu0
        %1407 = vdwg.mxu0
        %1408 = vmatprep.subr.bf16.mxu0 0
        %1409 = vmatpush1.bf16.msra.mxu0 %v1234
        %1410 = vmatprep.subr.bf16.mxu0 0
        %1411 = vmatpush1.bf16.msra.mxu0 %v1233
        %1412 = vmatprep.subr.bf16.mxu0 0
        %1413 = vmatpush1.bf16.msra.mxu0 %v1232
        %1414 = vmatprep.subr.bf16.mxu0 0
        %1415 = vmatpush1.bf16.msra.mxu0 %v1231
        %1416 = vmatprep.subr.bf16.mxu0 0
        %1417 = vmatpush1.bf16.msra.mxu0 %v1230
        %1418 = vmatprep.subr.bf16.mxu0 0
        %1419 = vmatpush1.bf16.msra.mxu0 %v1229
        %1420 = vmatprep.subr.bf16.mxu0 0
        %1421 = vmatpush1.bf16.msra.mxu0 %v1228
        %1422 = vmatprep.subr.bf16.mxu0 0
        %1423 = vmatpush1.bf16.msra.mxu0 %v1227
        %1424 = vmatprep.subr.bf16.mxu0 0
        %1425 = vmatpush2.bf16.msra.mxu0 %v1242
        %1426 = vmatprep.subr.bf16.mxu0 0
        %1427 = vmatpush2.bf16.msra.mxu0 %v1241
        %1428 = vmatprep.subr.bf16.mxu0 0
        %1429 = vmatpush2.bf16.msra.mxu0 %v1240
        %1430 = vmatprep.subr.bf16.mxu0 0
        %1431 = vmatpush2.bf16.msra.mxu0 %v1239
        %1432 = vmatprep.subr.bf16.mxu0 0
        %1433 = vmatpush2.bf16.msra.mxu0 %v1238
        %1434 = vmatprep.subr.bf16.mxu0 0
        %1435 = vmatpush2.bf16.msra.mxu0 %v1237
        %1436 = vmatprep.subr.bf16.mxu0 0
        %1437 = vmatpush2.bf16.msra.mxu0 %v1236
        %1438 = vmatprep.subr.bf16.mxu0 0
        %1439 = vmatpush2.bf16.msra.mxu0 %v1235
        %1440 = vmatprep.mubr.bf16.mxu0 %v958
        %1441 = vmatmul.mubr.bf16.gmra.mxu0 %v957
        %v1442 = vpop.f32.mrf.mxu0
        %v1443 = vadd.f32 %v1394, %v1442
        %v1444 = vpop.f32.mrf.mxu0
        %v1445 = vpop.f32.mrf.mxu0
        %v1446 = vadd.f32 %v1397, %v1445
        %v1447 = vpop.f32.mrf.mxu0
        %1448 = vmatprep.mubr.bf16.mxu0 %v965
        %1449 = vmatmul.mubr.bf16.gmra.mxu0 %v964
        %v1450 = vpop.f32.mrf.mxu0
        %v1451 = vadd.f32 %v1402, %v1450
        %v1452 = vpop.f32.mrf.mxu0
        %v1453 = vpop.f32.mrf.mxu0
        %v1454 = vadd.f32 %v1405, %v1453
        %v1455 = vpop.f32.mrf.mxu0
        %1456 = vdwg.mxu0
        %1457 = vmatprep.subr.bf16.mxu0 0
        %1458 = vmatpush1.bf16.msra.mxu0 0
        %1459 = vmatprep.subr.bf16.mxu0 0
        %1460 = vmatpush1.bf16.msra.mxu0 0
        %1461 = vmatprep.subr.bf16.mxu0 0
        %1462 = vmatpush1.bf16.msra.mxu0 %v1248
        %1463 = vmatprep.subr.bf16.mxu0 0
        %1464 = vmatpush1.bf16.msra.mxu0 %v1247
        %1465 = vmatprep.subr.bf16.mxu0 0
        %1466 = vmatpush1.bf16.msra.mxu0 %v1246
        %1467 = vmatprep.subr.bf16.mxu0 0
        %1468 = vmatpush1.bf16.msra.mxu0 %v1245
        %1469 = vmatprep.subr.bf16.mxu0 0
        %1470 = vmatpush1.bf16.msra.mxu0 %v1244
        %1471 = vmatprep.subr.bf16.mxu0 0
        %1472 = vmatpush1.bf16.msra.mxu0 %v1243
        %1473 = vmatprep.subr.bf16.mxu0 0
        %1474 = vmatpush2.bf16.msra.mxu0 0
        %1475 = vmatprep.subr.bf16.mxu0 0
        %1476 = vmatpush2.bf16.msra.mxu0 0
        %1477 = vmatprep.subr.bf16.mxu0 0
        %1478 = vmatpush2.bf16.msra.mxu0 0
        %1479 = vmatprep.subr.bf16.mxu0 0
        %1480 = vmatpush2.bf16.msra.mxu0 0
        %1481 = vmatprep.subr.bf16.mxu0 0
        %1482 = vmatpush2.bf16.msra.mxu0 0
        %1483 = vmatprep.subr.bf16.mxu0 0
        %1484 = vmatpush2.bf16.msra.mxu0 0
        %1485 = vmatprep.subr.bf16.mxu0 0
        %1486 = vmatpush2.bf16.msra.mxu0 0
        %1487 = vmatprep.subr.bf16.mxu0 0
        %1488 = vmatpush2.bf16.msra.mxu0 0
        %1489 = vmatprep.mubr.bf16.mxu0 0
        %1490 = vmatmul.mubr.bf16.gmra.mxu0 %v1305
        %v1491 = vpop.f32.mrf.mxu0
        %v1492 = vadd.f32 %v1443, %v1491
        %v1493 = vpop.f32.mrf.mxu0
        %v1494 = vpop.f32.mrf.mxu0
        %v1495 = vadd.f32 %v1446, %v1494
        %v1496 = vpop.f32.mrf.mxu0
        %1497 = vmatprep.mubr.bf16.mxu0 0
        %1498 = vmatmul.mubr.bf16.gmra.mxu0 %v1308
        %v1499 = vpop.f32.mrf.mxu0
        %v1500 = vadd.f32 %v1451, %v1499
        %v1501 = vpop.f32.mrf.mxu0
        %v1502 = vpop.f32.mrf.mxu0
        %v1503 = vadd.f32 %v1454, %v1502
        %v1504 = vpop.f32.mrf.mxu0
        %1505 = vdwg.mxu0
        %v1506 = vld [vmem:[%s734] sm:$0xf]
        %v1507 = vld [vmem:[%s734 + $0x4] sm:$0xf]
        %v1508 = vld [vmem:[%s734 + $0x8] sm:$0xf]
        %v1509 = vld [vmem:[%s734 + $0xc] sm:$0xf]
        %v1510 = vunpack.c.l.bf16 %v1506
        %v1511 = vunpack.c.l.bf16 %v1507
        %v1512 = vunpack.c.l.bf16 %v1508
        %v1513 = vunpack.c.l.bf16 %v1509
        %v1514 = vadd.f32 %v1492, %v1510
        %v1515 = vadd.f32 %v1495, %v1511
        %v1516 = vadd.f32 %v1500, %v1512
        %v1517 = vadd.f32 %v1503, %v1513
        %v1518 = vmax.f32 %v1514, 0.0
        %v1519 = vmax.f32 %v1515, 0.0
        %v1520 = vmax.f32 %v1516, 0.0
        %v1521 = vmax.f32 %v1517, 0.0
        %v1522 = vpack.c.bf16 %v1519, %v1518
        %v1523 = vpack.c.bf16 %v1521, %v1520
        %v1526 = vunpack.c.l.b16 %v1522
        %v1527 = vunpack.c.h.b16 %v1522
        %v1528 = vunpack.c.l.b16 %v1523
        %v1529 = vunpack.c.h.b16 %v1523
        %v1530 = vpack.c.b16 %v1526, %v1526
        %v1531 = vpack.c.b16 %v1527, %v1527
        %v1532 = vpack.c.b16 %v1528, %v1528
        %v1533 = vpack.c.b16 %v1529, %v1529
        %1538 = vst [vmem:[%s759] sm:$0xf] %v1530
        %1539 = vst [vmem:[%s759 + $0x4] sm:$0xf] %v1531
        %1540 = vst [vmem:[%s759 + $0x8] sm:$0xf] %v1532
        %1541 = vst [vmem:[%s759 + $0xc] sm:$0xf] %v1533
        %s1542 = sand.u32 %s135, 1
        %s1543 = sand.u32 %s135, 1
        %s1544 = smul.addr %s1543, 16
        %s1545 = scalar_lea.vmem [#allocation4], %s1544
        // Predicated region
        $region119: #{encoder_block_forward.3} parent=109 // pred_check
          %p1546 = pneg %p145
        $region120: #{encoder_block_forward.3} parent=109 // pred_check_branch
          %1548 = sbr.rel (%p1546) target = $region122
        $region121: #{encoder_block_forward.3} parent=109 // pred_region
          %s1549 = smul.addr %s19, 16
          %s1550 = sadd.s32 %s20, %s1549
          %s1551 = smul.addr %s1550, 4
          %s1552 = scalar_lea.vmem %s4, %s1551
          // Predicated region
          $region123: #{encoder_block_forward.3} parent=121 // pred_check
            _
          $region124: #{encoder_block_forward.3} parent=121 // pred_check_branch
            %1554 = sbr.rel (0) target = $region126
          $region125: #{encoder_block_forward.3} parent=121 // pred_region
            // Predicated region
            $region127: #{encoder_block_forward.3} parent=125 // pred_check
              _
            $region128: #{encoder_block_forward.3} parent=125 // pred_check_branch
              %1556 = sbr.rel target = $region130
            $region129: #{encoder_block_forward.3} parent=125 // pred_region
              // Predicated region
              $region142: #{encoder_block_forward.3} parent=129 // pred_check
                _
              $region143: #{encoder_block_forward.3} parent=129 // pred_check_branch
                %1578 = sbr.rel (0) target = $region145
              $region144: #{encoder_block_forward.3} parent=129 // pred_region
                loop: start=0, step=1, limit=1
                $region146: #{encoder_block_forward.3} parent=144 // loop_pre_header
                  _
                $region147: #{encoder_block_forward.3} parent=144 // loop_header
                  %s1580 = sphi 0, %s1584
                  %p1581 = scmp.ge.s32.totalorder %s1580, 1
                  %s1585 = sphi %s1545, %s1545
                  %s1586 = sphi %s1552, %s1552
                $region148: #{encoder_block_forward.3} parent=144 // loop_header_branch
                  %1583 = sbr.rel (%p1581) target = $region152
                $region149: #{encoder_block_forward.3} parent=144 // loop_body
                  _
                $region150: #{encoder_block_forward.3} parent=144 // loop_footer
                  %s1584 = sadd.s32 1, %s1580
                $region151: #{encoder_block_forward.3} parent=144 // loop_footer_branch
                  %1579 = sbr.rel target = $region147
                $region152: #{encoder_block_forward.3} parent=144 // loop_exit
                  _
                %s1588 = ssub.s32 16, 1
                loop: start=0, step=1, limit=1
                $region153: #{encoder_block_forward.3} parent=144 // loop_pre_header
                  _
                $region154: #{encoder_block_forward.3} parent=144 // loop_header
                  %s1590 = sphi 0, %s1594
                  %p1591 = scmp.ge.s32.totalorder %s1590, 1
                  %s1595 = sphi %s1545, %s1545
                  %s1596 = sphi %s1552, %s1552
                $region155: #{encoder_block_forward.3} parent=144 // loop_header_branch
                  %1593 = sbr.rel (%p1591) target = $region159
                $region156: #{encoder_block_forward.3} parent=144 // loop_body
                  %v1597 = vld [vmem:[%s1595] sm:%s1588]
                  %1598 = vst [vmem:[%s1596] sm:%s1588] %v1597
                  %v1599 = vld [vmem:[%s1595 + $0x4] sm:%s1588]
                  %1600 = vst [vmem:[%s1596 + $0x10] sm:%s1588] %v1599
                  %v1601 = vld [vmem:[%s1595 + $0x8] sm:%s1588]
                  %1602 = vst [vmem:[%s1596 + $0x20] sm:%s1588] %v1601
                  %v1603 = vld [vmem:[%s1595 + $0xc] sm:%s1588]
                  %1604 = vst [vmem:[%s1596 + $0x30] sm:%s1588] %v1603
                $region157: #{encoder_block_forward.3} parent=144 // loop_footer
                  %s1594 = sadd.s32 1, %s1590
                $region158: #{encoder_block_forward.3} parent=144 // loop_footer_branch
                  %1589 = sbr.rel target = $region154
                $region159: #{encoder_block_forward.3} parent=144 // loop_exit
                  _
              $region145: #{encoder_block_forward.3} parent=129 // pred_fallthru
                _
            $region130: #{encoder_block_forward.3} parent=125 // pred_fallthru
              _
            // Predicated region
            $region131: #{encoder_block_forward.3} parent=125 // pred_check
              _
            $region132: #{encoder_block_forward.3} parent=125 // pred_check_branch
              %1558 = sbr.rel (0) target = $region134
            $region133: #{encoder_block_forward.3} parent=125 // pred_region
              %s1560 = ssub.s32 16, 1
              loop: start=0, step=1, limit=1
              $region135: #{encoder_block_forward.3} parent=133 // loop_pre_header
                _
              $region136: #{encoder_block_forward.3} parent=133 // loop_header
                %s1562 = sphi 0, %s1566
                %p1563 = scmp.ge.s32.totalorder %s1562, 1
                %s1567 = sphi %s1545, %s1545
                %s1568 = sphi %s1552, %s1552
              $region137: #{encoder_block_forward.3} parent=133 // loop_header_branch
                %1565 = sbr.rel (%p1563) target = $region141
              $region138: #{encoder_block_forward.3} parent=133 // loop_body
                %v1569 = vld [vmem:[%s1567] sm:%s1560]
                %1570 = vst [vmem:[%s1568] sm:%s1560] %v1569
                %v1571 = vld [vmem:[%s1567 + $0x4] sm:%s1560]
                %1572 = vst [vmem:[%s1568 + $0x10] sm:%s1560] %v1571
                %v1573 = vld [vmem:[%s1567 + $0x8] sm:%s1560]
                %1574 = vst [vmem:[%s1568 + $0x20] sm:%s1560] %v1573
                %v1575 = vld [vmem:[%s1567 + $0xc] sm:%s1560]
                %1576 = vst [vmem:[%s1568 + $0x30] sm:%s1560] %v1575
              $region139: #{encoder_block_forward.3} parent=133 // loop_footer
                %s1566 = sadd.s32 1, %s1562
              $region140: #{encoder_block_forward.3} parent=133 // loop_footer_branch
                %1561 = sbr.rel target = $region136
              $region141: #{encoder_block_forward.3} parent=133 // loop_exit
                _
            $region134: #{encoder_block_forward.3} parent=125 // pred_fallthru
              _
          $region126: #{encoder_block_forward.3} parent=121 // pred_fallthru
            _
          %1605 = vnop
        $region122: #{encoder_block_forward.3} parent=109 // pred_fallthru
          _
      $region110: #{encoder_block_forward.3} parent=5 // pred_fallthru
        _
      %p1606 = scmp.le.s32.totalorder 2, %s10
      // Predicated region
      $region160: #{encoder_block_forward.3} parent=5 // pred_check
        %p1607 = pneg %p1606
      $region161: #{encoder_block_forward.3} parent=5 // pred_check_branch
        %1609 = sbr.rel (%p1607) target = $region163
      $region162: #{encoder_block_forward.3} parent=5 // pred_region
        %s1610 = ssub.s32 %s10, 2
        // Predicated region
        $region164: #{encoder_block_forward.3} parent=162 // pred_check
          %p1611 = pneg %p151
        $region165: #{encoder_block_forward.3} parent=162 // pred_check_branch
          %1613 = sbr.rel (%p1611) target = $region167
        $region166: #{encoder_block_forward.3} parent=162 // pred_region
          %s1614 = sand.u32 %s136, 1
          %s1615 = sand.u32 %s136, 1
          %s1616 = smul.addr %s1615, 16
          %s1617 = scalar_lea.vmem [#allocation4], %s1616
        $region167: #{encoder_block_forward.3} parent=162 // pred_fallthru
          _
      $region163: #{encoder_block_forward.3} parent=5 // pred_fallthru
        _
    $region6: #{encoder_block_forward.3} parent=1 // loop_footer
      %s14 = sadd.s32 1, %s10
    $region7: #{encoder_block_forward.3} parent=1 // loop_footer_branch
      %9 = sbr.rel target = $region3
    $region8: #{encoder_block_forward.3} parent=1 // loop_exit
      _

</llo_original>
